<compile_context>
chip_gen: v7x
topology: tpu7x:2x2x1
jax: 0.10.0
libtpu: 0.0.40
codegen_flags: <defaults>
</compile_context>

<pallas_src>
import jax
import jax.numpy as jnp
from jax.experimental import pallas as pl
from jax.experimental.pallas import tpu as pltpu

_LN_EPS = 1e-5
_SQRT_2_OVER_PI = 0.7978845608028654


def _gelu(x):
    # tanh-form GELU: the tanh runs on the EUP (otherwise-idle VLIW slot).
    return 0.5 * x * (1.0 + jnp.tanh(_SQRT_2_OVER_PI * (x + 0.044715 * x * x * x)))


def _layernorm(x, gamma, beta):
    mu = jnp.mean(x, axis=-1, keepdims=True)
    var = jnp.mean(jnp.square(x - mu), axis=-1, keepdims=True)
    return (x - mu) * jax.lax.rsqrt(var + _LN_EPS) * gamma + beta


# ------------------------------ Pallas kernel ------------------------------
def _mixer_stack_kernel(pre_ref, post_ref,                     # scalar prefetch (SMEM)
                        x_ref, q_ref, qt_ref,
                        g1_ref, b1_ref, g2_ref, b2_ref,
                        wt1_ref, bt1_ref, wt2_ref, bt2_ref,
                        wc1_ref, bc1_ref, wc2_ref, bc2_ref,
                        y_ref,
                        act_ref):
    """One reversible MixerBlock layer on the VMEM-resident (TB, Sp, D) tile."""
    l = pl.program_id(1)
    TB, Sp, D = act_ref.shape
    H = D // 2

    # Layer 0: pull this batch tile from HBM into the resident f32 scratch.
    @pl.when(l == 0)
    def _load():
        act_ref[...] = x_ref[...].astype(jnp.float32)

    # Checkerbox handling: exact f32 lane-permutation matmuls, only at
    # checkerbox-state transitions (pre flag: 1 = de-interleave, 2 = interleave).
    @pl.when(pre_ref[l] == 1)
    def _enter_q():
        a2 = act_ref[...].reshape(TB * Sp, D)
        act_ref[...] = jnp.dot(
            a2, q_ref[...], preferred_element_type=jnp.float32).reshape(TB, Sp, D)

    @pl.when(pre_ref[l] == 2)
    def _leave_q():
        a2 = act_ref[...].reshape(TB * Sp, D)
        act_ref[...] = jnp.dot(
            a2, qt_ref[...], preferred_element_type=jnp.float32).reshape(TB, Sp, D)

    a = act_ref[...]                              # (TB, Sp, D) f32
    x1 = a[:, :, H:]                              # reversed split: x1 = upper half
    x2 = a[:, :, :H]                              #                 x2 = lower half

    # ---- f1(x1): LayerNorm + token-mixing MLP (flattened MXU dots) ----
    xn = _layernorm(x1, g1_ref[0], b1_ref[0])                     # (TB, Sp, H)
    xt = jnp.swapaxes(xn, 1, 2).reshape(TB * H, Sp)               # (TB*H, Sp)
    h = jnp.dot(xt.astype(jnp.bfloat16), wt1_ref[0],
                preferred_element_type=jnp.float32)               # (TB*H, Dms)
    h = _gelu(h + bt1_ref[0])                                     # lane-aligned bias
    f1t = jnp.dot(h.astype(jnp.bfloat16), wt2_ref[0],
                  preferred_element_type=jnp.float32)             # (TB*H, Sp)
    f1t = f1t + bt2_ref[0]
    f1 = jnp.swapaxes(f1t.reshape(TB, H, Sp), 1, 2)               # (TB, Sp, H)
    y2 = x2 + f1

    # ---- f2(y2): LayerNorm + channel-mixing MLP (flattened MXU dots) ----
    yn = _layernorm(y2.reshape(TB * Sp, H), g2_ref[0], b2_ref[0])  # (TB*Sp, H)
    h2 = jnp.dot(yn.astype(jnp.bfloat16), wc1_ref[0],
                 preferred_element_type=jnp.float32)               # (TB*Sp, Dmc)
    h2 = _gelu(h2 + bc1_ref[0])
    f2 = jnp.dot(h2.astype(jnp.bfloat16), wc2_ref[0],
                 preferred_element_type=jnp.float32)               # (TB*Sp, H)
    f2 = f2 + bc2_ref[0]
    y1 = x1 + f2.reshape(TB, Sp, H)

    # Merge [y1 | y2] back into the resident scratch.
    if H % 128 == 0:
        # Lane-aligned halves: direct stores, no concat temporary.
        act_ref[:, :, :H] = y1
        act_ref[:, :, H:] = y2
    else:
        act_ref[...] = jnp.concatenate([y1, y2], axis=-1)

    # If the stack ends while still in checkerbox (Q) space, interleave back.
    @pl.when(post_ref[l] == 1)
    def _final_interleave():
        am = act_ref[...].reshape(TB * Sp, D)
        act_ref[...] = jnp.dot(
            am, qt_ref[...], preferred_element_type=jnp.float32).reshape(TB, Sp, D)

    # Last layer: single lane-dense writeback of this batch tile to HBM.
    @pl.when(l == pl.num_programs(1) - 1)
    def _store():
        y_ref[...] = act_ref[...].astype(y_ref.dtype)


# --------------------------- tiling / VMEM budget ---------------------------
def _vmem_capacity_bytes():
    """Per-core VMEM capacity; generation-aware with a v7x-safe fallback."""
    try:
        return int(pltpu.get_tpu_info().vmem_capacity_bytes)
    except Exception:
        return 64 * 1024 * 1024      # v7x per-core figure (safe everywhere)


def _choose_tb(B, Sp, D, H, Dms, Dmc):
    cap = _vmem_capacity_bytes()
    budget = int(cap * 0.6)          # headroom for compiler temporaries / spills
    # TB-independent residents: double-buffered per-layer weights + Q / Q^T.
    fixed = (2 * 2 * (Sp * Dms + Dms * Sp + H * Dmc + Dmc * H)    # bf16 weights x2 bufs
             + 2 * 4 * (4 * H + Dms + Sp + Dmc + H)               # f32 LN / biases x2 bufs
             + 2 * 2 * D * D * 4)                                 # Q, Q^T x2 bufs
    # Per batch row: in+out double buffers (4x tile), resident f32 scratch,
    # ~5 tile-sized f32 temporaries, token/channel hidden activations.
    per_row = 4 * (10 * Sp * D + 2 * H * Dms + 2 * Sp * Dmc)
    cap_rows = max(1, (budget - fixed) // per_row)
    divisors = [t for t in range(1, B + 1) if B % t == 0 and t <= cap_rows] or [1]

    def pref(tb):
        nb = B // tb
        if nb >= 2 and nb % 2 == 0:   # even #steps balances v7x's 2 TCs + pipelines
            return 2
        if nb >= 2:                   # at least overlap DMA with compute
            return 1
        return 0

    return max(divisors, key=lambda tb: (pref(tb), tb))


# ------------------------------ Pallas wrapper ------------------------------
def mixer_stack_pallas(x, p):
    """Run a whole stack of fused MixerBlocks on x: (B, Sp, D) f32."""
    B, Sp, D = x.shape
    H, Dms, Dmc, L = p['H'], p['Dms'], p['Dmc'], p['L']
    TB = _choose_tb(B, Sp, D, H, Dms, Dmc)
    vmem_limit = int(_vmem_capacity_bytes() * 0.75)

    act = pl.BlockSpec((TB, Sp, D), lambda i, l, pre, post: (i, 0, 0))
    qsp = pl.BlockSpec((D, D), lambda i, l, pre, post: (0, 0))

    def per_layer(shape):
        return pl.BlockSpec(shape, lambda i, l, pre, post: (l, 0, 0))

    in_specs = [
        act, qsp, qsp,
        per_layer((1, 1, H)), per_layer((1, 1, H)),        # g1, b1
        per_layer((1, 1, H)), per_layer((1, 1, H)),        # g2, b2
        per_layer((1, Sp, Dms)), per_layer((1, 1, Dms)),   # wt1^T, bt1
        per_layer((1, Dms, Sp)), per_layer((1, 1, Sp)),    # wt2^T, bt2
        per_layer((1, H, Dmc)), per_layer((1, 1, Dmc)),    # wc1^T, bc1
        per_layer((1, Dmc, H)), per_layer((1, 1, H)),      # wc2^T, bc2
    ]

    # TODO(synk): input/output HBM aliasing (reversible in-place update) was
    # dropped; re-add via input_output_aliases once the operand-index
    # bookkeeping with scalar prefetch is verified on-device.
    return pl.pallas_call(
        _mixer_stack_kernel,
        out_shape=jax.ShapeDtypeStruct((B, Sp, D), x.dtype),
        grid_spec=pltpu.PrefetchScalarGridSpec(
            num_scalar_prefetch=2,
            grid=(B // TB, L),
            in_specs=in_specs,
            out_specs=act,
            scratch_shapes=[pltpu.VMEM((TB, Sp, D), jnp.float32)]),
        compiler_params=pltpu.CompilerParams(
            dimension_semantics=("parallel", "arbitrary"),
            vmem_limit_bytes=vmem_limit),
    )(p['pre'], p['post'], x, p['q'], p['qt'],
      p['g1'], p['b1'], p['g2'], p['b2'],
      p['wt1'], p['bt1'], p['wt2'], p['bt2'],
      p['wc1'], p['bc1'], p['wc2'], p['bc2'])


def run_stack(x, stack):
    """Host-side: pad the sequence to the stack's Sp, run fused kernel, unpad."""
    B, S, _ = x.shape
    Sp = stack['Sp']
    if S != Sp:
        x = jnp.pad(x, ((0, 0), (0, Sp - S), (0, 0)))
    y = mixer_stack_pallas(x, stack)
    return y[:, :S, :] if S != Sp else y


# ------------------------- embedding & parameters --------------------------
def patch_embed(x, patch):
    # x: (B, T, C, H, W) -> (B, T, N, C*patch*patch); lossless (reversible).
    B, T, C, Hi, Wi = x.shape
    gh, gw = Hi // patch, Wi // patch
    x = x.reshape(B, T, C, gh, patch, gw, patch)
    x = x.transpose(0, 1, 3, 5, 2, 4, 6)
    return x.reshape(B, T, gh * gw, C * patch * patch)


def _round_up(n, m):
    return ((n + m - 1) // m) * m


def _deinterleave_matrix(D):
    """Q with a @ Q = [a[...,0::2] | a[...,1::2]] (exact lane de-interleave)."""
    H = D // 2
    perm = jnp.concatenate([jnp.arange(0, D, 2), jnp.arange(1, D, 2)])
    return jnp.zeros((D, D), jnp.float32).at[perm, jnp.arange(D)].set(1.0)


def _checkerbox_schedule(cb_flags):
    """Per-layer permute ops: pre 0=none, 1=de-interleave (enter Q-space),
    2=interleave (leave Q-space); post=1 re-interleaves at the last layer if
    the stack ends inside Q-space.  Applied only at state transitions."""
    pre, in_q = [], False
    for cb in cb_flags:
        if cb and not in_q:
            pre.append(1); in_q = True
        elif (not cb) and in_q:
            pre.append(2); in_q = False
        else:
            pre.append(0)
    post = [0] * len(cb_flags)
    if in_q:
        post[-1] = 1
    return jnp.asarray(pre, jnp.int32), jnp.asarray(post, jnp.int32)


def make_stack_params(key, n_layers, seq_len, hidden, dms, dmc, cb_flags):
    """Stacked (layer-major) params for one fused stack, pre-laid-out for the
    kernel's MXU dots (PyTorch Linear weights pre-transposed); the sequence
    axis is zero-padded to Sp so padded rows never contaminate real rows."""
    Sp = _round_up(seq_len, 8)
    D = 2 * hidden
    keys = jax.random.split(key, n_layers)
    init = lambda k, shape: 0.02 * jax.random.normal(k, shape, jnp.float32)

    g1, b1, g2, b2 = [], [], [], []
    wt1, bt1, wt2, bt2 = [], [], [], []
    wc1, bc1, wc2, bc2 = [], [], [], []
    for k in keys:
        ks = jax.random.split(k, 8)
        W1, bW1 = init(ks[0], (dms, seq_len)), init(ks[1], (dms,))      # Linear(S->Dms)
        W2, bW2 = init(ks[2], (seq_len, dms)), init(ks[3], (seq_len,))  # Linear(Dms->S)
        Wc1, bWc1 = init(ks[4], (dmc, hidden)), init(ks[5], (dmc,))     # Linear(H->Dmc)
        Wc2, bWc2 = init(ks[6], (hidden, dmc)), init(ks[7], (hidden,))  # Linear(Dmc->H)
        g1.append(jnp.ones((hidden,), jnp.float32))
        b1.append(jnp.zeros((hidden,), jnp.float32))
        g2.append(jnp.ones((hidden,), jnp.float32))
        b2.append(jnp.zeros((hidden,), jnp.float32))
        wt1.append(jnp.zeros((Sp, dms), jnp.float32).at[:seq_len].set(W1.T))
        bt1.append(bW1)
        wt2.append(jnp.zeros((dms, Sp), jnp.float32).at[:, :seq_len].set(W2.T))
        bt2.append(jnp.zeros((Sp,), jnp.float32).at[:seq_len].set(bW2))
        wc1.append(Wc1.T)
        bc1.append(bWc1)
        wc2.append(Wc2.T)
        bc2.append(bWc2)

    s2 = lambda lst: jnp.stack(lst)[:, None, :]            # (L, 1, X) f32
    s3 = lambda lst: jnp.stack(lst).astype(jnp.bfloat16)   # (L, A, B) bf16
    pre, post = _checkerbox_schedule(cb_flags)
    q = _deinterleave_matrix(D)
    return dict(
        Sp=Sp, D=D, H=hidden, Dms=dms, Dmc=dmc, L=n_layers,
        pre=pre, post=post, q=q, qt=q.T,
        g1=s2(g1), b1=s2(b1), g2=s2(g2), b2=s2(b2),
        wt1=s3(wt1), bt1=s2(bt1), wt2=s3(wt2), bt2=s2(bt2),
        wc1=s3(wc1), bc1=s2(bc1), wc2=s3(wc2), bc2=s2(bc2))


def make_rev_mlp_mixer_params(key, n_frames, image_size, patch_res,
                              mlp_dim_D_S, mlp_dim_D_C, n_layers):
    assert image_size % patch_res == 0
    seq = (image_size // patch_res) ** 2
    hidden = patch_res ** 2 * 3 // 2
    l_cb = [True, True, False, False] * max(n_layers // 4, 1)
    ks, kt, kb = jax.random.split(key, 3)
    return dict(
        spatial=make_stack_params(ks, n_layers, seq, hidden,
                                  mlp_dim_D_S, mlp_dim_D_C, l_cb[:n_layers]),
        temporal=make_stack_params(kt, n_layers // 2, n_frames, hidden,
                                   mlp_dim_D_S, mlp_dim_D_C, l_cb[:n_layers // 2]),
        bridge=make_stack_params(kb, n_layers, seq - 1, hidden,
                                 mlp_dim_D_S, mlp_dim_D_C, l_cb[:n_layers]),
    )


# --------------------------------- forward ---------------------------------
def rev_mlp_mixer_forward(x, params, patch_res):
    x_embed = patch_embed(x, patch_res)            # (B, T, N, D)
    b, t, n, d = x_embed.shape
    xx = x_embed.reshape(b * t, n, d)
    xx = run_stack(xx, params['spatial'])
    x0 = xx[:, 0, :].reshape(b, t, d)
    x0 = run_stack(x0, params['temporal'])
    xb = xx[:, 1:, :]
    xb = run_stack(xb, params['bridge'])
    return x0, xb


if __name__ == "__main__":
    # Small config: n = (8/4)^2 = 4 tokens, d = 3*4^2 = 48 channels, hidden = 24.
    n_frames, image_size, patch_res = 2, 8, 4
    mlp_dim_D_S, mlp_dim_D_C, n_layers = 16, 32, 4
    batch = 2

    key = jax.random.PRNGKey(0)
    kx, kp = jax.random.split(key)
    x = jax.random.normal(
        kx, (batch, n_frames, 3, image_size, image_size), jnp.float32)
    params = make_rev_mlp_mixer_params(
        kp, n_frames, image_size, patch_res, mlp_dim_D_S, mlp_dim_D_C, n_layers)

    fwd = jax.jit(lambda xin: rev_mlp_mixer_forward(xin, params, patch_res))
    x0, xb = fwd(x)
    jax.block_until_ready((x0, xb))

    assert x0.shape == (batch, n_frames, 3 * patch_res ** 2)
    assert xb.shape == (batch * n_frames,
                        (image_size // patch_res) ** 2 - 1,
                        3 * patch_res ** 2)
    assert bool(jnp.all(jnp.isfinite(x0))) and bool(jnp.all(jnp.isfinite(xb)))
    print("KERNEL_OK")
</pallas_src>

<mosaic_0001>
module attributes {stable_mosaic.version = 11 : i64} {
  func.func @_mixer_stack_kernel(%arg0: i32, %arg1: i32, %arg2: memref<4xi32, #tpu.memory_space<smem>>, %arg3: memref<4xi32, #tpu.memory_space<smem>>, %arg4: memref<2x8x48xf32, #tpu.memory_space<vmem>>, %arg5: memref<48x48xf32, #tpu.memory_space<vmem>>, %arg6: memref<48x48xf32, #tpu.memory_space<vmem>>, %arg7: memref<1x1x24xf32, #tpu.memory_space<vmem>>, %arg8: memref<1x1x24xf32, #tpu.memory_space<vmem>>, %arg9: memref<1x1x24xf32, #tpu.memory_space<vmem>>, %arg10: memref<1x1x24xf32, #tpu.memory_space<vmem>>, %arg11: memref<1x8x16xbf16, #tpu.memory_space<vmem>>, %arg12: memref<1x1x16xf32, #tpu.memory_space<vmem>>, %arg13: memref<1x16x8xbf16, #tpu.memory_space<vmem>>, %arg14: memref<1x1x8xf32, #tpu.memory_space<vmem>>, %arg15: memref<1x24x32xbf16, #tpu.memory_space<vmem>>, %arg16: memref<1x1x32xf32, #tpu.memory_space<vmem>>, %arg17: memref<1x32x24xbf16, #tpu.memory_space<vmem>>, %arg18: memref<1x1x24xf32, #tpu.memory_space<vmem>>, %arg19: memref<2x8x48xf32, #tpu.memory_space<vmem>>, %arg20: memref<2x8x48xf32, #tpu.memory_space<vmem>>) attributes {dimension_semantics = [#tpu.dimension_semantics<parallel>, #tpu.dimension_semantics<arbitrary>], iteration_bounds = array<i64: 2, 4>, scalar_prefetch = 2 : i64, scratch_operands = 1 : i64, tpu.core_type = #tpu.core_type<tc>, window_params = [{transform_indices = @transform_0, window_bounds = array<i64: 2, 8, 48>}, {pipeline_mode = #tpu.pipeline_mode<synchronous>, transform_indices = @transform_1, window_bounds = array<i64: 48, 48>}, {pipeline_mode = #tpu.pipeline_mode<synchronous>, transform_indices = @transform_2, window_bounds = array<i64: 48, 48>}, {transform_indices = @transform_3, window_bounds = array<i64: 1, 1, 24>}, {transform_indices = @transform_4, window_bounds = array<i64: 1, 1, 24>}, {transform_indices = @transform_5, window_bounds = array<i64: 1, 1, 24>}, {transform_indices = @transform_6, window_bounds = array<i64: 1, 1, 24>}, {transform_indices = @transform_7, window_bounds = array<i64: 1, 8, 16>}, {transform_indices = @transform_8, window_bounds = array<i64: 1, 1, 16>}, {transform_indices = @transform_9, window_bounds = array<i64: 1, 16, 8>}, {transform_indices = @transform_10, window_bounds = array<i64: 1, 1, 8>}, {transform_indices = @transform_11, window_bounds = array<i64: 1, 24, 32>}, {transform_indices = @transform_12, window_bounds = array<i64: 1, 1, 32>}, {transform_indices = @transform_13, window_bounds = array<i64: 1, 32, 24>}, {transform_indices = @transform_14, window_bounds = array<i64: 1, 1, 24>}, {transform_indices = @transform_15, window_bounds = array<i64: 2, 8, 48>}]} {
    %c0_i32 = arith.constant 0 : i32
    %0 = arith.cmpi eq, %arg1, %c0_i32 : i32
    %1 = arith.extui %0 : i1 to i32
    %c0_i32_0 = arith.constant 0 : i32
    %2 = arith.cmpi ne, %1, %c0_i32_0 : i32
    scf.if %2 {
      %c0_68 = arith.constant 0 : index
      %c0_69 = arith.constant 0 : index
      %c0_70 = arith.constant 0 : index
      %146 = vector.load %arg4[%c0_68, %c0_69, %c0_70] : memref<2x8x48xf32, #tpu.memory_space<vmem>>, vector<2x8x48xf32>
      %c0_71 = arith.constant 0 : index
      %c0_72 = arith.constant 0 : index
      %c0_73 = arith.constant 0 : index
      %147 = vector.load %arg20[%c0_71, %c0_72, %c0_73] : memref<2x8x48xf32, #tpu.memory_space<vmem>>, vector<2x8x48xf32>
      tpu.vector_store %arg20[%c0_71, %c0_72, %c0_73], %146 {strides = array<i32>} : memref<2x8x48xf32, #tpu.memory_space<vmem>>, vector<2x8x48xf32>,
    } else {
    }
    %3 = arith.index_cast %arg1 : i32 to index
    %4 = memref.load %arg2[%3] : memref<4xi32, #tpu.memory_space<smem>>
    %c1_i32 = arith.constant 1 : i32
    %5 = arith.cmpi eq, %4, %c1_i32 : i32
    %6 = arith.extui %5 : i1 to i32
    %c0_i32_1 = arith.constant 0 : i32
    %7 = arith.cmpi ne, %6, %c0_i32_1 : i32
    scf.if %7 {
      %c0_68 = arith.constant 0 : index
      %c0_69 = arith.constant 0 : index
      %c0_70 = arith.constant 0 : index
      %146 = vector.load %arg20[%c0_68, %c0_69, %c0_70] : memref<2x8x48xf32, #tpu.memory_space<vmem>>, vector<2x8x48xf32>
      %147 = vector.shape_cast %146 : vector<2x8x48xf32> to vector<16x48xf32>
      %c0_71 = arith.constant 0 : index
      %c0_72 = arith.constant 0 : index
      %148 = vector.load %arg5[%c0_71, %c0_72] : memref<48x48xf32, #tpu.memory_space<vmem>>, vector<48x48xf32>
      %cst_73 = arith.constant dense<0.000000e+00> : vector<16x48xf32>
      %149 = tpu.matmul %147, %148, %cst_73 {dimension_numbers = #tpu.dot_dimension_numbers<[1], [0], [0], [1], [0, 0, 1, 1], [], []>} : vector<16x48xf32>, vector<48x48xf32>, vector<16x48xf32> -> vector<16x48xf32>
      %150 = vector.shape_cast %149 : vector<16x48xf32> to vector<2x8x48xf32>
      %c0_74 = arith.constant 0 : index
      %c0_75 = arith.constant 0 : index
      %c0_76 = arith.constant 0 : index
      %151 = vector.load %arg20[%c0_74, %c0_75, %c0_76] : memref<2x8x48xf32, #tpu.memory_space<vmem>>, vector<2x8x48xf32>
      tpu.vector_store %arg20[%c0_74, %c0_75, %c0_76], %150 {strides = array<i32>} : memref<2x8x48xf32, #tpu.memory_space<vmem>>, vector<2x8x48xf32>,
    } else {
    }
    %8 = arith.index_cast %arg1 : i32 to index
    %9 = memref.load %arg2[%8] : memref<4xi32, #tpu.memory_space<smem>>
    %c2_i32 = arith.constant 2 : i32
    %10 = arith.cmpi eq, %9, %c2_i32 : i32
    %11 = arith.extui %10 : i1 to i32
    %c0_i32_2 = arith.constant 0 : i32
    %12 = arith.cmpi ne, %11, %c0_i32_2 : i32
    scf.if %12 {
      %c0_68 = arith.constant 0 : index
      %c0_69 = arith.constant 0 : index
      %c0_70 = arith.constant 0 : index
      %146 = vector.load %arg20[%c0_68, %c0_69, %c0_70] : memref<2x8x48xf32, #tpu.memory_space<vmem>>, vector<2x8x48xf32>
      %147 = vector.shape_cast %146 : vector<2x8x48xf32> to vector<16x48xf32>
      %c0_71 = arith.constant 0 : index
      %c0_72 = arith.constant 0 : index
      %148 = vector.load %arg6[%c0_71, %c0_72] : memref<48x48xf32, #tpu.memory_space<vmem>>, vector<48x48xf32>
      %cst_73 = arith.constant dense<0.000000e+00> : vector<16x48xf32>
      %149 = tpu.matmul %147, %148, %cst_73 {dimension_numbers = #tpu.dot_dimension_numbers<[1], [0], [0], [1], [0, 0, 1, 1], [], []>} : vector<16x48xf32>, vector<48x48xf32>, vector<16x48xf32> -> vector<16x48xf32>
      %150 = vector.shape_cast %149 : vector<16x48xf32> to vector<2x8x48xf32>
      %c0_74 = arith.constant 0 : index
      %c0_75 = arith.constant 0 : index
      %c0_76 = arith.constant 0 : index
      %151 = vector.load %arg20[%c0_74, %c0_75, %c0_76] : memref<2x8x48xf32, #tpu.memory_space<vmem>>, vector<2x8x48xf32>
      tpu.vector_store %arg20[%c0_74, %c0_75, %c0_76], %150 {strides = array<i32>} : memref<2x8x48xf32, #tpu.memory_space<vmem>>, vector<2x8x48xf32>,
    } else {
    }
    %c0 = arith.constant 0 : index
    %c0_3 = arith.constant 0 : index
    %c0_4 = arith.constant 0 : index
    %13 = vector.load %arg20[%c0, %c0_3, %c0_4] : memref<2x8x48xf32, #tpu.memory_space<vmem>>, vector<2x8x48xf32>
    %14 = vector.extract_strided_slice %13 {offsets = [0, 0, 24], sizes = [2, 8, 24], strides = [1, 1, 1]} : vector<2x8x48xf32> to vector<2x8x24xf32>
    %15 = vector.extract_strided_slice %13 {offsets = [0, 0, 0], sizes = [2, 8, 24], strides = [1, 1, 1]} : vector<2x8x48xf32> to vector<2x8x24xf32>
    %c0_5 = arith.constant 0 : index
    %c0_6 = arith.constant 0 : index
    %c0_7 = arith.constant 0 : index
    %16 = vector.load %arg7[%c0_5, %c0_6, %c0_7] : memref<1x1x24xf32, #tpu.memory_space<vmem>>, vector<1x1x24xf32>
    %17 = vector.shape_cast %16 : vector<1x1x24xf32> to vector<1x24xf32>
    %c0_8 = arith.constant 0 : index
    %c0_9 = arith.constant 0 : index
    %c0_10 = arith.constant 0 : index
    %18 = vector.load %arg8[%c0_8, %c0_9, %c0_10] : memref<1x1x24xf32, #tpu.memory_space<vmem>>, vector<1x1x24xf32>
    %19 = vector.shape_cast %18 : vector<1x1x24xf32> to vector<1x24xf32>
    %cst = arith.constant dense<0.000000e+00> : vector<2x8xf32>
    %20 = vector.multi_reduction <add>, %14, %cst [2] : vector<2x8x24xf32> to vector<2x8xf32>
    %21 = vector.shape_cast %20 : vector<2x8xf32> to vector<2x8x1xf32>
    %cst_11 = arith.constant 2.400000e+01 : f32
    %22 = vector.broadcast %cst_11 : f32 to vector<2x8x1xf32>
    %23 = arith.divf %21, %22 : vector<2x8x1xf32>
    %24 = vector.broadcast %23 : vector<2x8x1xf32> to vector<2x8x24xf32>
    %25 = arith.subf %14, %24 : vector<2x8x24xf32>
    %26 = arith.mulf %25, %25 : vector<2x8x24xf32>
    %cst_12 = arith.constant dense<0.000000e+00> : vector<2x8xf32>
    %27 = vector.multi_reduction <add>, %26, %cst_12 [2] : vector<2x8x24xf32> to vector<2x8xf32>
    %28 = vector.shape_cast %27 : vector<2x8xf32> to vector<2x8x1xf32>
    %cst_13 = arith.constant 2.400000e+01 : f32
    %29 = vector.broadcast %cst_13 : f32 to vector<2x8x1xf32>
    %30 = arith.divf %28, %29 : vector<2x8x1xf32>
    %31 = vector.broadcast %23 : vector<2x8x1xf32> to vector<2x8x24xf32>
    %32 = arith.subf %14, %31 : vector<2x8x24xf32>
    %cst_14 = arith.constant 9.99999974E-6 : f32
    %33 = vector.broadcast %cst_14 : f32 to vector<2x8x1xf32>
    %34 = arith.addf %30, %33 : vector<2x8x1xf32>
    %35 = math.rsqrt %34 : vector<2x8x1xf32>
    %36 = vector.broadcast %35 : vector<2x8x1xf32> to vector<2x8x24xf32>
    %37 = arith.mulf %32, %36 : vector<2x8x24xf32>
    %38 = vector.shape_cast %17 : vector<1x24xf32> to vector<1x1x24xf32>
    %39 = vector.broadcast %38 : vector<1x1x24xf32> to vector<2x8x24xf32>
    %40 = arith.mulf %37, %39 : vector<2x8x24xf32>
    %41 = vector.shape_cast %19 : vector<1x24xf32> to vector<1x1x24xf32>
    %42 = vector.broadcast %41 : vector<1x1x24xf32> to vector<2x8x24xf32>
    %43 = arith.addf %40, %42 : vector<2x8x24xf32>
    %44 = tpu.transpose %43, [0, 2, 1] : vector<2x8x24xf32> -> vector<2x24x8xf32>
    %45 = vector.shape_cast %44 : vector<2x24x8xf32> to vector<48x8xf32>
    %46 = arith.truncf %45 : vector<48x8xf32> to vector<48x8xbf16>
    %c0_15 = arith.constant 0 : index
    %c0_16 = arith.constant 0 : index
    %c0_17 = arith.constant 0 : index
    %47 = vector.load %arg11[%c0_15, %c0_16, %c0_17] : memref<1x8x16xbf16, #tpu.memory_space<vmem>>, vector<1x8x16xbf16>
    %48 = vector.shape_cast %47 : vector<1x8x16xbf16> to vector<8x16xbf16>
    %cst_18 = arith.constant dense<0.000000e+00> : vector<48x16xf32>
    %49 = tpu.matmul %46, %48, %cst_18 {dimension_numbers = #tpu.dot_dimension_numbers<[1], [0], [0], [1], [0, 0, 1, 1], [], []>} : vector<48x8xbf16>, vector<8x16xbf16>, vector<48x16xf32> -> vector<48x16xf32>
    %c0_19 = arith.constant 0 : index
    %c0_20 = arith.constant 0 : index
    %c0_21 = arith.constant 0 : index
    %50 = vector.load %arg12[%c0_19, %c0_20, %c0_21] : memref<1x1x16xf32, #tpu.memory_space<vmem>>, vector<1x1x16xf32>
    %51 = vector.shape_cast %50 : vector<1x1x16xf32> to vector<1x16xf32>
    %52 = vector.broadcast %51 : vector<1x16xf32> to vector<48x16xf32>
    %53 = arith.addf %49, %52 : vector<48x16xf32>
    %cst_22 = arith.constant 5.000000e-01 : f32
    %54 = vector.broadcast %cst_22 : f32 to vector<48x16xf32>
    %55 = arith.mulf %54, %53 : vector<48x16xf32>
    %cst_23 = arith.constant 4.471500e-02 : f32
    %56 = vector.broadcast %cst_23 : f32 to vector<48x16xf32>
    %57 = arith.mulf %56, %53 : vector<48x16xf32>
    %58 = arith.mulf %57, %53 : vector<48x16xf32>
    %59 = arith.mulf %58, %53 : vector<48x16xf32>
    %60 = arith.addf %53, %59 : vector<48x16xf32>
    %cst_24 = arith.constant 0.797884583 : f32
    %61 = vector.broadcast %cst_24 : f32 to vector<48x16xf32>
    %62 = arith.mulf %61, %60 : vector<48x16xf32>
    %63 = math.tanh %62 : vector<48x16xf32>
    %cst_25 = arith.constant 1.000000e+00 : f32
    %64 = vector.broadcast %cst_25 : f32 to vector<48x16xf32>
    %65 = arith.addf %64, %63 : vector<48x16xf32>
    %66 = arith.mulf %55, %65 : vector<48x16xf32>
    %67 = arith.truncf %66 : vector<48x16xf32> to vector<48x16xbf16>
    %c0_26 = arith.constant 0 : index
    %c0_27 = arith.constant 0 : index
    %c0_28 = arith.constant 0 : index
    %68 = vector.load %arg13[%c0_26, %c0_27, %c0_28] : memref<1x16x8xbf16, #tpu.memory_space<vmem>>, vector<1x16x8xbf16>
    %69 = vector.shape_cast %68 : vector<1x16x8xbf16> to vector<16x8xbf16>
    %cst_29 = arith.constant dense<0.000000e+00> : vector<48x8xf32>
    %70 = tpu.matmul %67, %69, %cst_29 {dimension_numbers = #tpu.dot_dimension_numbers<[1], [0], [0], [1], [0, 0, 1, 1], [], []>} : vector<48x16xbf16>, vector<16x8xbf16>, vector<48x8xf32> -> vector<48x8xf32>
    %c0_30 = arith.constant 0 : index
    %c0_31 = arith.constant 0 : index
    %c0_32 = arith.constant 0 : index
    %71 = vector.load %arg14[%c0_30, %c0_31, %c0_32] : memref<1x1x8xf32, #tpu.memory_space<vmem>>, vector<1x1x8xf32>
    %72 = vector.shape_cast %71 : vector<1x1x8xf32> to vector<1x8xf32>
    %73 = vector.broadcast %72 : vector<1x8xf32> to vector<48x8xf32>
    %74 = arith.addf %70, %73 : vector<48x8xf32>
    %75 = vector.shape_cast %74 : vector<48x8xf32> to vector<2x24x8xf32>
    %76 = tpu.transpose %75, [0, 2, 1] : vector<2x24x8xf32> -> vector<2x8x24xf32>
    %77 = arith.addf %15, %76 : vector<2x8x24xf32>
    %78 = vector.shape_cast %77 : vector<2x8x24xf32> to vector<16x24xf32>
    %c0_33 = arith.constant 0 : index
    %c0_34 = arith.constant 0 : index
    %c0_35 = arith.constant 0 : index
    %79 = vector.load %arg9[%c0_33, %c0_34, %c0_35] : memref<1x1x24xf32, #tpu.memory_space<vmem>>, vector<1x1x24xf32>
    %80 = vector.shape_cast %79 : vector<1x1x24xf32> to vector<1x24xf32>
    %c0_36 = arith.constant 0 : index
    %c0_37 = arith.constant 0 : index
    %c0_38 = arith.constant 0 : index
    %81 = vector.load %arg10[%c0_36, %c0_37, %c0_38] : memref<1x1x24xf32, #tpu.memory_space<vmem>>, vector<1x1x24xf32>
    %82 = vector.shape_cast %81 : vector<1x1x24xf32> to vector<1x24xf32>
    %cst_39 = arith.constant dense<0.000000e+00> : vector<16xf32>
    %83 = vector.multi_reduction <add>, %78, %cst_39 [1] : vector<16x24xf32> to vector<16xf32>
    %84 = vector.shape_cast %83 : vector<16xf32> to vector<16x1xf32>
    %cst_40 = arith.constant 2.400000e+01 : f32
    %85 = vector.broadcast %cst_40 : f32 to vector<16x1xf32>
    %86 = arith.divf %84, %85 : vector<16x1xf32>
    %87 = vector.broadcast %86 : vector<16x1xf32> to vector<16x24xf32>
    %88 = arith.subf %78, %87 : vector<16x24xf32>
    %89 = arith.mulf %88, %88 : vector<16x24xf32>
    %cst_41 = arith.constant dense<0.000000e+00> : vector<16xf32>
    %90 = vector.multi_reduction <add>, %89, %cst_41 [1] : vector<16x24xf32> to vector<16xf32>
    %91 = vector.shape_cast %90 : vector<16xf32> to vector<16x1xf32>
    %cst_42 = arith.constant 2.400000e+01 : f32
    %92 = vector.broadcast %cst_42 : f32 to vector<16x1xf32>
    %93 = arith.divf %91, %92 : vector<16x1xf32>
    %94 = vector.broadcast %86 : vector<16x1xf32> to vector<16x24xf32>
    %95 = arith.subf %78, %94 : vector<16x24xf32>
    %cst_43 = arith.constant 9.99999974E-6 : f32
    %96 = vector.broadcast %cst_43 : f32 to vector<16x1xf32>
    %97 = arith.addf %93, %96 : vector<16x1xf32>
    %98 = math.rsqrt %97 : vector<16x1xf32>
    %99 = vector.broadcast %98 : vector<16x1xf32> to vector<16x24xf32>
    %100 = arith.mulf %95, %99 : vector<16x24xf32>
    %101 = vector.broadcast %80 : vector<1x24xf32> to vector<16x24xf32>
    %102 = arith.mulf %100, %101 : vector<16x24xf32>
    %103 = vector.broadcast %82 : vector<1x24xf32> to vector<16x24xf32>
    %104 = arith.addf %102, %103 : vector<16x24xf32>
    %105 = arith.truncf %104 : vector<16x24xf32> to vector<16x24xbf16>
    %c0_44 = arith.constant 0 : index
    %c0_45 = arith.constant 0 : index
    %c0_46 = arith.constant 0 : index
    %106 = vector.load %arg15[%c0_44, %c0_45, %c0_46] : memref<1x24x32xbf16, #tpu.memory_space<vmem>>, vector<1x24x32xbf16>
    %107 = vector.shape_cast %106 : vector<1x24x32xbf16> to vector<24x32xbf16>
    %cst_47 = arith.constant dense<0.000000e+00> : vector<16x32xf32>
    %108 = tpu.matmul %105, %107, %cst_47 {dimension_numbers = #tpu.dot_dimension_numbers<[1], [0], [0], [1], [0, 0, 1, 1], [], []>} : vector<16x24xbf16>, vector<24x32xbf16>, vector<16x32xf32> -> vector<16x32xf32>
    %c0_48 = arith.constant 0 : index
    %c0_49 = arith.constant 0 : index
    %c0_50 = arith.constant 0 : index
    %109 = vector.load %arg16[%c0_48, %c0_49, %c0_50] : memref<1x1x32xf32, #tpu.memory_space<vmem>>, vector<1x1x32xf32>
    %110 = vector.shape_cast %109 : vector<1x1x32xf32> to vector<1x32xf32>
    %111 = vector.broadcast %110 : vector<1x32xf32> to vector<16x32xf32>
    %112 = arith.addf %108, %111 : vector<16x32xf32>
    %cst_51 = arith.constant 5.000000e-01 : f32
    %113 = vector.broadcast %cst_51 : f32 to vector<16x32xf32>
    %114 = arith.mulf %113, %112 : vector<16x32xf32>
    %cst_52 = arith.constant 4.471500e-02 : f32
    %115 = vector.broadcast %cst_52 : f32 to vector<16x32xf32>
    %116 = arith.mulf %115, %112 : vector<16x32xf32>
    %117 = arith.mulf %116, %112 : vector<16x32xf32>
    %118 = arith.mulf %117, %112 : vector<16x32xf32>
    %119 = arith.addf %112, %118 : vector<16x32xf32>
    %cst_53 = arith.constant 0.797884583 : f32
    %120 = vector.broadcast %cst_53 : f32 to vector<16x32xf32>
    %121 = arith.mulf %120, %119 : vector<16x32xf32>
    %122 = math.tanh %121 : vector<16x32xf32>
    %cst_54 = arith.constant 1.000000e+00 : f32
    %123 = vector.broadcast %cst_54 : f32 to vector<16x32xf32>
    %124 = arith.addf %123, %122 : vector<16x32xf32>
    %125 = arith.mulf %114, %124 : vector<16x32xf32>
    %126 = arith.truncf %125 : vector<16x32xf32> to vector<16x32xbf16>
    %c0_55 = arith.constant 0 : index
    %c0_56 = arith.constant 0 : index
    %c0_57 = arith.constant 0 : index
    %127 = vector.load %arg17[%c0_55, %c0_56, %c0_57] : memref<1x32x24xbf16, #tpu.memory_space<vmem>>, vector<1x32x24xbf16>
    %128 = vector.shape_cast %127 : vector<1x32x24xbf16> to vector<32x24xbf16>
    %cst_58 = arith.constant dense<0.000000e+00> : vector<16x24xf32>
    %129 = tpu.matmul %126, %128, %cst_58 {dimension_numbers = #tpu.dot_dimension_numbers<[1], [0], [0], [1], [0, 0, 1, 1], [], []>} : vector<16x32xbf16>, vector<32x24xbf16>, vector<16x24xf32> -> vector<16x24xf32>
    %c0_59 = arith.constant 0 : index
    %c0_60 = arith.constant 0 : index
    %c0_61 = arith.constant 0 : index
    %130 = vector.load %arg18[%c0_59, %c0_60, %c0_61] : memref<1x1x24xf32, #tpu.memory_space<vmem>>, vector<1x1x24xf32>
    %131 = vector.shape_cast %130 : vector<1x1x24xf32> to vector<1x24xf32>
    %132 = vector.broadcast %131 : vector<1x24xf32> to vector<16x24xf32>
    %133 = arith.addf %129, %132 : vector<16x24xf32>
    %134 = vector.shape_cast %133 : vector<16x24xf32> to vector<2x8x24xf32>
    %135 = arith.addf %14, %134 : vector<2x8x24xf32>
    %136 = tpu.concatenate %135, %77 in 2 : vector<2x8x24xf32>, vector<2x8x24xf32> -> vector<2x8x48xf32>
    %c0_62 = arith.constant 0 : index
    %c0_63 = arith.constant 0 : index
    %c0_64 = arith.constant 0 : index
    %137 = vector.load %arg20[%c0_62, %c0_63, %c0_64] : memref<2x8x48xf32, #tpu.memory_space<vmem>>, vector<2x8x48xf32>
    tpu.vector_store %arg20[%c0_62, %c0_63, %c0_64], %136 {strides = array<i32>} : memref<2x8x48xf32, #tpu.memory_space<vmem>>, vector<2x8x48xf32>,
    %138 = arith.index_cast %arg1 : i32 to index
    %139 = memref.load %arg3[%138] : memref<4xi32, #tpu.memory_space<smem>>
    %c1_i32_65 = arith.constant 1 : i32
    %140 = arith.cmpi eq, %139, %c1_i32_65 : i32
    %141 = arith.extui %140 : i1 to i32
    %c0_i32_66 = arith.constant 0 : i32
    %142 = arith.cmpi ne, %141, %c0_i32_66 : i32
    scf.if %142 {
      %c0_68 = arith.constant 0 : index
      %c0_69 = arith.constant 0 : index
      %c0_70 = arith.constant 0 : index
      %146 = vector.load %arg20[%c0_68, %c0_69, %c0_70] : memref<2x8x48xf32, #tpu.memory_space<vmem>>, vector<2x8x48xf32>
      %147 = vector.shape_cast %146 : vector<2x8x48xf32> to vector<16x48xf32>
      %c0_71 = arith.constant 0 : index
      %c0_72 = arith.constant 0 : index
      %148 = vector.load %arg6[%c0_71, %c0_72] : memref<48x48xf32, #tpu.memory_space<vmem>>, vector<48x48xf32>
      %cst_73 = arith.constant dense<0.000000e+00> : vector<16x48xf32>
      %149 = tpu.matmul %147, %148, %cst_73 {dimension_numbers = #tpu.dot_dimension_numbers<[1], [0], [0], [1], [0, 0, 1, 1], [], []>} : vector<16x48xf32>, vector<48x48xf32>, vector<16x48xf32> -> vector<16x48xf32>
      %150 = vector.shape_cast %149 : vector<16x48xf32> to vector<2x8x48xf32>
      %c0_74 = arith.constant 0 : index
      %c0_75 = arith.constant 0 : index
      %c0_76 = arith.constant 0 : index
      %151 = vector.load %arg20[%c0_74, %c0_75, %c0_76] : memref<2x8x48xf32, #tpu.memory_space<vmem>>, vector<2x8x48xf32>
      tpu.vector_store %arg20[%c0_74, %c0_75, %c0_76], %150 {strides = array<i32>} : memref<2x8x48xf32, #tpu.memory_space<vmem>>, vector<2x8x48xf32>,
    } else {
    }
    %c3_i32 = arith.constant 3 : i32
    %143 = arith.cmpi eq, %arg1, %c3_i32 : i32
    %144 = arith.extui %143 : i1 to i32
    %c0_i32_67 = arith.constant 0 : i32
    %145 = arith.cmpi ne, %144, %c0_i32_67 : i32
    scf.if %145 {
      %c0_68 = arith.constant 0 : index
      %c0_69 = arith.constant 0 : index
      %c0_70 = arith.constant 0 : index
      %146 = vector.load %arg20[%c0_68, %c0_69, %c0_70] : memref<2x8x48xf32, #tpu.memory_space<vmem>>, vector<2x8x48xf32>
      %c0_71 = arith.constant 0 : index
      %c0_72 = arith.constant 0 : index
      %c0_73 = arith.constant 0 : index
      %147 = vector.load %arg19[%c0_71, %c0_72, %c0_73] : memref<2x8x48xf32, #tpu.memory_space<vmem>>, vector<2x8x48xf32>
      tpu.vector_store %arg19[%c0_71, %c0_72, %c0_73], %146 {strides = array<i32>} : memref<2x8x48xf32, #tpu.memory_space<vmem>>, vector<2x8x48xf32>,
    } else {
    }
    return
  }
  func.func @transform_0(%arg0: i32, %arg1: i32, %arg2: memref<4xi32, #tpu.memory_space<smem>>, %arg3: memref<4xi32, #tpu.memory_space<smem>>) -> (i32, i32, i32) {
    %c0_i32 = arith.constant 0 : i32
    %c0_i32_0 = arith.constant 0 : i32
    %c0_i32_1 = arith.constant 0 : i32
    return %arg0, %c0_i32, %c0_i32_0 : i32, i32, i32
  }
  func.func @transform_1(%arg0: i32, %arg1: i32, %arg2: memref<4xi32, #tpu.memory_space<smem>>, %arg3: memref<4xi32, #tpu.memory_space<smem>>) -> (i32, i32) {
    %c0_i32 = arith.constant 0 : i32
    %c0_i32_0 = arith.constant 0 : i32
    %c0_i32_1 = arith.constant 0 : i32
    return %c0_i32, %c0_i32_0 : i32, i32
  }
  func.func @transform_2(%arg0: i32, %arg1: i32, %arg2: memref<4xi32, #tpu.memory_space<smem>>, %arg3: memref<4xi32, #tpu.memory_space<smem>>) -> (i32, i32) {
    %c0_i32 = arith.constant 0 : i32
    %c0_i32_0 = arith.constant 0 : i32
    %c0_i32_1 = arith.constant 0 : i32
    return %c0_i32, %c0_i32_0 : i32, i32
  }
  func.func @transform_3(%arg0: i32, %arg1: i32, %arg2: memref<4xi32, #tpu.memory_space<smem>>, %arg3: memref<4xi32, #tpu.memory_space<smem>>) -> (i32, i32, i32) {
    %c0_i32 = arith.constant 0 : i32
    %c0_i32_0 = arith.constant 0 : i32
    %c0_i32_1 = arith.constant 0 : i32
    return %arg1, %c0_i32, %c0_i32_0 : i32, i32, i32
  }
  func.func @transform_4(%arg0: i32, %arg1: i32, %arg2: memref<4xi32, #tpu.memory_space<smem>>, %arg3: memref<4xi32, #tpu.memory_space<smem>>) -> (i32, i32, i32) {
    %c0_i32 = arith.constant 0 : i32
    %c0_i32_0 = arith.constant 0 : i32
    %c0_i32_1 = arith.constant 0 : i32
    return %arg1, %c0_i32, %c0_i32_0 : i32, i32, i32
  }
  func.func @transform_5(%arg0: i32, %arg1: i32, %arg2: memref<4xi32, #tpu.memory_space<smem>>, %arg3: memref<4xi32, #tpu.memory_space<smem>>) -> (i32, i32, i32) {
    %c0_i32 = arith.constant 0 : i32
    %c0_i32_0 = arith.constant 0 : i32
    %c0_i32_1 = arith.constant 0 : i32
    return %arg1, %c0_i32, %c0_i32_0 : i32, i32, i32
  }
  func.func @transform_6(%arg0: i32, %arg1: i32, %arg2: memref<4xi32, #tpu.memory_space<smem>>, %arg3: memref<4xi32, #tpu.memory_space<smem>>) -> (i32, i32, i32) {
    %c0_i32 = arith.constant 0 : i32
    %c0_i32_0 = arith.constant 0 : i32
    %c0_i32_1 = arith.constant 0 : i32
    return %arg1, %c0_i32, %c0_i32_0 : i32, i32, i32
  }
  func.func @transform_7(%arg0: i32, %arg1: i32, %arg2: memref<4xi32, #tpu.memory_space<smem>>, %arg3: memref<4xi32, #tpu.memory_space<smem>>) -> (i32, i32, i32) {
    %c0_i32 = arith.constant 0 : i32
    %c0_i32_0 = arith.constant 0 : i32
    %c0_i32_1 = arith.constant 0 : i32
    return %arg1, %c0_i32, %c0_i32_0 : i32, i32, i32
  }
  func.func @transform_8(%arg0: i32, %arg1: i32, %arg2: memref<4xi32, #tpu.memory_space<smem>>, %arg3: memref<4xi32, #tpu.memory_space<smem>>) -> (i32, i32, i32) {
    %c0_i32 = arith.constant 0 : i32
    %c0_i32_0 = arith.constant 0 : i32
    %c0_i32_1 = arith.constant 0 : i32
    return %arg1, %c0_i32, %c0_i32_0 : i32, i32, i32
  }
  func.func @transform_9(%arg0: i32, %arg1: i32, %arg2: memref<4xi32, #tpu.memory_space<smem>>, %arg3: memref<4xi32, #tpu.memory_space<smem>>) -> (i32, i32, i32) {
    %c0_i32 = arith.constant 0 : i32
    %c0_i32_0 = arith.constant 0 : i32
    %c0_i32_1 = arith.constant 0 : i32
    return %arg1, %c0_i32, %c0_i32_0 : i32, i32, i32
  }
  func.func @transform_10(%arg0: i32, %arg1: i32, %arg2: memref<4xi32, #tpu.memory_space<smem>>, %arg3: memref<4xi32, #tpu.memory_space<smem>>) -> (i32, i32, i32) {
    %c0_i32 = arith.constant 0 : i32
    %c0_i32_0 = arith.constant 0 : i32
    %c0_i32_1 = arith.constant 0 : i32
    return %arg1, %c0_i32, %c0_i32_0 : i32, i32, i32
  }
  func.func @transform_11(%arg0: i32, %arg1: i32, %arg2: memref<4xi32, #tpu.memory_space<smem>>, %arg3: memref<4xi32, #tpu.memory_space<smem>>) -> (i32, i32, i32) {
    %c0_i32 = arith.constant 0 : i32
    %c0_i32_0 = arith.constant 0 : i32
    %c0_i32_1 = arith.constant 0 : i32
    return %arg1, %c0_i32, %c0_i32_0 : i32, i32, i32
  }
  func.func @transform_12(%arg0: i32, %arg1: i32, %arg2: memref<4xi32, #tpu.memory_space<smem>>, %arg3: memref<4xi32, #tpu.memory_space<smem>>) -> (i32, i32, i32) {
    %c0_i32 = arith.constant 0 : i32
    %c0_i32_0 = arith.constant 0 : i32
    %c0_i32_1 = arith.constant 0 : i32
    return %arg1, %c0_i32, %c0_i32_0 : i32, i32, i32
  }
  func.func @transform_13(%arg0: i32, %arg1: i32, %arg2: memref<4xi32, #tpu.memory_space<smem>>, %arg3: memref<4xi32, #tpu.memory_space<smem>>) -> (i32, i32, i32) {
    %c0_i32 = arith.constant 0 : i32
    %c0_i32_0 = arith.constant 0 : i32
    %c0_i32_1 = arith.constant 0 : i32
    return %arg1, %c0_i32, %c0_i32_0 : i32, i32, i32
  }
  func.func @transform_14(%arg0: i32, %arg1: i32, %arg2: memref<4xi32, #tpu.memory_space<smem>>, %arg3: memref<4xi32, #tpu.memory_space<smem>>) -> (i32, i32, i32) {
    %c0_i32 = arith.constant 0 : i32
    %c0_i32_0 = arith.constant 0 : i32
    %c0_i32_1 = arith.constant 0 : i32
    return %arg1, %c0_i32, %c0_i32_0 : i32, i32, i32
  }
  func.func @transform_15(%arg0: i32, %arg1: i32, %arg2: memref<4xi32, #tpu.memory_space<smem>>, %arg3: memref<4xi32, #tpu.memory_space<smem>>) -> (i32, i32, i32) {
    %c0_i32 = arith.constant 0 : i32
    %c0_i32_0 = arith.constant 0 : i32
    %c0_i32_1 = arith.constant 0 : i32
    return %arg0, %c0_i32, %c0_i32_0 : i32, i32, i32
  }
}

module attributes {stable_mosaic.version = 11 : i64} {
  func.func @_mixer_stack_kernel(%arg0: i32, %arg1: i32, %arg2: memref<2xi32, #tpu.memory_space<smem>>, %arg3: memref<2xi32, #tpu.memory_space<smem>>, %arg4: memref<1x8x48xf32, #tpu.memory_space<vmem>>, %arg5: memref<48x48xf32, #tpu.memory_space<vmem>>, %arg6: memref<48x48xf32, #tpu.memory_space<vmem>>, %arg7: memref<1x1x24xf32, #tpu.memory_space<vmem>>, %arg8: memref<1x1x24xf32, #tpu.memory_space<vmem>>, %arg9: memref<1x1x24xf32, #tpu.memory_space<vmem>>, %arg10: memref<1x1x24xf32, #tpu.memory_space<vmem>>, %arg11: memref<1x8x16xbf16, #tpu.memory_space<vmem>>, %arg12: memref<1x1x16xf32, #tpu.memory_space<vmem>>, %arg13: memref<1x16x8xbf16, #tpu.memory_space<vmem>>, %arg14: memref<1x1x8xf32, #tpu.memory_space<vmem>>, %arg15: memref<1x24x32xbf16, #tpu.memory_space<vmem>>, %arg16: memref<1x1x32xf32, #tpu.memory_space<vmem>>, %arg17: memref<1x32x24xbf16, #tpu.memory_space<vmem>>, %arg18: memref<1x1x24xf32, #tpu.memory_space<vmem>>, %arg19: memref<1x8x48xf32, #tpu.memory_space<vmem>>, %arg20: memref<1x8x48xf32, #tpu.memory_space<vmem>>) attributes {dimension_semantics = [#tpu.dimension_semantics<parallel>, #tpu.dimension_semantics<arbitrary>], iteration_bounds = array<i64: 2, 2>, scalar_prefetch = 2 : i64, scratch_operands = 1 : i64, tpu.core_type = #tpu.core_type<tc>, window_params = [{transform_indices = @transform_0, window_bounds = array<i64: 1, 8, 48>}, {pipeline_mode = #tpu.pipeline_mode<synchronous>, transform_indices = @transform_1, window_bounds = array<i64: 48, 48>}, {pipeline_mode = #tpu.pipeline_mode<synchronous>, transform_indices = @transform_2, window_bounds = array<i64: 48, 48>}, {transform_indices = @transform_3, window_bounds = array<i64: 1, 1, 24>}, {transform_indices = @transform_4, window_bounds = array<i64: 1, 1, 24>}, {transform_indices = @transform_5, window_bounds = array<i64: 1, 1, 24>}, {transform_indices = @transform_6, window_bounds = array<i64: 1, 1, 24>}, {transform_indices = @transform_7, window_bounds = array<i64: 1, 8, 16>}, {transform_indices = @transform_8, window_bounds = array<i64: 1, 1, 16>}, {transform_indices = @transform_9, window_bounds = array<i64: 1, 16, 8>}, {transform_indices = @transform_10, window_bounds = array<i64: 1, 1, 8>}, {transform_indices = @transform_11, window_bounds = array<i64: 1, 24, 32>}, {transform_indices = @transform_12, window_bounds = array<i64: 1, 1, 32>}, {transform_indices = @transform_13, window_bounds = array<i64: 1, 32, 24>}, {transform_indices = @transform_14, window_bounds = array<i64: 1, 1, 24>}, {transform_indices = @transform_15, window_bounds = array<i64: 1, 8, 48>}]} {
    %c0_i32 = arith.constant 0 : i32
    %0 = arith.cmpi eq, %arg1, %c0_i32 : i32
    %1 = arith.extui %0 : i1 to i32
    %c0_i32_0 = arith.constant 0 : i32
    %2 = arith.cmpi ne, %1, %c0_i32_0 : i32
    scf.if %2 {
      %c0_69 = arith.constant 0 : index
      %c0_70 = arith.constant 0 : index
      %c0_71 = arith.constant 0 : index
      %146 = vector.load %arg4[%c0_69, %c0_70, %c0_71] : memref<1x8x48xf32, #tpu.memory_space<vmem>>, vector<1x8x48xf32>
      %c0_72 = arith.constant 0 : index
      %c0_73 = arith.constant 0 : index
      %c0_74 = arith.constant 0 : index
      %147 = vector.load %arg20[%c0_72, %c0_73, %c0_74] : memref<1x8x48xf32, #tpu.memory_space<vmem>>, vector<1x8x48xf32>
      tpu.vector_store %arg20[%c0_72, %c0_73, %c0_74], %146 {strides = array<i32>} : memref<1x8x48xf32, #tpu.memory_space<vmem>>, vector<1x8x48xf32>,
    } else {
    }
    %3 = arith.index_cast %arg1 : i32 to index
    %4 = memref.load %arg2[%3] : memref<2xi32, #tpu.memory_space<smem>>
    %c1_i32 = arith.constant 1 : i32
    %5 = arith.cmpi eq, %4, %c1_i32 : i32
    %6 = arith.extui %5 : i1 to i32
    %c0_i32_1 = arith.constant 0 : i32
    %7 = arith.cmpi ne, %6, %c0_i32_1 : i32
    scf.if %7 {
      %c0_69 = arith.constant 0 : index
      %c0_70 = arith.constant 0 : index
      %c0_71 = arith.constant 0 : index
      %146 = vector.load %arg20[%c0_69, %c0_70, %c0_71] : memref<1x8x48xf32, #tpu.memory_space<vmem>>, vector<1x8x48xf32>
      %147 = vector.shape_cast %146 : vector<1x8x48xf32> to vector<8x48xf32>
      %c0_72 = arith.constant 0 : index
      %c0_73 = arith.constant 0 : index
      %148 = vector.load %arg5[%c0_72, %c0_73] : memref<48x48xf32, #tpu.memory_space<vmem>>, vector<48x48xf32>
      %cst_74 = arith.constant dense<0.000000e+00> : vector<8x48xf32>
      %149 = tpu.matmul %147, %148, %cst_74 {dimension_numbers = #tpu.dot_dimension_numbers<[1], [0], [0], [1], [0, 0, 1, 1], [], []>} : vector<8x48xf32>, vector<48x48xf32>, vector<8x48xf32> -> vector<8x48xf32>
      %150 = vector.shape_cast %149 : vector<8x48xf32> to vector<1x8x48xf32>
      %c0_75 = arith.constant 0 : index
      %c0_76 = arith.constant 0 : index
      %c0_77 = arith.constant 0 : index
      %151 = vector.load %arg20[%c0_75, %c0_76, %c0_77] : memref<1x8x48xf32, #tpu.memory_space<vmem>>, vector<1x8x48xf32>
      tpu.vector_store %arg20[%c0_75, %c0_76, %c0_77], %150 {strides = array<i32>} : memref<1x8x48xf32, #tpu.memory_space<vmem>>, vector<1x8x48xf32>,
    } else {
    }
    %8 = arith.index_cast %arg1 : i32 to index
    %9 = memref.load %arg2[%8] : memref<2xi32, #tpu.memory_space<smem>>
    %c2_i32 = arith.constant 2 : i32
    %10 = arith.cmpi eq, %9, %c2_i32 : i32
    %11 = arith.extui %10 : i1 to i32
    %c0_i32_2 = arith.constant 0 : i32
    %12 = arith.cmpi ne, %11, %c0_i32_2 : i32
    scf.if %12 {
      %c0_69 = arith.constant 0 : index
      %c0_70 = arith.constant 0 : index
      %c0_71 = arith.constant 0 : index
      %146 = vector.load %arg20[%c0_69, %c0_70, %c0_71] : memref<1x8x48xf32, #tpu.memory_space<vmem>>, vector<1x8x48xf32>
      %147 = vector.shape_cast %146 : vector<1x8x48xf32> to vector<8x48xf32>
      %c0_72 = arith.constant 0 : index
      %c0_73 = arith.constant 0 : index
      %148 = vector.load %arg6[%c0_72, %c0_73] : memref<48x48xf32, #tpu.memory_space<vmem>>, vector<48x48xf32>
      %cst_74 = arith.constant dense<0.000000e+00> : vector<8x48xf32>
      %149 = tpu.matmul %147, %148, %cst_74 {dimension_numbers = #tpu.dot_dimension_numbers<[1], [0], [0], [1], [0, 0, 1, 1], [], []>} : vector<8x48xf32>, vector<48x48xf32>, vector<8x48xf32> -> vector<8x48xf32>
      %150 = vector.shape_cast %149 : vector<8x48xf32> to vector<1x8x48xf32>
      %c0_75 = arith.constant 0 : index
      %c0_76 = arith.constant 0 : index
      %c0_77 = arith.constant 0 : index
      %151 = vector.load %arg20[%c0_75, %c0_76, %c0_77] : memref<1x8x48xf32, #tpu.memory_space<vmem>>, vector<1x8x48xf32>
      tpu.vector_store %arg20[%c0_75, %c0_76, %c0_77], %150 {strides = array<i32>} : memref<1x8x48xf32, #tpu.memory_space<vmem>>, vector<1x8x48xf32>,
    } else {
    }
    %c0 = arith.constant 0 : index
    %c0_3 = arith.constant 0 : index
    %c0_4 = arith.constant 0 : index
    %13 = vector.load %arg20[%c0, %c0_3, %c0_4] : memref<1x8x48xf32, #tpu.memory_space<vmem>>, vector<1x8x48xf32>
    %14 = vector.extract_strided_slice %13 {offsets = [0, 0, 24], sizes = [1, 8, 24], strides = [1, 1, 1]} : vector<1x8x48xf32> to vector<1x8x24xf32>
    %15 = vector.extract_strided_slice %13 {offsets = [0, 0, 0], sizes = [1, 8, 24], strides = [1, 1, 1]} : vector<1x8x48xf32> to vector<1x8x24xf32>
    %c0_5 = arith.constant 0 : index
    %c0_6 = arith.constant 0 : index
    %c0_7 = arith.constant 0 : index
    %16 = vector.load %arg7[%c0_5, %c0_6, %c0_7] : memref<1x1x24xf32, #tpu.memory_space<vmem>>, vector<1x1x24xf32>
    %17 = vector.shape_cast %16 : vector<1x1x24xf32> to vector<1x24xf32>
    %c0_8 = arith.constant 0 : index
    %c0_9 = arith.constant 0 : index
    %c0_10 = arith.constant 0 : index
    %18 = vector.load %arg8[%c0_8, %c0_9, %c0_10] : memref<1x1x24xf32, #tpu.memory_space<vmem>>, vector<1x1x24xf32>
    %19 = vector.shape_cast %18 : vector<1x1x24xf32> to vector<1x24xf32>
    %cst = arith.constant dense<0.000000e+00> : vector<1x8xf32>
    %20 = vector.multi_reduction <add>, %14, %cst [2] : vector<1x8x24xf32> to vector<1x8xf32>
    %21 = vector.shape_cast %20 : vector<1x8xf32> to vector<1x8x1xf32>
    %cst_11 = arith.constant 2.400000e+01 : f32
    %22 = vector.broadcast %cst_11 : f32 to vector<1x8x1xf32>
    %23 = arith.divf %21, %22 : vector<1x8x1xf32>
    %24 = vector.broadcast %23 : vector<1x8x1xf32> to vector<1x8x24xf32>
    %25 = arith.subf %14, %24 : vector<1x8x24xf32>
    %26 = arith.mulf %25, %25 : vector<1x8x24xf32>
    %cst_12 = arith.constant dense<0.000000e+00> : vector<1x8xf32>
    %27 = vector.multi_reduction <add>, %26, %cst_12 [2] : vector<1x8x24xf32> to vector<1x8xf32>
    %28 = vector.shape_cast %27 : vector<1x8xf32> to vector<1x8x1xf32>
    %cst_13 = arith.constant 2.400000e+01 : f32
    %29 = vector.broadcast %cst_13 : f32 to vector<1x8x1xf32>
    %30 = arith.divf %28, %29 : vector<1x8x1xf32>
    %31 = vector.broadcast %23 : vector<1x8x1xf32> to vector<1x8x24xf32>
    %32 = arith.subf %14, %31 : vector<1x8x24xf32>
    %cst_14 = arith.constant 9.99999974E-6 : f32
    %33 = vector.broadcast %cst_14 : f32 to vector<1x8x1xf32>
    %34 = arith.addf %30, %33 : vector<1x8x1xf32>
    %35 = math.rsqrt %34 : vector<1x8x1xf32>
    %36 = vector.broadcast %35 : vector<1x8x1xf32> to vector<1x8x24xf32>
    %37 = arith.mulf %32, %36 : vector<1x8x24xf32>
    %38 = vector.shape_cast %17 : vector<1x24xf32> to vector<1x1x24xf32>
    %39 = vector.broadcast %38 : vector<1x1x24xf32> to vector<1x8x24xf32>
    %40 = arith.mulf %37, %39 : vector<1x8x24xf32>
    %41 = vector.shape_cast %19 : vector<1x24xf32> to vector<1x1x24xf32>
    %42 = vector.broadcast %41 : vector<1x1x24xf32> to vector<1x8x24xf32>
    %43 = arith.addf %40, %42 : vector<1x8x24xf32>
    %44 = tpu.transpose %43, [0, 2, 1] : vector<1x8x24xf32> -> vector<1x24x8xf32>
    %45 = vector.shape_cast %44 : vector<1x24x8xf32> to vector<24x8xf32>
    %46 = arith.truncf %45 : vector<24x8xf32> to vector<24x8xbf16>
    %c0_15 = arith.constant 0 : index
    %c0_16 = arith.constant 0 : index
    %c0_17 = arith.constant 0 : index
    %47 = vector.load %arg11[%c0_15, %c0_16, %c0_17] : memref<1x8x16xbf16, #tpu.memory_space<vmem>>, vector<1x8x16xbf16>
    %48 = vector.shape_cast %47 : vector<1x8x16xbf16> to vector<8x16xbf16>
    %cst_18 = arith.constant dense<0.000000e+00> : vector<24x16xf32>
    %49 = tpu.matmul %46, %48, %cst_18 {dimension_numbers = #tpu.dot_dimension_numbers<[1], [0], [0], [1], [0, 0, 1, 1], [], []>} : vector<24x8xbf16>, vector<8x16xbf16>, vector<24x16xf32> -> vector<24x16xf32>
    %c0_19 = arith.constant 0 : index
    %c0_20 = arith.constant 0 : index
    %c0_21 = arith.constant 0 : index
    %50 = vector.load %arg12[%c0_19, %c0_20, %c0_21] : memref<1x1x16xf32, #tpu.memory_space<vmem>>, vector<1x1x16xf32>
    %51 = vector.shape_cast %50 : vector<1x1x16xf32> to vector<1x16xf32>
    %52 = vector.broadcast %51 : vector<1x16xf32> to vector<24x16xf32>
    %53 = arith.addf %49, %52 : vector<24x16xf32>
    %cst_22 = arith.constant 5.000000e-01 : f32
    %54 = vector.broadcast %cst_22 : f32 to vector<24x16xf32>
    %55 = arith.mulf %54, %53 : vector<24x16xf32>
    %cst_23 = arith.constant 4.471500e-02 : f32
    %56 = vector.broadcast %cst_23 : f32 to vector<24x16xf32>
    %57 = arith.mulf %56, %53 : vector<24x16xf32>
    %58 = arith.mulf %57, %53 : vector<24x16xf32>
    %59 = arith.mulf %58, %53 : vector<24x16xf32>
    %60 = arith.addf %53, %59 : vector<24x16xf32>
    %cst_24 = arith.constant 0.797884583 : f32
    %61 = vector.broadcast %cst_24 : f32 to vector<24x16xf32>
    %62 = arith.mulf %61, %60 : vector<24x16xf32>
    %63 = math.tanh %62 : vector<24x16xf32>
    %cst_25 = arith.constant 1.000000e+00 : f32
    %64 = vector.broadcast %cst_25 : f32 to vector<24x16xf32>
    %65 = arith.addf %64, %63 : vector<24x16xf32>
    %66 = arith.mulf %55, %65 : vector<24x16xf32>
    %67 = arith.truncf %66 : vector<24x16xf32> to vector<24x16xbf16>
    %c0_26 = arith.constant 0 : index
    %c0_27 = arith.constant 0 : index
    %c0_28 = arith.constant 0 : index
    %68 = vector.load %arg13[%c0_26, %c0_27, %c0_28] : memref<1x16x8xbf16, #tpu.memory_space<vmem>>, vector<1x16x8xbf16>
    %69 = vector.shape_cast %68 : vector<1x16x8xbf16> to vector<16x8xbf16>
    %cst_29 = arith.constant dense<0.000000e+00> : vector<24x8xf32>
    %70 = tpu.matmul %67, %69, %cst_29 {dimension_numbers = #tpu.dot_dimension_numbers<[1], [0], [0], [1], [0, 0, 1, 1], [], []>} : vector<24x16xbf16>, vector<16x8xbf16>, vector<24x8xf32> -> vector<24x8xf32>
    %c0_30 = arith.constant 0 : index
    %c0_31 = arith.constant 0 : index
    %c0_32 = arith.constant 0 : index
    %71 = vector.load %arg14[%c0_30, %c0_31, %c0_32] : memref<1x1x8xf32, #tpu.memory_space<vmem>>, vector<1x1x8xf32>
    %72 = vector.shape_cast %71 : vector<1x1x8xf32> to vector<1x8xf32>
    %73 = vector.broadcast %72 : vector<1x8xf32> to vector<24x8xf32>
    %74 = arith.addf %70, %73 : vector<24x8xf32>
    %75 = vector.shape_cast %74 : vector<24x8xf32> to vector<1x24x8xf32>
    %76 = tpu.transpose %75, [0, 2, 1] : vector<1x24x8xf32> -> vector<1x8x24xf32>
    %77 = arith.addf %15, %76 : vector<1x8x24xf32>
    %78 = vector.shape_cast %77 : vector<1x8x24xf32> to vector<8x24xf32>
    %c0_33 = arith.constant 0 : index
    %c0_34 = arith.constant 0 : index
    %c0_35 = arith.constant 0 : index
    %79 = vector.load %arg9[%c0_33, %c0_34, %c0_35] : memref<1x1x24xf32, #tpu.memory_space<vmem>>, vector<1x1x24xf32>
    %80 = vector.shape_cast %79 : vector<1x1x24xf32> to vector<1x24xf32>
    %c0_36 = arith.constant 0 : index
    %c0_37 = arith.constant 0 : index
    %c0_38 = arith.constant 0 : index
    %81 = vector.load %arg10[%c0_36, %c0_37, %c0_38] : memref<1x1x24xf32, #tpu.memory_space<vmem>>, vector<1x1x24xf32>
    %82 = vector.shape_cast %81 : vector<1x1x24xf32> to vector<1x24xf32>
    %cst_39 = arith.constant dense<0.000000e+00> : vector<8xf32>
    %83 = vector.multi_reduction <add>, %78, %cst_39 [1] : vector<8x24xf32> to vector<8xf32>
    %84 = vector.shape_cast %83 : vector<8xf32> to vector<8x1xf32>
    %cst_40 = arith.constant 2.400000e+01 : f32
    %85 = vector.broadcast %cst_40 : f32 to vector<8x1xf32>
    %86 = arith.divf %84, %85 : vector<8x1xf32>
    %87 = vector.broadcast %86 : vector<8x1xf32> to vector<8x24xf32>
    %88 = arith.subf %78, %87 : vector<8x24xf32>
    %89 = arith.mulf %88, %88 : vector<8x24xf32>
    %cst_41 = arith.constant dense<0.000000e+00> : vector<8xf32>
    %90 = vector.multi_reduction <add>, %89, %cst_41 [1] : vector<8x24xf32> to vector<8xf32>
    %91 = vector.shape_cast %90 : vector<8xf32> to vector<8x1xf32>
    %cst_42 = arith.constant 2.400000e+01 : f32
    %92 = vector.broadcast %cst_42 : f32 to vector<8x1xf32>
    %93 = arith.divf %91, %92 : vector<8x1xf32>
    %94 = vector.broadcast %86 : vector<8x1xf32> to vector<8x24xf32>
    %95 = arith.subf %78, %94 : vector<8x24xf32>
    %cst_43 = arith.constant 9.99999974E-6 : f32
    %96 = vector.broadcast %cst_43 : f32 to vector<8x1xf32>
    %97 = arith.addf %93, %96 : vector<8x1xf32>
    %98 = math.rsqrt %97 : vector<8x1xf32>
    %99 = vector.broadcast %98 : vector<8x1xf32> to vector<8x24xf32>
    %100 = arith.mulf %95, %99 : vector<8x24xf32>
    %101 = vector.broadcast %80 : vector<1x24xf32> to vector<8x24xf32>
    %102 = arith.mulf %100, %101 : vector<8x24xf32>
    %103 = vector.broadcast %82 : vector<1x24xf32> to vector<8x24xf32>
    %104 = arith.addf %102, %103 : vector<8x24xf32>
    %105 = arith.truncf %104 : vector<8x24xf32> to vector<8x24xbf16>
    %c0_44 = arith.constant 0 : index
    %c0_45 = arith.constant 0 : index
    %c0_46 = arith.constant 0 : index
    %106 = vector.load %arg15[%c0_44, %c0_45, %c0_46] : memref<1x24x32xbf16, #tpu.memory_space<vmem>>, vector<1x24x32xbf16>
    %107 = vector.shape_cast %106 : vector<1x24x32xbf16> to vector<24x32xbf16>
    %cst_47 = arith.constant dense<0.000000e+00> : vector<8x32xf32>
    %108 = tpu.matmul %105, %107, %cst_47 {dimension_numbers = #tpu.dot_dimension_numbers<[1], [0], [0], [1], [0, 0, 1, 1], [], []>} : vector<8x24xbf16>, vector<24x32xbf16>, vector<8x32xf32> -> vector<8x32xf32>
    %c0_48 = arith.constant 0 : index
    %c0_49 = arith.constant 0 : index
    %c0_50 = arith.constant 0 : index
    %109 = vector.load %arg16[%c0_48, %c0_49, %c0_50] : memref<1x1x32xf32, #tpu.memory_space<vmem>>, vector<1x1x32xf32>
    %110 = vector.shape_cast %109 : vector<1x1x32xf32> to vector<1x32xf32>
    %111 = vector.broadcast %110 : vector<1x32xf32> to vector<8x32xf32>
    %112 = arith.addf %108, %111 : vector<8x32xf32>
    %cst_51 = arith.constant 5.000000e-01 : f32
    %113 = vector.broadcast %cst_51 : f32 to vector<8x32xf32>
    %114 = arith.mulf %113, %112 : vector<8x32xf32>
    %cst_52 = arith.constant 4.471500e-02 : f32
    %115 = vector.broadcast %cst_52 : f32 to vector<8x32xf32>
    %116 = arith.mulf %115, %112 : vector<8x32xf32>
    %117 = arith.mulf %116, %112 : vector<8x32xf32>
    %118 = arith.mulf %117, %112 : vector<8x32xf32>
    %119 = arith.addf %112, %118 : vector<8x32xf32>
    %cst_53 = arith.constant 0.797884583 : f32
    %120 = vector.broadcast %cst_53 : f32 to vector<8x32xf32>
    %121 = arith.mulf %120, %119 : vector<8x32xf32>
    %122 = math.tanh %121 : vector<8x32xf32>
    %cst_54 = arith.constant 1.000000e+00 : f32
    %123 = vector.broadcast %cst_54 : f32 to vector<8x32xf32>
    %124 = arith.addf %123, %122 : vector<8x32xf32>
    %125 = arith.mulf %114, %124 : vector<8x32xf32>
    %126 = arith.truncf %125 : vector<8x32xf32> to vector<8x32xbf16>
    %c0_55 = arith.constant 0 : index
    %c0_56 = arith.constant 0 : index
    %c0_57 = arith.constant 0 : index
    %127 = vector.load %arg17[%c0_55, %c0_56, %c0_57] : memref<1x32x24xbf16, #tpu.memory_space<vmem>>, vector<1x32x24xbf16>
    %128 = vector.shape_cast %127 : vector<1x32x24xbf16> to vector<32x24xbf16>
    %cst_58 = arith.constant dense<0.000000e+00> : vector<8x24xf32>
    %129 = tpu.matmul %126, %128, %cst_58 {dimension_numbers = #tpu.dot_dimension_numbers<[1], [0], [0], [1], [0, 0, 1, 1], [], []>} : vector<8x32xbf16>, vector<32x24xbf16>, vector<8x24xf32> -> vector<8x24xf32>
    %c0_59 = arith.constant 0 : index
    %c0_60 = arith.constant 0 : index
    %c0_61 = arith.constant 0 : index
    %130 = vector.load %arg18[%c0_59, %c0_60, %c0_61] : memref<1x1x24xf32, #tpu.memory_space<vmem>>, vector<1x1x24xf32>
    %131 = vector.shape_cast %130 : vector<1x1x24xf32> to vector<1x24xf32>
    %132 = vector.broadcast %131 : vector<1x24xf32> to vector<8x24xf32>
    %133 = arith.addf %129, %132 : vector<8x24xf32>
    %134 = vector.shape_cast %133 : vector<8x24xf32> to vector<1x8x24xf32>
    %135 = arith.addf %14, %134 : vector<1x8x24xf32>
    %136 = tpu.concatenate %135, %77 in 2 : vector<1x8x24xf32>, vector<1x8x24xf32> -> vector<1x8x48xf32>
    %c0_62 = arith.constant 0 : index
    %c0_63 = arith.constant 0 : index
    %c0_64 = arith.constant 0 : index
    %137 = vector.load %arg20[%c0_62, %c0_63, %c0_64] : memref<1x8x48xf32, #tpu.memory_space<vmem>>, vector<1x8x48xf32>
    tpu.vector_store %arg20[%c0_62, %c0_63, %c0_64], %136 {strides = array<i32>} : memref<1x8x48xf32, #tpu.memory_space<vmem>>, vector<1x8x48xf32>,
    %138 = arith.index_cast %arg1 : i32 to index
    %139 = memref.load %arg3[%138] : memref<2xi32, #tpu.memory_space<smem>>
    %c1_i32_65 = arith.constant 1 : i32
    %140 = arith.cmpi eq, %139, %c1_i32_65 : i32
    %141 = arith.extui %140 : i1 to i32
    %c0_i32_66 = arith.constant 0 : i32
    %142 = arith.cmpi ne, %141, %c0_i32_66 : i32
    scf.if %142 {
      %c0_69 = arith.constant 0 : index
      %c0_70 = arith.constant 0 : index
      %c0_71 = arith.constant 0 : index
      %146 = vector.load %arg20[%c0_69, %c0_70, %c0_71] : memref<1x8x48xf32, #tpu.memory_space<vmem>>, vector<1x8x48xf32>
      %147 = vector.shape_cast %146 : vector<1x8x48xf32> to vector<8x48xf32>
      %c0_72 = arith.constant 0 : index
      %c0_73 = arith.constant 0 : index
      %148 = vector.load %arg6[%c0_72, %c0_73] : memref<48x48xf32, #tpu.memory_space<vmem>>, vector<48x48xf32>
      %cst_74 = arith.constant dense<0.000000e+00> : vector<8x48xf32>
      %149 = tpu.matmul %147, %148, %cst_74 {dimension_numbers = #tpu.dot_dimension_numbers<[1], [0], [0], [1], [0, 0, 1, 1], [], []>} : vector<8x48xf32>, vector<48x48xf32>, vector<8x48xf32> -> vector<8x48xf32>
      %150 = vector.shape_cast %149 : vector<8x48xf32> to vector<1x8x48xf32>
      %c0_75 = arith.constant 0 : index
      %c0_76 = arith.constant 0 : index
      %c0_77 = arith.constant 0 : index
      %151 = vector.load %arg20[%c0_75, %c0_76, %c0_77] : memref<1x8x48xf32, #tpu.memory_space<vmem>>, vector<1x8x48xf32>
      tpu.vector_store %arg20[%c0_75, %c0_76, %c0_77], %150 {strides = array<i32>} : memref<1x8x48xf32, #tpu.memory_space<vmem>>, vector<1x8x48xf32>,
    } else {
    }
    %c1_i32_67 = arith.constant 1 : i32
    %143 = arith.cmpi eq, %arg1, %c1_i32_67 : i32
    %144 = arith.extui %143 : i1 to i32
    %c0_i32_68 = arith.constant 0 : i32
    %145 = arith.cmpi ne, %144, %c0_i32_68 : i32
    scf.if %145 {
      %c0_69 = arith.constant 0 : index
      %c0_70 = arith.constant 0 : index
      %c0_71 = arith.constant 0 : index
      %146 = vector.load %arg20[%c0_69, %c0_70, %c0_71] : memref<1x8x48xf32, #tpu.memory_space<vmem>>, vector<1x8x48xf32>
      %c0_72 = arith.constant 0 : index
      %c0_73 = arith.constant 0 : index
      %c0_74 = arith.constant 0 : index
      %147 = vector.load %arg19[%c0_72, %c0_73, %c0_74] : memref<1x8x48xf32, #tpu.memory_space<vmem>>, vector<1x8x48xf32>
      tpu.vector_store %arg19[%c0_72, %c0_73, %c0_74], %146 {strides = array<i32>} : memref<1x8x48xf32, #tpu.memory_space<vmem>>, vector<1x8x48xf32>,
    } else {
    }
    return
  }
  func.func @transform_0(%arg0: i32, %arg1: i32, %arg2: memref<2xi32, #tpu.memory_space<smem>>, %arg3: memref<2xi32, #tpu.memory_space<smem>>) -> (i32, i32, i32) {
    %c0_i32 = arith.constant 0 : i32
    %c0_i32_0 = arith.constant 0 : i32
    %c0_i32_1 = arith.constant 0 : i32
    return %arg0, %c0_i32, %c0_i32_0 : i32, i32, i32
  }
  func.func @transform_1(%arg0: i32, %arg1: i32, %arg2: memref<2xi32, #tpu.memory_space<smem>>, %arg3: memref<2xi32, #tpu.memory_space<smem>>) -> (i32, i32) {
    %c0_i32 = arith.constant 0 : i32
    %c0_i32_0 = arith.constant 0 : i32
    %c0_i32_1 = arith.constant 0 : i32
    return %c0_i32, %c0_i32_0 : i32, i32
  }
  func.func @transform_2(%arg0: i32, %arg1: i32, %arg2: memref<2xi32, #tpu.memory_space<smem>>, %arg3: memref<2xi32, #tpu.memory_space<smem>>) -> (i32, i32) {
    %c0_i32 = arith.constant 0 : i32
    %c0_i32_0 = arith.constant 0 : i32
    %c0_i32_1 = arith.constant 0 : i32
    return %c0_i32, %c0_i32_0 : i32, i32
  }
  func.func @transform_3(%arg0: i32, %arg1: i32, %arg2: memref<2xi32, #tpu.memory_space<smem>>, %arg3: memref<2xi32, #tpu.memory_space<smem>>) -> (i32, i32, i32) {
    %c0_i32 = arith.constant 0 : i32
    %c0_i32_0 = arith.constant 0 : i32
    %c0_i32_1 = arith.constant 0 : i32
    return %arg1, %c0_i32, %c0_i32_0 : i32, i32, i32
  }
  func.func @transform_4(%arg0: i32, %arg1: i32, %arg2: memref<2xi32, #tpu.memory_space<smem>>, %arg3: memref<2xi32, #tpu.memory_space<smem>>) -> (i32, i32, i32) {
    %c0_i32 = arith.constant 0 : i32
    %c0_i32_0 = arith.constant 0 : i32
    %c0_i32_1 = arith.constant 0 : i32
    return %arg1, %c0_i32, %c0_i32_0 : i32, i32, i32
  }
  func.func @transform_5(%arg0: i32, %arg1: i32, %arg2: memref<2xi32, #tpu.memory_space<smem>>, %arg3: memref<2xi32, #tpu.memory_space<smem>>) -> (i32, i32, i32) {
    %c0_i32 = arith.constant 0 : i32
    %c0_i32_0 = arith.constant 0 : i32
    %c0_i32_1 = arith.constant 0 : i32
    return %arg1, %c0_i32, %c0_i32_0 : i32, i32, i32
  }
  func.func @transform_6(%arg0: i32, %arg1: i32, %arg2: memref<2xi32, #tpu.memory_space<smem>>, %arg3: memref<2xi32, #tpu.memory_space<smem>>) -> (i32, i32, i32) {
    %c0_i32 = arith.constant 0 : i32
    %c0_i32_0 = arith.constant 0 : i32
    %c0_i32_1 = arith.constant 0 : i32
    return %arg1, %c0_i32, %c0_i32_0 : i32, i32, i32
  }
  func.func @transform_7(%arg0: i32, %arg1: i32, %arg2: memref<2xi32, #tpu.memory_space<smem>>, %arg3: memref<2xi32, #tpu.memory_space<smem>>) -> (i32, i32, i32) {
    %c0_i32 = arith.constant 0 : i32
    %c0_i32_0 = arith.constant 0 : i32
    %c0_i32_1 = arith.constant 0 : i32
    return %arg1, %c0_i32, %c0_i32_0 : i32, i32, i32
  }
  func.func @transform_8(%arg0: i32, %arg1: i32, %arg2: memref<2xi32, #tpu.memory_space<smem>>, %arg3: memref<2xi32, #tpu.memory_space<smem>>) -> (i32, i32, i32) {
    %c0_i32 = arith.constant 0 : i32
    %c0_i32_0 = arith.constant 0 : i32
    %c0_i32_1 = arith.constant 0 : i32
    return %arg1, %c0_i32, %c0_i32_0 : i32, i32, i32
  }
  func.func @transform_9(%arg0: i32, %arg1: i32, %arg2: memref<2xi32, #tpu.memory_space<smem>>, %arg3: memref<2xi32, #tpu.memory_space<smem>>) -> (i32, i32, i32) {
    %c0_i32 = arith.constant 0 : i32
    %c0_i32_0 = arith.constant 0 : i32
    %c0_i32_1 = arith.constant 0 : i32
    return %arg1, %c0_i32, %c0_i32_0 : i32, i32, i32
  }
  func.func @transform_10(%arg0: i32, %arg1: i32, %arg2: memref<2xi32, #tpu.memory_space<smem>>, %arg3: memref<2xi32, #tpu.memory_space<smem>>) -> (i32, i32, i32) {
    %c0_i32 = arith.constant 0 : i32
    %c0_i32_0 = arith.constant 0 : i32
    %c0_i32_1 = arith.constant 0 : i32
    return %arg1, %c0_i32, %c0_i32_0 : i32, i32, i32
  }
  func.func @transform_11(%arg0: i32, %arg1: i32, %arg2: memref<2xi32, #tpu.memory_space<smem>>, %arg3: memref<2xi32, #tpu.memory_space<smem>>) -> (i32, i32, i32) {
    %c0_i32 = arith.constant 0 : i32
    %c0_i32_0 = arith.constant 0 : i32
    %c0_i32_1 = arith.constant 0 : i32
    return %arg1, %c0_i32, %c0_i32_0 : i32, i32, i32
  }
  func.func @transform_12(%arg0: i32, %arg1: i32, %arg2: memref<2xi32, #tpu.memory_space<smem>>, %arg3: memref<2xi32, #tpu.memory_space<smem>>) -> (i32, i32, i32) {
    %c0_i32 = arith.constant 0 : i32
    %c0_i32_0 = arith.constant 0 : i32
    %c0_i32_1 = arith.constant 0 : i32
    return %arg1, %c0_i32, %c0_i32_0 : i32, i32, i32
  }
  func.func @transform_13(%arg0: i32, %arg1: i32, %arg2: memref<2xi32, #tpu.memory_space<smem>>, %arg3: memref<2xi32, #tpu.memory_space<smem>>) -> (i32, i32, i32) {
    %c0_i32 = arith.constant 0 : i32
    %c0_i32_0 = arith.constant 0 : i32
    %c0_i32_1 = arith.constant 0 : i32
    return %arg1, %c0_i32, %c0_i32_0 : i32, i32, i32
  }
  func.func @transform_14(%arg0: i32, %arg1: i32, %arg2: memref<2xi32, #tpu.memory_space<smem>>, %arg3: memref<2xi32, #tpu.memory_space<smem>>) -> (i32, i32, i32) {
    %c0_i32 = arith.constant 0 : i32
    %c0_i32_0 = arith.constant 0 : i32
    %c0_i32_1 = arith.constant 0 : i32
    return %arg1, %c0_i32, %c0_i32_0 : i32, i32, i32
  }
  func.func @transform_15(%arg0: i32, %arg1: i32, %arg2: memref<2xi32, #tpu.memory_space<smem>>, %arg3: memref<2xi32, #tpu.memory_space<smem>>) -> (i32, i32, i32) {
    %c0_i32 = arith.constant 0 : i32
    %c0_i32_0 = arith.constant 0 : i32
    %c0_i32_1 = arith.constant 0 : i32
    return %arg0, %c0_i32, %c0_i32_0 : i32, i32, i32
  }
}

</mosaic_0001>

<llo_original>
// kernel: _lambda_.4
$region0: #{_lambda_.4}
  #allocation0 [shape = 'u32[]', space=smem, size = 0x4, offset = 0x4, fixed_abs, tag = 'smem constant byte address 0x4 - core index']
  #allocation1 [shape = 'u32[144,128]{1,0:T(1,128)}', space=vmem, size = 0x12000, scoped, tag = 'internal scratch']
  #allocation2 [shape = 'f32[1,8,48]{2,1,0:T(8,128)}', space=vmem, size = 0x1000, scoped, tag = 'scratch operand']
  #allocation3 [shape = 's32[1]{0}', space=sflag, size = 0x4, scoped, tag = 'scoped memory for _lambda_.4']
  #allocation4 [shape = 'u8[512]{0}', space=smem, size = 0x200, scoped, tag = 'prefetched SMEM operand 0']
  #allocation5 [shape = 'u8[512]{0}', space=smem, size = 0x200, scoped, tag = 'prefetched SMEM operand 1']
  %s0 = inlined_call_operand.vmem [shape: s32[2], index: 0, kind: input, shape index: {}]
  %s1 = inlined_call_operand.vmem [shape: s32[2], index: 1, kind: input, shape index: {}]
  %s2 = inlined_call_operand.vmem [shape: f32[2,8,48], index: 2, kind: input, shape index: {}]
  %s3 = inlined_call_operand.vmem [shape: f32[48,48], index: 3, kind: input, shape index: {}]
  %s4 = inlined_call_operand.vmem [shape: f32[48,48], index: 4, kind: input, shape index: {}]
  %s5 = inlined_call_operand.vmem [shape: f32[2,1,24], index: 5, kind: input, shape index: {}, may-alias: {5,7}]
  %s6 = inlined_call_operand.vmem [shape: f32[2,1,24], index: 6, kind: input, shape index: {}, may-alias: {6,8}]
  %s7 = inlined_call_operand.vmem [shape: f32[2,1,24], index: 7, kind: input, shape index: {}, may-alias: {5,7}]
  %s8 = inlined_call_operand.vmem [shape: f32[2,1,24], index: 8, kind: input, shape index: {}, may-alias: {6,8}]
  %s9 = inlined_call_operand.vmem [shape: bf16[2,8,16], index: 9, kind: input, shape index: {}]
  %s10 = inlined_call_operand.vmem [shape: f32[2,1,16], index: 10, kind: input, shape index: {}]
  %s11 = inlined_call_operand.vmem [shape: bf16[2,16,8], index: 11, kind: input, shape index: {}]
  %s12 = inlined_call_operand.vmem [shape: f32[2,1,8], index: 12, kind: input, shape index: {}]
  %s13 = inlined_call_operand.vmem [shape: bf16[2,24,32], index: 13, kind: input, shape index: {}]
  %s14 = inlined_call_operand.vmem [shape: f32[2,1,32], index: 14, kind: input, shape index: {}]
  %s15 = inlined_call_operand.vmem [shape: bf16[2,32,24], index: 15, kind: input, shape index: {}]
  %s16 = inlined_call_operand.vmem [shape: f32[2,1,24], index: 16, kind: input, shape index: {}]
  %s17 = inlined_call_operand.vmem [shape: f32[2,8,48], index: 17, kind: output, shape index: {}]
  %s18 = sld [smem:[#allocation0]]
  $region113: #{_lambda_.4} parent=0
    _
  %s20 = ssub.s32 1, %s18
  %s21 = scalar_select 0, %s20, %s18
  %s22 = sshll.u32 %s0, 4
  %s23 = int_to_ptr.vmem [resolvable:$true] %s22
  %25 = dma.vmem_to_smem %s23, 16, [#allocation4], [#allocation3]
  %s26 = sshll.u32 %s1, 4
  %s27 = int_to_ptr.vmem [resolvable:$true] %s26
  %29 = dma.vmem_to_smem %s27, 16, [#allocation5], [#allocation3]
  %30 = dma.done [#allocation3], 32
  %31 = sfence
  loop: start=0, step=1, limit=6
  $region2: #{_lambda_.4} parent=0 // loop_pre_header
    _
  $region3: #{_lambda_.4} parent=0 // loop_header
    %s33 = sphi 0, %s37
    %p34 = scmp.ge.s32.totalorder %s33, 6
    %s40 = sphi 0, %s52
    %s41 = sphi 0, %s48
    %s42 = sphi 0, %s40
    %s43 = sphi 0, %s41
    %s44 = sphi 0, %s42
    %s45 = sphi 0, %s43
    %s55 = sphi 0, %s57
    %s58 = sphi 0, %s55
    %s59 = sphi 0, %s58
    %s75 = sphi 0, %s59
    %s79 = sphi 0, %s79
    %s81 = sphi 0, %s79
    %s82 = sphi 0, %s81
    %s96 = sphi 0, %s82
    %s100 = sphi 0, %s100
    %s102 = sphi 0, %s100
    %s103 = sphi 0, %s102
    %s117 = sphi 0, %s103
    %s123 = sphi 0, %s125
    %s126 = sphi 0, %s123
    %s127 = sphi 0, %s126
    %s143 = sphi 0, %s127
    %s149 = sphi 0, %s151
    %s152 = sphi 0, %s149
    %s153 = sphi 0, %s152
    %s169 = sphi 0, %s153
    %s175 = sphi 0, %s177
    %s178 = sphi 0, %s175
    %s179 = sphi 0, %s178
    %s195 = sphi 0, %s179
    %s201 = sphi 0, %s203
    %s204 = sphi 0, %s201
    %s205 = sphi 0, %s204
    %s221 = sphi 0, %s205
    %s227 = sphi 0, %s229
    %s230 = sphi 0, %s227
    %s231 = sphi 0, %s230
    %s247 = sphi 0, %s231
    %s253 = sphi 0, %s255
    %s256 = sphi 0, %s253
    %s257 = sphi 0, %s256
    %s273 = sphi 0, %s257
    %s279 = sphi 0, %s281
    %s282 = sphi 0, %s279
    %s283 = sphi 0, %s282
    %s299 = sphi 0, %s283
    %s305 = sphi 0, %s307
    %s308 = sphi 0, %s305
    %s309 = sphi 0, %s308
    %s325 = sphi 0, %s309
    %s331 = sphi 0, %s333
    %s334 = sphi 0, %s331
    %s335 = sphi 0, %s334
    %s351 = sphi 0, %s335
    %s357 = sphi 0, %s359
    %s360 = sphi 0, %s357
    %s361 = sphi 0, %s360
    %s377 = sphi 0, %s361
    %s383 = sphi 0, %s385
    %s386 = sphi 0, %s383
    %s387 = sphi 0, %s386
    %s403 = sphi 0, %s387
    %s409 = sphi 0, %s411
    %s412 = sphi 0, %s409
    %s413 = sphi 0, %s412
    %s429 = sphi 0, %s413
    %s435 = sphi 0, %s437
    %s438 = sphi 0, %s435
    %s439 = sphi 0, %s438
    %s455 = sphi 0, %s439
  $region4: #{_lambda_.4} parent=0 // loop_header_branch
    %36 = sbr.rel (%p34) target = $region8
  $region5: #{_lambda_.4} parent=0 // loop_body
    %s38 = ssub.s32 %s33, 1
    %s39 = ssub.s32 %s33, 2
    %s46 = sadd.s32 1, %s41
    %p47 = scmp.ge.s32.totalorder %s46, 2
    %s48 = scalar_select %p47, 0, %s46
    %s49 = sadd.s32 1, %s40
    %s50 = scalar_select %p47, %s49, %s40
    %p51 = scmp.ge.s32.totalorder %s50, 2
    %s52 = scalar_select %p51, 0, %s50
    %s53 = ssub.s32 %s40, %s52
    %p54 = scmp.eq.s32.totalorder %s53, 0
    %s56 = sadd.s32 %s55, 1
    %s57 = scalar_select %p54, %s55, %s56
    %p60 = pneg %p54
    %p61 = scmp.eq.s32.totalorder %s33, 3
    %p62 = por %p60, %p61
    %p63 = scmp.ne.s32.totalorder %s55, %s58
    %p64 = scmp.eq.s32.totalorder %s33, 0
    %p65 = por %p63, %p64
    %p66 = scmp.ne.s32.totalorder %s55, %s58
    %p67 = scmp.eq.s32.totalorder %s38, 3
    %p68 = por %p66, %p67
    %p69 = scmp.ne.s32.totalorder %s58, %s59
    %p70 = scmp.eq.s32.totalorder %s38, 0
    %p71 = por %p69, %p70
    %p72 = scmp.ne.s32.totalorder %s58, %s59
    %p73 = scmp.eq.s32.totalorder %s39, 3
    %p74 = por %p72, %p73
    %p76 = scmp.ne.s32.totalorder %s59, %s75
    %p77 = scmp.eq.s32.totalorder %s39, 0
    %p78 = por %p76, %p77
    %s80 = sadd.s32 %s79, 1
    %p83 = scmp.eq.s32.totalorder %s33, 3
    %p84 = scmp.ne.s32.totalorder %s79, %s81
    %p85 = scmp.eq.s32.totalorder %s33, 0
    %p86 = por %p84, %p85
    %p87 = scmp.ne.s32.totalorder %s79, %s81
    %p88 = scmp.eq.s32.totalorder %s38, 3
    %p89 = por %p87, %p88
    %p90 = scmp.ne.s32.totalorder %s81, %s82
    %p91 = scmp.eq.s32.totalorder %s38, 0
    %p92 = por %p90, %p91
    %p93 = scmp.ne.s32.totalorder %s81, %s82
    %p94 = scmp.eq.s32.totalorder %s39, 3
    %p95 = por %p93, %p94
    %p97 = scmp.ne.s32.totalorder %s82, %s96
    %p98 = scmp.eq.s32.totalorder %s39, 0
    %p99 = por %p97, %p98
    %s101 = sadd.s32 %s100, 1
    %p104 = scmp.eq.s32.totalorder %s33, 3
    %p105 = scmp.ne.s32.totalorder %s100, %s102
    %p106 = scmp.eq.s32.totalorder %s33, 0
    %p107 = por %p105, %p106
    %p108 = scmp.ne.s32.totalorder %s100, %s102
    %p109 = scmp.eq.s32.totalorder %s38, 3
    %p110 = por %p108, %p109
    %p111 = scmp.ne.s32.totalorder %s102, %s103
    %p112 = scmp.eq.s32.totalorder %s38, 0
    %p113 = por %p111, %p112
    %p114 = scmp.ne.s32.totalorder %s102, %s103
    %p115 = scmp.eq.s32.totalorder %s39, 3
    %p116 = por %p114, %p115
    %p118 = scmp.ne.s32.totalorder %s103, %s117
    %p119 = scmp.eq.s32.totalorder %s39, 0
    %p120 = por %p118, %p119
    %s121 = ssub.s32 %s41, %s48
    %p122 = scmp.eq.s32.totalorder %s121, 0
    %s124 = sadd.s32 %s123, 1
    %s125 = scalar_select %p122, %s123, %s124
    %p128 = pneg %p122
    %p129 = scmp.eq.s32.totalorder %s33, 3
    %p130 = por %p128, %p129
    %p131 = scmp.ne.s32.totalorder %s123, %s126
    %p132 = scmp.eq.s32.totalorder %s33, 0
    %p133 = por %p131, %p132
    %p134 = scmp.ne.s32.totalorder %s123, %s126
    %p135 = scmp.eq.s32.totalorder %s38, 3
    %p136 = por %p134, %p135
    %p137 = scmp.ne.s32.totalorder %s126, %s127
    %p138 = scmp.eq.s32.totalorder %s38, 0
    %p139 = por %p137, %p138
    %p140 = scmp.ne.s32.totalorder %s126, %s127
    %p141 = scmp.eq.s32.totalorder %s39, 3
    %p142 = por %p140, %p141
    %p144 = scmp.ne.s32.totalorder %s127, %s143
    %p145 = scmp.eq.s32.totalorder %s39, 0
    %p146 = por %p144, %p145
    %s147 = ssub.s32 %s41, %s48
    %p148 = scmp.eq.s32.totalorder %s147, 0
    %s150 = sadd.s32 %s149, 1
    %s151 = scalar_select %p148, %s149, %s150
    %p154 = pneg %p148
    %p155 = scmp.eq.s32.totalorder %s33, 3
    %p156 = por %p154, %p155
    %p157 = scmp.ne.s32.totalorder %s149, %s152
    %p158 = scmp.eq.s32.totalorder %s33, 0
    %p159 = por %p157, %p158
    %p160 = scmp.ne.s32.totalorder %s149, %s152
    %p161 = scmp.eq.s32.totalorder %s38, 3
    %p162 = por %p160, %p161
    %p163 = scmp.ne.s32.totalorder %s152, %s153
    %p164 = scmp.eq.s32.totalorder %s38, 0
    %p165 = por %p163, %p164
    %p166 = scmp.ne.s32.totalorder %s152, %s153
    %p167 = scmp.eq.s32.totalorder %s39, 3
    %p168 = por %p166, %p167
    %p170 = scmp.ne.s32.totalorder %s153, %s169
    %p171 = scmp.eq.s32.totalorder %s39, 0
    %p172 = por %p170, %p171
    %s173 = ssub.s32 %s41, %s48
    %p174 = scmp.eq.s32.totalorder %s173, 0
    %s176 = sadd.s32 %s175, 1
    %s177 = scalar_select %p174, %s175, %s176
    %p180 = pneg %p174
    %p181 = scmp.eq.s32.totalorder %s33, 3
    %p182 = por %p180, %p181
    %p183 = scmp.ne.s32.totalorder %s175, %s178
    %p184 = scmp.eq.s32.totalorder %s33, 0
    %p185 = por %p183, %p184
    %p186 = scmp.ne.s32.totalorder %s175, %s178
    %p187 = scmp.eq.s32.totalorder %s38, 3
    %p188 = por %p186, %p187
    %p189 = scmp.ne.s32.totalorder %s178, %s179
    %p190 = scmp.eq.s32.totalorder %s38, 0
    %p191 = por %p189, %p190
    %p192 = scmp.ne.s32.totalorder %s178, %s179
    %p193 = scmp.eq.s32.totalorder %s39, 3
    %p194 = por %p192, %p193
    %p196 = scmp.ne.s32.totalorder %s179, %s195
    %p197 = scmp.eq.s32.totalorder %s39, 0
    %p198 = por %p196, %p197
    %s199 = ssub.s32 %s41, %s48
    %p200 = scmp.eq.s32.totalorder %s199, 0
    %s202 = sadd.s32 %s201, 1
    %s203 = scalar_select %p200, %s201, %s202
    %p206 = pneg %p200
    %p207 = scmp.eq.s32.totalorder %s33, 3
    %p208 = por %p206, %p207
    %p209 = scmp.ne.s32.totalorder %s201, %s204
    %p210 = scmp.eq.s32.totalorder %s33, 0
    %p211 = por %p209, %p210
    %p212 = scmp.ne.s32.totalorder %s201, %s204
    %p213 = scmp.eq.s32.totalorder %s38, 3
    %p214 = por %p212, %p213
    %p215 = scmp.ne.s32.totalorder %s204, %s205
    %p216 = scmp.eq.s32.totalorder %s38, 0
    %p217 = por %p215, %p216
    %p218 = scmp.ne.s32.totalorder %s204, %s205
    %p219 = scmp.eq.s32.totalorder %s39, 3
    %p220 = por %p218, %p219
    %p222 = scmp.ne.s32.totalorder %s205, %s221
    %p223 = scmp.eq.s32.totalorder %s39, 0
    %p224 = por %p222, %p223
    %s225 = ssub.s32 %s41, %s48
    %p226 = scmp.eq.s32.totalorder %s225, 0
    %s228 = sadd.s32 %s227, 1
    %s229 = scalar_select %p226, %s227, %s228
    %p232 = pneg %p226
    %p233 = scmp.eq.s32.totalorder %s33, 3
    %p234 = por %p232, %p233
    %p235 = scmp.ne.s32.totalorder %s227, %s230
    %p236 = scmp.eq.s32.totalorder %s33, 0
    %p237 = por %p235, %p236
    %p238 = scmp.ne.s32.totalorder %s227, %s230
    %p239 = scmp.eq.s32.totalorder %s38, 3
    %p240 = por %p238, %p239
    %p241 = scmp.ne.s32.totalorder %s230, %s231
    %p242 = scmp.eq.s32.totalorder %s38, 0
    %p243 = por %p241, %p242
    %p244 = scmp.ne.s32.totalorder %s230, %s231
    %p245 = scmp.eq.s32.totalorder %s39, 3
    %p246 = por %p244, %p245
    %p248 = scmp.ne.s32.totalorder %s231, %s247
    %p249 = scmp.eq.s32.totalorder %s39, 0
    %p250 = por %p248, %p249
    %s251 = ssub.s32 %s41, %s48
    %p252 = scmp.eq.s32.totalorder %s251, 0
    %s254 = sadd.s32 %s253, 1
    %s255 = scalar_select %p252, %s253, %s254
    %p258 = pneg %p252
    %p259 = scmp.eq.s32.totalorder %s33, 3
    %p260 = por %p258, %p259
    %p261 = scmp.ne.s32.totalorder %s253, %s256
    %p262 = scmp.eq.s32.totalorder %s33, 0
    %p263 = por %p261, %p262
    %p264 = scmp.ne.s32.totalorder %s253, %s256
    %p265 = scmp.eq.s32.totalorder %s38, 3
    %p266 = por %p264, %p265
    %p267 = scmp.ne.s32.totalorder %s256, %s257
    %p268 = scmp.eq.s32.totalorder %s38, 0
    %p269 = por %p267, %p268
    %p270 = scmp.ne.s32.totalorder %s256, %s257
    %p271 = scmp.eq.s32.totalorder %s39, 3
    %p272 = por %p270, %p271
    %p274 = scmp.ne.s32.totalorder %s257, %s273
    %p275 = scmp.eq.s32.totalorder %s39, 0
    %p276 = por %p274, %p275
    %s277 = ssub.s32 %s41, %s48
    %p278 = scmp.eq.s32.totalorder %s277, 0
    %s280 = sadd.s32 %s279, 1
    %s281 = scalar_select %p278, %s279, %s280
    %p284 = pneg %p278
    %p285 = scmp.eq.s32.totalorder %s33, 3
    %p286 = por %p284, %p285
    %p287 = scmp.ne.s32.totalorder %s279, %s282
    %p288 = scmp.eq.s32.totalorder %s33, 0
    %p289 = por %p287, %p288
    %p290 = scmp.ne.s32.totalorder %s279, %s282
    %p291 = scmp.eq.s32.totalorder %s38, 3
    %p292 = por %p290, %p291
    %p293 = scmp.ne.s32.totalorder %s282, %s283
    %p294 = scmp.eq.s32.totalorder %s38, 0
    %p295 = por %p293, %p294
    %p296 = scmp.ne.s32.totalorder %s282, %s283
    %p297 = scmp.eq.s32.totalorder %s39, 3
    %p298 = por %p296, %p297
    %p300 = scmp.ne.s32.totalorder %s283, %s299
    %p301 = scmp.eq.s32.totalorder %s39, 0
    %p302 = por %p300, %p301
    %s303 = ssub.s32 %s41, %s48
    %p304 = scmp.eq.s32.totalorder %s303, 0
    %s306 = sadd.s32 %s305, 1
    %s307 = scalar_select %p304, %s305, %s306
    %p310 = pneg %p304
    %p311 = scmp.eq.s32.totalorder %s33, 3
    %p312 = por %p310, %p311
    %p313 = scmp.ne.s32.totalorder %s305, %s308
    %p314 = scmp.eq.s32.totalorder %s33, 0
    %p315 = por %p313, %p314
    %p316 = scmp.ne.s32.totalorder %s305, %s308
    %p317 = scmp.eq.s32.totalorder %s38, 3
    %p318 = por %p316, %p317
    %p319 = scmp.ne.s32.totalorder %s308, %s309
    %p320 = scmp.eq.s32.totalorder %s38, 0
    %p321 = por %p319, %p320
    %p322 = scmp.ne.s32.totalorder %s308, %s309
    %p323 = scmp.eq.s32.totalorder %s39, 3
    %p324 = por %p322, %p323
    %p326 = scmp.ne.s32.totalorder %s309, %s325
    %p327 = scmp.eq.s32.totalorder %s39, 0
    %p328 = por %p326, %p327
    %s329 = ssub.s32 %s41, %s48
    %p330 = scmp.eq.s32.totalorder %s329, 0
    %s332 = sadd.s32 %s331, 1
    %s333 = scalar_select %p330, %s331, %s332
    %p336 = pneg %p330
    %p337 = scmp.eq.s32.totalorder %s33, 3
    %p338 = por %p336, %p337
    %p339 = scmp.ne.s32.totalorder %s331, %s334
    %p340 = scmp.eq.s32.totalorder %s33, 0
    %p341 = por %p339, %p340
    %p342 = scmp.ne.s32.totalorder %s331, %s334
    %p343 = scmp.eq.s32.totalorder %s38, 3
    %p344 = por %p342, %p343
    %p345 = scmp.ne.s32.totalorder %s334, %s335
    %p346 = scmp.eq.s32.totalorder %s38, 0
    %p347 = por %p345, %p346
    %p348 = scmp.ne.s32.totalorder %s334, %s335
    %p349 = scmp.eq.s32.totalorder %s39, 3
    %p350 = por %p348, %p349
    %p352 = scmp.ne.s32.totalorder %s335, %s351
    %p353 = scmp.eq.s32.totalorder %s39, 0
    %p354 = por %p352, %p353
    %s355 = ssub.s32 %s41, %s48
    %p356 = scmp.eq.s32.totalorder %s355, 0
    %s358 = sadd.s32 %s357, 1
    %s359 = scalar_select %p356, %s357, %s358
    %p362 = pneg %p356
    %p363 = scmp.eq.s32.totalorder %s33, 3
    %p364 = por %p362, %p363
    %p365 = scmp.ne.s32.totalorder %s357, %s360
    %p366 = scmp.eq.s32.totalorder %s33, 0
    %p367 = por %p365, %p366
    %p368 = scmp.ne.s32.totalorder %s357, %s360
    %p369 = scmp.eq.s32.totalorder %s38, 3
    %p370 = por %p368, %p369
    %p371 = scmp.ne.s32.totalorder %s360, %s361
    %p372 = scmp.eq.s32.totalorder %s38, 0
    %p373 = por %p371, %p372
    %p374 = scmp.ne.s32.totalorder %s360, %s361
    %p375 = scmp.eq.s32.totalorder %s39, 3
    %p376 = por %p374, %p375
    %p378 = scmp.ne.s32.totalorder %s361, %s377
    %p379 = scmp.eq.s32.totalorder %s39, 0
    %p380 = por %p378, %p379
    %s381 = ssub.s32 %s41, %s48
    %p382 = scmp.eq.s32.totalorder %s381, 0
    %s384 = sadd.s32 %s383, 1
    %s385 = scalar_select %p382, %s383, %s384
    %p388 = pneg %p382
    %p389 = scmp.eq.s32.totalorder %s33, 3
    %p390 = por %p388, %p389
    %p391 = scmp.ne.s32.totalorder %s383, %s386
    %p392 = scmp.eq.s32.totalorder %s33, 0
    %p393 = por %p391, %p392
    %p394 = scmp.ne.s32.totalorder %s383, %s386
    %p395 = scmp.eq.s32.totalorder %s38, 3
    %p396 = por %p394, %p395
    %p397 = scmp.ne.s32.totalorder %s386, %s387
    %p398 = scmp.eq.s32.totalorder %s38, 0
    %p399 = por %p397, %p398
    %p400 = scmp.ne.s32.totalorder %s386, %s387
    %p401 = scmp.eq.s32.totalorder %s39, 3
    %p402 = por %p400, %p401
    %p404 = scmp.ne.s32.totalorder %s387, %s403
    %p405 = scmp.eq.s32.totalorder %s39, 0
    %p406 = por %p404, %p405
    %s407 = ssub.s32 %s41, %s48
    %p408 = scmp.eq.s32.totalorder %s407, 0
    %s410 = sadd.s32 %s409, 1
    %s411 = scalar_select %p408, %s409, %s410
    %p414 = pneg %p408
    %p415 = scmp.eq.s32.totalorder %s33, 3
    %p416 = por %p414, %p415
    %p417 = scmp.ne.s32.totalorder %s409, %s412
    %p418 = scmp.eq.s32.totalorder %s33, 0
    %p419 = por %p417, %p418
    %p420 = scmp.ne.s32.totalorder %s409, %s412
    %p421 = scmp.eq.s32.totalorder %s38, 3
    %p422 = por %p420, %p421
    %p423 = scmp.ne.s32.totalorder %s412, %s413
    %p424 = scmp.eq.s32.totalorder %s38, 0
    %p425 = por %p423, %p424
    %p426 = scmp.ne.s32.totalorder %s412, %s413
    %p427 = scmp.eq.s32.totalorder %s39, 3
    %p428 = por %p426, %p427
    %p430 = scmp.ne.s32.totalorder %s413, %s429
    %p431 = scmp.eq.s32.totalorder %s39, 0
    %p432 = por %p430, %p431
    %s433 = ssub.s32 %s40, %s52
    %p434 = scmp.eq.s32.totalorder %s433, 0
    %s436 = sadd.s32 %s435, 1
    %s437 = scalar_select %p434, %s435, %s436
    %p440 = pneg %p434
    %p441 = scmp.eq.s32.totalorder %s33, 3
    %p442 = por %p440, %p441
    %p443 = scmp.ne.s32.totalorder %s435, %s438
    %p444 = scmp.eq.s32.totalorder %s33, 0
    %p445 = por %p443, %p444
    %p446 = scmp.ne.s32.totalorder %s435, %s438
    %p447 = scmp.eq.s32.totalorder %s38, 3
    %p448 = por %p446, %p447
    %p449 = scmp.ne.s32.totalorder %s438, %s439
    %p450 = scmp.eq.s32.totalorder %s38, 0
    %p451 = por %p449, %p450
    %p452 = scmp.ne.s32.totalorder %s438, %s439
    %p453 = scmp.eq.s32.totalorder %s39, 3
    %p454 = por %p452, %p453
    %p456 = scmp.ne.s32.totalorder %s439, %s455
    %p457 = scmp.eq.s32.totalorder %s39, 0
    %p458 = por %p456, %p457
    %p459 = scmp.le.s32.totalorder 1, %s33
    %p460 = scmp.lt.s32.totalorder %s33, 5
    %p461 = pnand %p459, %p460
    %p462 = pneg %p461
    // Predicated region
    $region9: #{_lambda_.4} parent=5 // pred_check
      _
    $region10: #{_lambda_.4} parent=5 // pred_check_branch
      %464 = sbr.rel (%p461) target = $region12
    $region11: #{_lambda_.4} parent=5 // pred_region
      %s465 = ssub.s32 %s33, 1
      // Predicated region
      $region13: #{_lambda_.4} parent=11 // pred_check
        %p466 = pneg %p92
      $region14: #{_lambda_.4} parent=11 // pred_check_branch
        %468 = sbr.rel (%p466) target = $region16
      $region15: #{_lambda_.4} parent=11 // pred_region
        _
      $region16: #{_lambda_.4} parent=11 // pred_fallthru
        _
      // Predicated region
      $region17: #{_lambda_.4} parent=11 // pred_check
        %p469 = pneg %p113
      $region18: #{_lambda_.4} parent=11 // pred_check_branch
        %471 = sbr.rel (%p469) target = $region20
      $region19: #{_lambda_.4} parent=11 // pred_region
        _
      $region20: #{_lambda_.4} parent=11 // pred_fallthru
        _
    $region12: #{_lambda_.4} parent=5 // pred_fallthru
      _
    %p472 = scmp.lt.s32.totalorder %s33, 4
    // Predicated region
    $region21: #{_lambda_.4} parent=5 // pred_check
      %p473 = pneg %p472
    $region22: #{_lambda_.4} parent=5 // pred_check_branch
      %475 = sbr.rel (%p473) target = $region24
    $region23: #{_lambda_.4} parent=5 // pred_region
      // Predicated region
      $region25: #{_lambda_.4} parent=23 // pred_check
        %p476 = pneg %p65
      $region26: #{_lambda_.4} parent=23 // pred_check_branch
        %478 = sbr.rel (%p476) target = $region28
      $region27: #{_lambda_.4} parent=23 // pred_region
        %p479 = scmp.lt.s32.totalorder %s40, 1
        %s480 = scalar_select %p479, %s40, 1
        %s481 = smul.addr %s480, 8
        %s482 = scalar_lea.vmem %s2, %s481
      $region28: #{_lambda_.4} parent=23 // pred_fallthru
        _
      // Predicated region
      $region29: #{_lambda_.4} parent=23 // pred_check
        %p483 = pneg %p133
      $region30: #{_lambda_.4} parent=23 // pred_check_branch
        %485 = sbr.rel (%p483) target = $region32
      $region31: #{_lambda_.4} parent=23 // pred_region
        %p486 = scmp.lt.s32.totalorder %s41, 1
        %s487 = scalar_select %p486, %s41, 1
        %s488 = scalar_lea.vmem %s5, %s487
      $region32: #{_lambda_.4} parent=23 // pred_fallthru
        _
      // Predicated region
      $region33: #{_lambda_.4} parent=23 // pred_check
        %p489 = pneg %p159
      $region34: #{_lambda_.4} parent=23 // pred_check_branch
        %491 = sbr.rel (%p489) target = $region36
      $region35: #{_lambda_.4} parent=23 // pred_region
        %p492 = scmp.lt.s32.totalorder %s41, 1
        %s493 = scalar_select %p492, %s41, 1
        %s494 = scalar_lea.vmem %s6, %s493
      $region36: #{_lambda_.4} parent=23 // pred_fallthru
        _
      // Predicated region
      $region37: #{_lambda_.4} parent=23 // pred_check
        %p495 = pneg %p185
      $region38: #{_lambda_.4} parent=23 // pred_check_branch
        %497 = sbr.rel (%p495) target = $region40
      $region39: #{_lambda_.4} parent=23 // pred_region
        %p498 = scmp.lt.s32.totalorder %s41, 1
        %s499 = scalar_select %p498, %s41, 1
        %s500 = scalar_lea.vmem %s7, %s499
      $region40: #{_lambda_.4} parent=23 // pred_fallthru
        _
      // Predicated region
      $region41: #{_lambda_.4} parent=23 // pred_check
        %p501 = pneg %p211
      $region42: #{_lambda_.4} parent=23 // pred_check_branch
        %503 = sbr.rel (%p501) target = $region44
      $region43: #{_lambda_.4} parent=23 // pred_region
        %p504 = scmp.lt.s32.totalorder %s41, 1
        %s505 = scalar_select %p504, %s41, 1
        %s506 = scalar_lea.vmem %s8, %s505
      $region44: #{_lambda_.4} parent=23 // pred_fallthru
        _
      // Predicated region
      $region45: #{_lambda_.4} parent=23 // pred_check
        %p507 = pneg %p237
      $region46: #{_lambda_.4} parent=23 // pred_check_branch
        %509 = sbr.rel (%p507) target = $region48
      $region47: #{_lambda_.4} parent=23 // pred_region
        %p510 = scmp.lt.s32.totalorder %s41, 1
        %s511 = scalar_select %p510, %s41, 1
        %s512 = smul.addr %s511, 4
        %s513 = scalar_lea.vmem %s9, %s512
      $region48: #{_lambda_.4} parent=23 // pred_fallthru
        _
      // Predicated region
      $region49: #{_lambda_.4} parent=23 // pred_check
        %p514 = pneg %p263
      $region50: #{_lambda_.4} parent=23 // pred_check_branch
        %516 = sbr.rel (%p514) target = $region52
      $region51: #{_lambda_.4} parent=23 // pred_region
        %p517 = scmp.lt.s32.totalorder %s41, 1
        %s518 = scalar_select %p517, %s41, 1
        %s519 = scalar_lea.vmem %s10, %s518
      $region52: #{_lambda_.4} parent=23 // pred_fallthru
        _
      // Predicated region
      $region53: #{_lambda_.4} parent=23 // pred_check
        %p520 = pneg %p289
      $region54: #{_lambda_.4} parent=23 // pred_check_branch
        %522 = sbr.rel (%p520) target = $region56
      $region55: #{_lambda_.4} parent=23 // pred_region
        %p523 = scmp.lt.s32.totalorder %s41, 1
        %s524 = scalar_select %p523, %s41, 1
        %s525 = smul.addr %s524, 2
        %s526 = smul.addr %s525, 4
        %s527 = scalar_lea.vmem %s11, %s526
      $region56: #{_lambda_.4} parent=23 // pred_fallthru
        _
      // Predicated region
      $region57: #{_lambda_.4} parent=23 // pred_check
        %p528 = pneg %p315
      $region58: #{_lambda_.4} parent=23 // pred_check_branch
        %530 = sbr.rel (%p528) target = $region60
      $region59: #{_lambda_.4} parent=23 // pred_region
        %p531 = scmp.lt.s32.totalorder %s41, 1
        %s532 = scalar_select %p531, %s41, 1
        %s533 = scalar_lea.vmem %s12, %s532
      $region60: #{_lambda_.4} parent=23 // pred_fallthru
        _
      // Predicated region
      $region61: #{_lambda_.4} parent=23 // pred_check
        %p534 = pneg %p341
      $region62: #{_lambda_.4} parent=23 // pred_check_branch
        %536 = sbr.rel (%p534) target = $region64
      $region63: #{_lambda_.4} parent=23 // pred_region
        %p537 = scmp.lt.s32.totalorder %s41, 1
        %s538 = scalar_select %p537, %s41, 1
        %s539 = smul.addr %s538, 3
        %s540 = smul.addr %s539, 4
        %s541 = scalar_lea.vmem %s13, %s540
      $region64: #{_lambda_.4} parent=23 // pred_fallthru
        _
      // Predicated region
      $region65: #{_lambda_.4} parent=23 // pred_check
        %p542 = pneg %p367
      $region66: #{_lambda_.4} parent=23 // pred_check_branch
        %544 = sbr.rel (%p542) target = $region68
      $region67: #{_lambda_.4} parent=23 // pred_region
        %p545 = scmp.lt.s32.totalorder %s41, 1
        %s546 = scalar_select %p545, %s41, 1
        %s547 = scalar_lea.vmem %s14, %s546
      $region68: #{_lambda_.4} parent=23 // pred_fallthru
        _
      // Predicated region
      $region69: #{_lambda_.4} parent=23 // pred_check
        %p548 = pneg %p393
      $region70: #{_lambda_.4} parent=23 // pred_check_branch
        %550 = sbr.rel (%p548) target = $region72
      $region71: #{_lambda_.4} parent=23 // pred_region
        %p551 = scmp.lt.s32.totalorder %s41, 1
        %s552 = scalar_select %p551, %s41, 1
        %s553 = smul.addr %s552, 4
        %s554 = smul.addr %s553, 4
        %s555 = scalar_lea.vmem %s15, %s554
      $region72: #{_lambda_.4} parent=23 // pred_fallthru
        _
      // Predicated region
      $region73: #{_lambda_.4} parent=23 // pred_check
        %p556 = pneg %p419
      $region74: #{_lambda_.4} parent=23 // pred_check_branch
        %558 = sbr.rel (%p556) target = $region76
      $region75: #{_lambda_.4} parent=23 // pred_region
        %p559 = scmp.lt.s32.totalorder %s41, 1
        %s560 = scalar_select %p559, %s41, 1
        %s561 = scalar_lea.vmem %s16, %s560
      $region76: #{_lambda_.4} parent=23 // pred_fallthru
        _
    $region24: #{_lambda_.4} parent=5 // pred_fallthru
      _
    %p562 = scmp.le.s32.totalorder 1, %s33
    %p563 = scmp.lt.s32.totalorder %s33, 5
    %p564 = pnand %p562, %p563
    %p565 = pneg %p564
    // Predicated region
    $region77: #{_lambda_.4} parent=5 // pred_check
      _
    $region78: #{_lambda_.4} parent=5 // pred_check_branch
      %567 = sbr.rel (%p564) target = $region80
    $region79: #{_lambda_.4} parent=5 // pred_region
      %s568 = ssub.s32 %s33, 1
      %p569 = scmp.lt.s32.totalorder %s42, 1
      %s570 = scalar_select %p569, %s42, 1
      %s571 = smul.addr %s570, 8
      %s572 = scalar_lea.vmem %s2, %s571
      %p573 = pneg %p71
      %p574 = pneg %p68
      %p575 = pneg %p92
      %p576 = pneg %p89
      %p577 = pneg %p113
      %p578 = pneg %p110
      %p579 = scmp.lt.s32.totalorder %s43, 1
      %s580 = scalar_select %p579, %s43, 1
      %s581 = scalar_lea.vmem %s5, %s580
      %p582 = pneg %p139
      %p583 = pneg %p136
      %p584 = scmp.lt.s32.totalorder %s43, 1
      %s585 = scalar_select %p584, %s43, 1
      %s586 = scalar_lea.vmem %s6, %s585
      %p587 = pneg %p165
      %p588 = pneg %p162
      %p589 = scmp.lt.s32.totalorder %s43, 1
      %s590 = scalar_select %p589, %s43, 1
      %s591 = scalar_lea.vmem %s7, %s590
      %p592 = pneg %p191
      %p593 = pneg %p188
      %p594 = scmp.lt.s32.totalorder %s43, 1
      %s595 = scalar_select %p594, %s43, 1
      %s596 = scalar_lea.vmem %s8, %s595
      %p597 = pneg %p217
      %p598 = pneg %p214
      %p599 = scmp.lt.s32.totalorder %s43, 1
      %s600 = scalar_select %p599, %s43, 1
      %s601 = smul.addr %s600, 4
      %s602 = scalar_lea.vmem %s9, %s601
      %p603 = pneg %p243
      %p604 = pneg %p240
      %p605 = scmp.lt.s32.totalorder %s43, 1
      %s606 = scalar_select %p605, %s43, 1
      %s607 = scalar_lea.vmem %s10, %s606
      %p608 = pneg %p269
      %p609 = pneg %p266
      %p610 = scmp.lt.s32.totalorder %s43, 1
      %s611 = scalar_select %p610, %s43, 1
      %s612 = smul.addr %s611, 2
      %s613 = smul.addr %s612, 4
      %s614 = scalar_lea.vmem %s11, %s613
      %p615 = pneg %p295
      %p616 = pneg %p292
      %p617 = scmp.lt.s32.totalorder %s43, 1
      %s618 = scalar_select %p617, %s43, 1
      %s619 = scalar_lea.vmem %s12, %s618
      %p620 = pneg %p321
      %p621 = pneg %p318
      %p622 = scmp.lt.s32.totalorder %s43, 1
      %s623 = scalar_select %p622, %s43, 1
      %s624 = smul.addr %s623, 3
      %s625 = smul.addr %s624, 4
      %s626 = scalar_lea.vmem %s13, %s625
      %p627 = pneg %p347
      %p628 = pneg %p344
      %p629 = scmp.lt.s32.totalorder %s43, 1
      %s630 = scalar_select %p629, %s43, 1
      %s631 = scalar_lea.vmem %s14, %s630
      %p632 = pneg %p373
      %p633 = pneg %p370
      %p634 = scmp.lt.s32.totalorder %s43, 1
      %s635 = scalar_select %p634, %s43, 1
      %s636 = smul.addr %s635, 4
      %s637 = smul.addr %s636, 4
      %s638 = scalar_lea.vmem %s15, %s637
      %p639 = pneg %p399
      %p640 = pneg %p396
      %p641 = scmp.lt.s32.totalorder %s43, 1
      %s642 = scalar_select %p641, %s43, 1
      %s643 = scalar_lea.vmem %s16, %s642
      %p644 = pneg %p425
      %p645 = pneg %p422
      %p646 = pneg %p451
      %p647 = pneg %p448
      %p648 = scmp.lt.s32.totalorder %s42, 1
      %s649 = scalar_select %p648, %s42, 1
      %s650 = smul.addr %s649, 8
      %s651 = scalar_lea.vmem %s17, %s650
      %p652 = scmp.lt.s32.totalorder %s42, 1
      %s653 = scalar_select %p652, %s42, 1
      %s654 = smul.addr %s653, 8
      %s655 = scalar_lea.vmem %s2, %s654
      %p656 = scmp.lt.s32.totalorder %s43, 1
      %s657 = scalar_select %p656, %s43, 1
      %s658 = scalar_lea.vmem %s5, %s657
      %p659 = scmp.lt.s32.totalorder %s43, 1
      %s660 = scalar_select %p659, %s43, 1
      %s661 = scalar_lea.vmem %s6, %s660
      %p662 = scmp.lt.s32.totalorder %s43, 1
      %s663 = scalar_select %p662, %s43, 1
      %s664 = scalar_lea.vmem %s7, %s663
      %p665 = scmp.lt.s32.totalorder %s43, 1
      %s666 = scalar_select %p665, %s43, 1
      %s667 = scalar_lea.vmem %s8, %s666
      %p668 = scmp.lt.s32.totalorder %s43, 1
      %s669 = scalar_select %p668, %s43, 1
      %s670 = smul.addr %s669, 4
      %s671 = scalar_lea.vmem %s9, %s670
      %p672 = scmp.lt.s32.totalorder %s43, 1
      %s673 = scalar_select %p672, %s43, 1
      %s674 = scalar_lea.vmem %s10, %s673
      %p675 = scmp.lt.s32.totalorder %s43, 1
      %s676 = scalar_select %p675, %s43, 1
      %s677 = smul.addr %s676, 2
      %s678 = smul.addr %s677, 4
      %s679 = scalar_lea.vmem %s11, %s678
      %p680 = scmp.lt.s32.totalorder %s43, 1
      %s681 = scalar_select %p680, %s43, 1
      %s682 = scalar_lea.vmem %s12, %s681
      %p683 = scmp.lt.s32.totalorder %s43, 1
      %s684 = scalar_select %p683, %s43, 1
      %s685 = smul.addr %s684, 3
      %s686 = smul.addr %s685, 4
      %s687 = scalar_lea.vmem %s13, %s686
      %p688 = scmp.lt.s32.totalorder %s43, 1
      %s689 = scalar_select %p688, %s43, 1
      %s690 = scalar_lea.vmem %s14, %s689
      %p691 = scmp.lt.s32.totalorder %s43, 1
      %s692 = scalar_select %p691, %s43, 1
      %s693 = smul.addr %s692, 4
      %s694 = smul.addr %s693, 4
      %s695 = scalar_lea.vmem %s15, %s694
      %p696 = scmp.lt.s32.totalorder %s43, 1
      %s697 = scalar_select %p696, %s43, 1
      %s698 = scalar_lea.vmem %s16, %s697
      %p699 = scmp.lt.s32.totalorder %s42, 1
      %s700 = scalar_select %p699, %s42, 1
      %s701 = smul.addr %s700, 8
      %s702 = scalar_lea.vmem %s17, %s701
      %p704 = scmp.eq.s32.totalorder %s43, 0
      // Predicated region
      $region81: #{_lambda_.4} parent=79 // pred_check
        %p705 = pneg %p704
      $region82: #{_lambda_.4} parent=79 // pred_check_branch
        %707 = sbr.rel (%p705) target = $region84
      $region83: #{_lambda_.4} parent=79 // pred_region
        %v708 = vld [vmem:[%s655] sm:$0xff]
        %vm709 = vcmask 392192
        %710 = vst.msk [vmem:[#allocation2] sm:$0xff] %vm709, %v708
      $region84: #{_lambda_.4} parent=79 // pred_fallthru
        _
      %s711 = sld [smem:[#allocation4 + %s43]]
      %p712 = scmp.eq.s32.totalorder %s711, 1
      // Predicated region
      $region85: #{_lambda_.4} parent=79 // pred_check
        %p713 = pneg %p712
      $region86: #{_lambda_.4} parent=79 // pred_check_branch
        %715 = sbr.rel (%p713) target = $region88
      $region87: #{_lambda_.4} parent=79 // pred_region
        %v716 = vld [vmem:[#allocation2] sm:$0xff]
        %v717 = vld [vmem:[%s3] sm:$0xff]
        %v718 = vld [vmem:[%s3 + $0x8] sm:$0xff]
        %v719 = vld [vmem:[%s3 + $0x10] sm:$0xff]
        %v720 = vld [vmem:[%s3 + $0x18] sm:$0xff]
        %v721 = vld [vmem:[%s3 + $0x20] sm:$0xff]
        %v722 = vld [vmem:[%s3 + $0x28] sm:$0xff]
        %vm723 = vcmask 392192
        %v725 = vsel %vm723, %v716, 0
        %727 = vmatprep.subr.mxu0 0.0
        %728 = vmatpush1.msra.mxu0 %v717
        %729 = vmatprep.subr.mxu0 0.0
        %730 = vmatpush1.msra.mxu0 %v718
        %731 = vmatprep.subr.mxu0 0.0
        %732 = vmatpush1.msra.mxu0 %v719
        %733 = vmatprep.subr.mxu0 0.0
        %734 = vmatpush1.msra.mxu0 %v720
        %735 = vmatprep.subr.mxu0 0.0
        %736 = vmatpush1.msra.mxu0 %v721
        %737 = vmatprep.subr.mxu0 0.0
        %738 = vmatpush1.msra.mxu0 %v722
        %739 = vmatprep.subr.mxu0 0.0
        %740 = vmatpush1.msra.mxu0 0.0
        %741 = vmatprep.subr.mxu0 0.0
        %742 = vmatpush1.msra.mxu0 0.0
        %743 = vmatprep.subr.mxu0 0.0
        %744 = vmatpush1.msra.mxu0 0.0
        %745 = vmatprep.subr.mxu0 0.0
        %746 = vmatpush1.msra.mxu0 0.0
        %747 = vmatprep.subr.mxu0 0.0
        %748 = vmatpush1.msra.mxu0 0.0
        %749 = vmatprep.subr.mxu0 0.0
        %750 = vmatpush1.msra.mxu0 0.0
        %751 = vmatprep.subr.mxu0 0.0
        %752 = vmatpush1.msra.mxu0 0.0
        %753 = vmatprep.subr.mxu0 0.0
        %754 = vmatpush1.msra.mxu0 0.0
        %755 = vmatprep.subr.mxu0 0.0
        %756 = vmatpush1.msra.mxu0 0.0
        %757 = vmatprep.subr.mxu0 0.0
        %758 = vmatpush1.msra.mxu0 0.0
        %759 = vmatprep.subr.mxu0 0.0
        %760 = vmatpush1.msra.mxu0 0.0
        %761 = vmatprep.subr.mxu0 0.0
        %762 = vmatpush1.msra.mxu0 0.0
        %763 = vmatprep.subr.mxu0 0.0
        %764 = vmatpush1.msra.mxu0 0.0
        %765 = vmatprep.subr.mxu0 0.0
        %766 = vmatpush1.msra.mxu0 0.0
        %767 = vmatprep.subr.mxu0 0.0
        %768 = vmatpush1.msra.mxu0 0.0
        %769 = vmatprep.subr.mxu0 0.0
        %770 = vmatpush1.msra.mxu0 0.0
        %771 = vmatprep.subr.mxu0 0.0
        %772 = vmatpush1.msra.mxu0 0.0
        %773 = vmatprep.subr.mxu0 0.0
        %774 = vmatpush1.msra.mxu0 0.0
        %775 = vmatprep.subr.mxu0 0.0
        %776 = vmatpush1.msra.mxu0 0.0
        %777 = vmatprep.subr.mxu0 0.0
        %778 = vmatpush1.msra.mxu0 0.0
        %779 = vmatprep.subr.mxu0 0.0
        %780 = vmatpush1.msra.mxu0 0.0
        %781 = vmatprep.subr.mxu0 0.0
        %782 = vmatpush1.msra.mxu0 0.0
        %783 = vmatprep.subr.mxu0 0.0
        %784 = vmatpush1.msra.mxu0 0.0
        %785 = vmatprep.subr.mxu0 0.0
        %786 = vmatpush1.msra.mxu0 0.0
        %787 = vmatprep.subr.mxu0 0.0
        %788 = vmatpush1.msra.mxu0 0.0
        %789 = vmatprep.subr.mxu0 0.0
        %790 = vmatpush1.msra.mxu0 0.0
        %791 = vmatprep.mubr.f32.mxu0 0.0
        %792 = vmatmul.mubr.f32.gmra.mrb[0].mxu0 %v725
        %v793 = vpop.f32.mrb[0].mxu0
        %v794 = vadd.f32 0.0, %v793
        %v795 = vpop.f32.mrb[0].mxu0
        %796 = vdwg.mxu0
        %797 = vst.msk [vmem:[#allocation2] sm:$0xff] %vm723, %v794
      $region88: #{_lambda_.4} parent=79 // pred_fallthru
        _
      %s798 = sld [smem:[#allocation4 + %s43]]
      %p799 = scmp.eq.s32.totalorder %s798, 2
      // Predicated region
      $region89: #{_lambda_.4} parent=79 // pred_check
        %p800 = pneg %p799
      $region90: #{_lambda_.4} parent=79 // pred_check_branch
        %802 = sbr.rel (%p800) target = $region92
      $region91: #{_lambda_.4} parent=79 // pred_region
        %v803 = vld [vmem:[#allocation2] sm:$0xff]
        %v804 = vld [vmem:[%s4] sm:$0xff]
        %v805 = vld [vmem:[%s4 + $0x8] sm:$0xff]
        %v806 = vld [vmem:[%s4 + $0x10] sm:$0xff]
        %v807 = vld [vmem:[%s4 + $0x18] sm:$0xff]
        %v808 = vld [vmem:[%s4 + $0x20] sm:$0xff]
        %v809 = vld [vmem:[%s4 + $0x28] sm:$0xff]
        %vm810 = vcmask 392192
        %v812 = vsel %vm810, %v803, 0
        %814 = vmatprep.subr.mxu0 0.0
        %815 = vmatpush1.msra.mxu0 %v804
        %816 = vmatprep.subr.mxu0 0.0
        %817 = vmatpush1.msra.mxu0 %v805
        %818 = vmatprep.subr.mxu0 0.0
        %819 = vmatpush1.msra.mxu0 %v806
        %820 = vmatprep.subr.mxu0 0.0
        %821 = vmatpush1.msra.mxu0 %v807
        %822 = vmatprep.subr.mxu0 0.0
        %823 = vmatpush1.msra.mxu0 %v808
        %824 = vmatprep.subr.mxu0 0.0
        %825 = vmatpush1.msra.mxu0 %v809
        %826 = vmatprep.subr.mxu0 0.0
        %827 = vmatpush1.msra.mxu0 0.0
        %828 = vmatprep.subr.mxu0 0.0
        %829 = vmatpush1.msra.mxu0 0.0
        %830 = vmatprep.subr.mxu0 0.0
        %831 = vmatpush1.msra.mxu0 0.0
        %832 = vmatprep.subr.mxu0 0.0
        %833 = vmatpush1.msra.mxu0 0.0
        %834 = vmatprep.subr.mxu0 0.0
        %835 = vmatpush1.msra.mxu0 0.0
        %836 = vmatprep.subr.mxu0 0.0
        %837 = vmatpush1.msra.mxu0 0.0
        %838 = vmatprep.subr.mxu0 0.0
        %839 = vmatpush1.msra.mxu0 0.0
        %840 = vmatprep.subr.mxu0 0.0
        %841 = vmatpush1.msra.mxu0 0.0
        %842 = vmatprep.subr.mxu0 0.0
        %843 = vmatpush1.msra.mxu0 0.0
        %844 = vmatprep.subr.mxu0 0.0
        %845 = vmatpush1.msra.mxu0 0.0
        %846 = vmatprep.subr.mxu0 0.0
        %847 = vmatpush1.msra.mxu0 0.0
        %848 = vmatprep.subr.mxu0 0.0
        %849 = vmatpush1.msra.mxu0 0.0
        %850 = vmatprep.subr.mxu0 0.0
        %851 = vmatpush1.msra.mxu0 0.0
        %852 = vmatprep.subr.mxu0 0.0
        %853 = vmatpush1.msra.mxu0 0.0
        %854 = vmatprep.subr.mxu0 0.0
        %855 = vmatpush1.msra.mxu0 0.0
        %856 = vmatprep.subr.mxu0 0.0
        %857 = vmatpush1.msra.mxu0 0.0
        %858 = vmatprep.subr.mxu0 0.0
        %859 = vmatpush1.msra.mxu0 0.0
        %860 = vmatprep.subr.mxu0 0.0
        %861 = vmatpush1.msra.mxu0 0.0
        %862 = vmatprep.subr.mxu0 0.0
        %863 = vmatpush1.msra.mxu0 0.0
        %864 = vmatprep.subr.mxu0 0.0
        %865 = vmatpush1.msra.mxu0 0.0
        %866 = vmatprep.subr.mxu0 0.0
        %867 = vmatpush1.msra.mxu0 0.0
        %868 = vmatprep.subr.mxu0 0.0
        %869 = vmatpush1.msra.mxu0 0.0
        %870 = vmatprep.subr.mxu0 0.0
        %871 = vmatpush1.msra.mxu0 0.0
        %872 = vmatprep.subr.mxu0 0.0
        %873 = vmatpush1.msra.mxu0 0.0
        %874 = vmatprep.subr.mxu0 0.0
        %875 = vmatpush1.msra.mxu0 0.0
        %876 = vmatprep.subr.mxu0 0.0
        %877 = vmatpush1.msra.mxu0 0.0
        %878 = vmatprep.mubr.f32.mxu0 0.0
        %879 = vmatmul.mubr.f32.gmra.mrb[0].mxu0 %v812
        %v880 = vpop.f32.mrb[0].mxu0
        %v881 = vadd.f32 0.0, %v880
        %v882 = vpop.f32.mrb[0].mxu0
        %883 = vdwg.mxu0
        %884 = vst.msk [vmem:[#allocation2] sm:$0xff] %vm810, %v881
      $region92: #{_lambda_.4} parent=79 // pred_fallthru
        _
      %v885 = vld [vmem:[#allocation2] sm:$0xff]
      %v886 = vld [vmem:[%s658] sm:$0x1]
      %v887 = vld [vmem:[%s661] sm:$0x1]
      %889 = vrot.lane.b32.xlu0 %v885, 104
      %v890 = vpop.permute.xlu0 %889
      %vm892 = vcmask 195584
      %v893 = vsel %vm892, %v890, 0.0
      %894 = vadd.xlane.f32.xlu0 %v893
      %v895 = vpop.xlane.xlu0 %894
      %v896 = vrcp.pop 24.0
      %v897 = vmul.f32 %v895, %v896
      %v898 = vsub.f32 %v885, %v897
      %v899 = vmul.f32 %v898, %v898
      %901 = vrot.lane.b32.xlu0 %v899, 104
      %v902 = vpop.permute.xlu0 %901
      %v904 = vsel %vm892, %v902, 0.0
      %905 = vadd.xlane.f32.xlu0 %v904
      %v906 = vpop.xlane.xlu0 %905
      %v907 = vmul.f32 %v906, %v896
      %v908 = vadd.f32 %v907, 1e-05
      %v909 = vrsqrt.pop %v908
      %v910 = vmul.f32 %v898, %v909
      %v912 = vlaneseq
      %v913 = vshrl.u32 %v912, 7
      %v914 = vsub.s32 0, %v913
      %v915 = vrot.slane %v886, %v914
      %916 = vrot.lane.b32.xlu0 %v915, 24
      %v917 = vpop.permute.xlu0 %916
      %v919 = vmul.f32 %v910, %v917
      %v921 = vlaneseq
      %v922 = vshrl.u32 %v921, 7
      %v923 = vsub.s32 0, %v922
      %v924 = vrot.slane %v887, %v923
      %925 = vrot.lane.b32.xlu0 %v924, 24
      %v926 = vpop.permute.xlu0 %925
      %v928 = vadd.f32 %v919, %v926
      %930 = vrot.lane.b32.xlu0 %v928, 104
      %v931 = vpop.permute.xlu0 %930
      %933 = vxpose.xlu0.b32.start [1/16] %v931, 128
      %934 = vxpose.xlu0.b32.cont [2/16] 0.0, 128
      %935 = vxpose.xlu0.b32.cont [3/16] 0.0, 128
      %936 = vxpose.xlu0.b32.cont [4/16] 0.0, 128
      %937 = vxpose.xlu0.b32.cont [5/16] 0.0, 128
      %938 = vxpose.xlu0.b32.cont [6/16] 0.0, 128
      %939 = vxpose.xlu0.b32.cont [7/16] 0.0, 128
      %940 = vxpose.xlu0.b32.cont [8/16] 0.0, 128
      %941 = vxpose.xlu0.b32.cont [9/16] 0.0, 128
      %942 = vxpose.xlu0.b32.cont [10/16] 0.0, 128
      %943 = vxpose.xlu0.b32.cont [11/16] 0.0, 128
      %944 = vxpose.xlu0.b32.cont [12/16] 0.0, 128
      %945 = vxpose.xlu0.b32.cont [13/16] 0.0, 128
      %946 = vxpose.xlu0.b32.cont [14/16] 0.0, 128
      %947 = vxpose.xlu0.b32.cont [15/16] 0.0, 128
      %948 = vxpose.xlu0.b32.end [16/16] 0.0, 128
      %v949 = vpop.trf.xlu0
      %v950 = vpop.trf.xlu0
      %v951 = vpop.trf.xlu0
      %v952 = vpop.trf.xlu0
      %v953 = vpop.trf.xlu0
      %v954 = vpop.trf.xlu0
      %v955 = vpop.trf.xlu0
      %v956 = vpop.trf.xlu0
      %v957 = vpop.trf.xlu0
      %v958 = vpop.trf.xlu0
      %v959 = vpop.trf.xlu0
      %v960 = vpop.trf.xlu0
      %v961 = vpop.trf.xlu0
      %v962 = vpop.trf.xlu0
      %v963 = vpop.trf.xlu0
      %v964 = vpop.trf.xlu0
      %v965 = vpack.c.bf16 %v950, %v949
      %v966 = vpack.c.bf16 %v951, %v951
      %v967 = vld [vmem:[%s671] sm:$0xf]
      %v968 = vld [vmem:[%s674] sm:$0x1]
      %v970 = vlaneseq
      %v971 = vshrl.u32 %v970, 7
      %v972 = vsub.s32 0, %v971
      %v973 = vrot.slane %v968, %v972
      %vm975 = vcmask 64512
      %v977 = vsel %vm975, %v965, 0
      %v980 = vsel %vm975, %v966, 0
      %vm982 = vcmask 1043456
      %v984 = vsel %vm982, %v967, 0
      %986 = vmatprep.subr.bf16.mxu0 0
      %987 = vmatpush1.bf16.msra.mxu0 %v984
      %988 = vmatprep.subr.bf16.mxu0 0
      %989 = vmatpush1.bf16.msra.mxu0 0
      %990 = vmatprep.subr.bf16.mxu0 0
      %991 = vmatpush1.bf16.msra.mxu0 0
      %992 = vmatprep.subr.bf16.mxu0 0
      %993 = vmatpush1.bf16.msra.mxu0 0
      %994 = vmatprep.subr.bf16.mxu0 0
      %995 = vmatpush1.bf16.msra.mxu0 0
      %996 = vmatprep.subr.bf16.mxu0 0
      %997 = vmatpush1.bf16.msra.mxu0 0
      %998 = vmatprep.subr.bf16.mxu0 0
      %999 = vmatpush1.bf16.msra.mxu0 0
      %1000 = vmatprep.subr.bf16.mxu0 0
      %1001 = vmatpush1.bf16.msra.mxu0 0
      %1002 = vmatprep.subr.bf16.mxu0 0
      %1003 = vmatpush1.bf16.msra.mxu0 0
      %1004 = vmatprep.subr.bf16.mxu0 0
      %1005 = vmatpush1.bf16.msra.mxu0 0
      %1006 = vmatprep.subr.bf16.mxu0 0
      %1007 = vmatpush1.bf16.msra.mxu0 0
      %1008 = vmatprep.subr.bf16.mxu0 0
      %1009 = vmatpush1.bf16.msra.mxu0 0
      %1010 = vmatprep.subr.bf16.mxu0 0
      %1011 = vmatpush1.bf16.msra.mxu0 0
      %1012 = vmatprep.subr.bf16.mxu0 0
      %1013 = vmatpush1.bf16.msra.mxu0 0
      %1014 = vmatprep.subr.bf16.mxu0 0
      %1015 = vmatpush1.bf16.msra.mxu0 0
      %1016 = vmatprep.subr.bf16.mxu0 0
      %1017 = vmatpush1.bf16.msra.mxu0 0
      %1018 = vmatprep.mubr.bf16.mxu0 0
      %1019 = vmatmul.mubr.bf16.gmra.mrb[0].mxu0 %v977
      %v1020 = vpop.f32.mrb[0].mxu0
      %v1021 = vadd.f32 %v973, %v1020
      %v1022 = vpop.f32.mrb[0].mxu0
      %v1023 = vpop.f32.mrb[0].mxu0
      %v1024 = vadd.f32 %v973, %v1023
      %v1025 = vpop.f32.mrb[0].mxu0
      %1026 = vmatprep.mubr.bf16.mxu0 0
      %1027 = vmatmul.mubr.bf16.gmra.mrb[0].mxu0 %v980
      %v1028 = vpop.f32.mrb[0].mxu0
      %v1029 = vadd.f32 %v973, %v1028
      %v1030 = vpop.f32.mrb[0].mxu0
      %v1031 = vpop.f32.mrb[0].mxu0
      %v1032 = vpop.f32.mrb[0].mxu0
      %1033 = vdwg.mxu0
      %v1034 = vmul.f32 %v1021, 0.5
      %v1035 = vmul.f32 %v1024, 0.5
      %v1036 = vmul.f32 %v1029, 0.5
      %v1037 = vmul.f32 %v1021, 0.044715
      %v1038 = vmul.f32 %v1024, 0.044715
      %v1039 = vmul.f32 %v1029, 0.044715
      %v1040 = vmul.f32 %v1037, %v1021
      %v1041 = vmul.f32 %v1038, %v1024
      %v1042 = vmul.f32 %v1039, %v1029
      %v1043 = vmul.f32 %v1040, %v1021
      %v1044 = vmul.f32 %v1041, %v1024
      %v1045 = vmul.f32 %v1042, %v1029
      %v1046 = vadd.f32 %v1021, %v1043
      %v1047 = vadd.f32 %v1024, %v1044
      %v1048 = vadd.f32 %v1029, %v1045
      %v1049 = vmul.f32 %v1046, 0.7978846
      %v1050 = vmul.f32 %v1047, 0.7978846
      %v1051 = vmul.f32 %v1048, 0.7978846
      %v1052 = vtanh.pop %v1049
      %v1053 = vtanh.pop %v1050
      %v1054 = vtanh.pop %v1051
      %v1055 = vadd.f32 %v1052, 1.0
      %v1056 = vadd.f32 %v1053, 1.0
      %v1057 = vadd.f32 %v1054, 1.0
      %v1058 = vmul.f32 %v1034, %v1055
      %v1059 = vmul.f32 %v1035, %v1056
      %v1060 = vmul.f32 %v1036, %v1057
      %v1061 = vpack.c.bf16 %v1059, %v1058
      %v1062 = vpack.c.bf16 %v1060, %v1060
      %v1063 = vld [vmem:[%s679] sm:$0xf]
      %v1064 = vld [vmem:[%s679 + $0x4] sm:$0xf]
      %v1065 = vld [vmem:[%s682] sm:$0x1]
      %v1067 = vlaneseq
      %v1068 = vshrl.u32 %v1067, 7
      %v1069 = vsub.s32 0, %v1068
      %v1070 = vrot.slane %v1065, %v1069
      %v1074 = vunpack.c.l.b16 %v1063
      %v1075 = vunpack.c.l.b16 %v1064
      %v1076 = vpack.c.b16 %v1075, %v1074
      %vm1078 = vcmask 130048
      %v1080 = vsel %vm1078, %v1061, 0
      %v1083 = vsel %vm1078, %v1062, 0
      %1085 = vmatprep.subr.bf16.mxu0 0
      %1086 = vmatpush1.bf16.msra.mxu0 %v1076
      %1087 = vmatprep.subr.bf16.mxu0 0
      %1088 = vmatpush1.bf16.msra.mxu0 0
      %1089 = vmatprep.subr.bf16.mxu0 0
      %1090 = vmatpush1.bf16.msra.mxu0 0
      %1091 = vmatprep.subr.bf16.mxu0 0
      %1092 = vmatpush1.bf16.msra.mxu0 0
      %1093 = vmatprep.subr.bf16.mxu0 0
      %1094 = vmatpush1.bf16.msra.mxu0 0
      %1095 = vmatprep.subr.bf16.mxu0 0
      %1096 = vmatpush1.bf16.msra.mxu0 0
      %1097 = vmatprep.subr.bf16.mxu0 0
      %1098 = vmatpush1.bf16.msra.mxu0 0
      %1099 = vmatprep.subr.bf16.mxu0 0
      %1100 = vmatpush1.bf16.msra.mxu0 0
      %1101 = vmatprep.subr.bf16.mxu0 0
      %1102 = vmatpush1.bf16.msra.mxu0 0
      %1103 = vmatprep.subr.bf16.mxu0 0
      %1104 = vmatpush1.bf16.msra.mxu0 0
      %1105 = vmatprep.subr.bf16.mxu0 0
      %1106 = vmatpush1.bf16.msra.mxu0 0
      %1107 = vmatprep.subr.bf16.mxu0 0
      %1108 = vmatpush1.bf16.msra.mxu0 0
      %1109 = vmatprep.subr.bf16.mxu0 0
      %1110 = vmatpush1.bf16.msra.mxu0 0
      %1111 = vmatprep.subr.bf16.mxu0 0
      %1112 = vmatpush1.bf16.msra.mxu0 0
      %1113 = vmatprep.subr.bf16.mxu0 0
      %1114 = vmatpush1.bf16.msra.mxu0 0
      %1115 = vmatprep.subr.bf16.mxu0 0
      %1116 = vmatpush1.bf16.msra.mxu0 0
      %1117 = vmatprep.mubr.bf16.mxu0 0
      %1118 = vmatmul.mubr.bf16.gmra.mrb[0].mxu0 %v1080
      %v1119 = vpop.f32.mrb[0].mxu0
      %v1120 = vadd.f32 %v1070, %v1119
      %v1121 = vpop.f32.mrb[0].mxu0
      %v1122 = vpop.f32.mrb[0].mxu0
      %v1123 = vadd.f32 %v1070, %v1122
      %v1124 = vpop.f32.mrb[0].mxu0
      %1125 = vmatprep.mubr.bf16.mxu0 0
      %1126 = vmatmul.mubr.bf16.gmra.mrb[0].mxu0 %v1083
      %v1127 = vpop.f32.mrb[0].mxu0
      %v1128 = vadd.f32 %v1070, %v1127
      %v1129 = vpop.f32.mrb[0].mxu0
      %v1130 = vpop.f32.mrb[0].mxu0
      %v1131 = vpop.f32.mrb[0].mxu0
      %1132 = vdwg.mxu0
      %1133 = vxpose.xlu0.b32.start [1/16] %v1120, 128
      %1134 = vxpose.xlu0.b32.cont [2/16] %v1123, 128
      %1135 = vxpose.xlu0.b32.cont [3/16] %v1128, 128
      %1136 = vxpose.xlu0.b32.cont [4/16] 0.0, 128
      %1137 = vxpose.xlu0.b32.cont [5/16] 0.0, 128
      %1138 = vxpose.xlu0.b32.cont [6/16] 0.0, 128
      %1139 = vxpose.xlu0.b32.cont [7/16] 0.0, 128
      %1140 = vxpose.xlu0.b32.cont [8/16] 0.0, 128
      %1141 = vxpose.xlu0.b32.cont [9/16] 0.0, 128
      %1142 = vxpose.xlu0.b32.cont [10/16] 0.0, 128
      %1143 = vxpose.xlu0.b32.cont [11/16] 0.0, 128
      %1144 = vxpose.xlu0.b32.cont [12/16] 0.0, 128
      %1145 = vxpose.xlu0.b32.cont [13/16] 0.0, 128
      %1146 = vxpose.xlu0.b32.cont [14/16] 0.0, 128
      %1147 = vxpose.xlu0.b32.cont [15/16] 0.0, 128
      %1148 = vxpose.xlu0.b32.end [16/16] 0.0, 128
      %v1149 = vpop.trf.xlu0
      %v1150 = vpop.trf.xlu0
      %v1151 = vpop.trf.xlu0
      %v1152 = vpop.trf.xlu0
      %v1153 = vpop.trf.xlu0
      %v1154 = vpop.trf.xlu0
      %v1155 = vpop.trf.xlu0
      %v1156 = vpop.trf.xlu0
      %v1157 = vpop.trf.xlu0
      %v1158 = vpop.trf.xlu0
      %v1159 = vpop.trf.xlu0
      %v1160 = vpop.trf.xlu0
      %v1161 = vpop.trf.xlu0
      %v1162 = vpop.trf.xlu0
      %v1163 = vpop.trf.xlu0
      %v1164 = vpop.trf.xlu0
      %v1165 = vadd.f32 %v885, %v1149
      %v1166 = vld [vmem:[%s664] sm:$0x1]
      %v1167 = vld [vmem:[%s667] sm:$0x1]
      %v1168 = vsel %vm892, %v1165, 0.0
      %1169 = vadd.xlane.f32.xlu0 %v1168
      %v1170 = vpop.xlane.xlu0 %1169
      %v1171 = vmul.f32 %v1170, %v896
      %v1172 = vsub.f32 %v1165, %v1171
      %v1173 = vmul.f32 %v1172, %v1172
      %v1174 = vsel %vm892, %v1173, 0.0
      %1175 = vadd.xlane.f32.xlu0 %v1174
      %v1176 = vpop.xlane.xlu0 %1175
      %v1177 = vmul.f32 %v1176, %v896
      %v1178 = vadd.f32 %v1177, 1e-05
      %v1179 = vrsqrt.pop %v1178
      %v1180 = vmul.f32 %v1172, %v1179
      %v1182 = vlaneseq
      %v1183 = vshrl.u32 %v1182, 7
      %v1184 = vsub.s32 0, %v1183
      %v1185 = vrot.slane %v1166, %v1184
      %v1187 = vmul.f32 %v1180, %v1185
      %v1189 = vlaneseq
      %v1190 = vshrl.u32 %v1189, 7
      %v1191 = vsub.s32 0, %v1190
      %v1192 = vrot.slane %v1167, %v1191
      %v1194 = vadd.f32 %v1187, %v1192
      %v1195 = vpack.c.bf16 %v1194, %v1194
      %v1196 = vld [vmem:[%s687] sm:$0xf]
      %v1197 = vld [vmem:[%s687 + $0x4] sm:$0xf]
      %v1198 = vld [vmem:[%s687 + $0x8] sm:$0xf]
      %v1199 = vld [vmem:[%s690] sm:$0x1]
      %v1201 = vlaneseq
      %v1202 = vshrl.u32 %v1201, 7
      %v1203 = vsub.s32 0, %v1202
      %v1204 = vrot.slane %v1199, %v1203
      %v1209 = vunpack.c.l.b16 %v1196
      %v1210 = vunpack.c.l.b16 %v1197
      %v1211 = vunpack.c.l.b16 %v1198
      %v1212 = vpack.c.b16 %v1210, %v1209
      %v1213 = vpack.c.b16 %v1211, %v1211
      %v1216 = vsel %vm892, %v1195, 0
      %v1219 = vsel %vm982, %v1213, 0
      %1221 = vmatprep.subr.bf16.mxu0 0
      %1222 = vmatpush1.bf16.msra.mxu0 %v1212
      %1223 = vmatprep.subr.bf16.mxu0 0
      %1224 = vmatpush1.bf16.msra.mxu0 %v1219
      %1225 = vmatprep.subr.bf16.mxu0 0
      %1226 = vmatpush1.bf16.msra.mxu0 0
      %1227 = vmatprep.subr.bf16.mxu0 0
      %1228 = vmatpush1.bf16.msra.mxu0 0
      %1229 = vmatprep.subr.bf16.mxu0 0
      %1230 = vmatpush1.bf16.msra.mxu0 0
      %1231 = vmatprep.subr.bf16.mxu0 0
      %1232 = vmatpush1.bf16.msra.mxu0 0
      %1233 = vmatprep.subr.bf16.mxu0 0
      %1234 = vmatpush1.bf16.msra.mxu0 0
      %1235 = vmatprep.subr.bf16.mxu0 0
      %1236 = vmatpush1.bf16.msra.mxu0 0
      %1237 = vmatprep.subr.bf16.mxu0 0
      %1238 = vmatpush1.bf16.msra.mxu0 0
      %1239 = vmatprep.subr.bf16.mxu0 0
      %1240 = vmatpush1.bf16.msra.mxu0 0
      %1241 = vmatprep.subr.bf16.mxu0 0
      %1242 = vmatpush1.bf16.msra.mxu0 0
      %1243 = vmatprep.subr.bf16.mxu0 0
      %1244 = vmatpush1.bf16.msra.mxu0 0
      %1245 = vmatprep.subr.bf16.mxu0 0
      %1246 = vmatpush1.bf16.msra.mxu0 0
      %1247 = vmatprep.subr.bf16.mxu0 0
      %1248 = vmatpush1.bf16.msra.mxu0 0
      %1249 = vmatprep.subr.bf16.mxu0 0
      %1250 = vmatpush1.bf16.msra.mxu0 0
      %1251 = vmatprep.subr.bf16.mxu0 0
      %1252 = vmatpush1.bf16.msra.mxu0 0
      %1253 = vmatprep.mubr.bf16.mxu0 0
      %1254 = vmatmul.mubr.bf16.gmra.mrb[0].mxu0 %v1216
      %v1255 = vpop.f32.mrb[0].mxu0
      %v1256 = vadd.f32 %v1204, %v1255
      %v1257 = vpop.f32.mrb[0].mxu0
      %v1258 = vpop.f32.mrb[0].mxu0
      %v1259 = vpop.f32.mrb[0].mxu0
      %1260 = vdwg.mxu0
      %v1261 = vmul.f32 %v1256, 0.5
      %v1262 = vmul.f32 %v1256, 0.044715
      %v1263 = vmul.f32 %v1262, %v1256
      %v1264 = vmul.f32 %v1263, %v1256
      %v1265 = vadd.f32 %v1256, %v1264
      %v1266 = vmul.f32 %v1265, 0.7978846
      %v1267 = vtanh.pop %v1266
      %v1268 = vadd.f32 %v1267, 1.0
      %v1269 = vmul.f32 %v1261, %v1268
      %v1270 = vpack.c.bf16 %v1269, %v1269
      %v1271 = vld [vmem:[%s695] sm:$0xf]
      %v1272 = vld [vmem:[%s695 + $0x4] sm:$0xf]
      %v1273 = vld [vmem:[%s695 + $0x8] sm:$0xf]
      %v1274 = vld [vmem:[%s695 + $0xc] sm:$0xf]
      %v1275 = vld [vmem:[%s698] sm:$0x1]
      %v1277 = vlaneseq
      %v1278 = vshrl.u32 %v1277, 7
      %v1279 = vsub.s32 0, %v1278
      %v1280 = vrot.slane %v1275, %v1279
      %v1286 = vunpack.c.l.b16 %v1271
      %v1287 = vunpack.c.l.b16 %v1272
      %v1288 = vunpack.c.l.b16 %v1273
      %v1289 = vunpack.c.l.b16 %v1274
      %v1290 = vpack.c.b16 %v1287, %v1286
      %v1291 = vpack.c.b16 %v1289, %v1288
      %vm1294 = vcmask 261120
      %v1296 = vsel %vm1294, %v1270, 0
      %1298 = vmatprep.subr.bf16.mxu0 0
      %1299 = vmatpush1.bf16.msra.mxu0 %v1290
      %1300 = vmatprep.subr.bf16.mxu0 0
      %1301 = vmatpush1.bf16.msra.mxu0 %v1291
      %1302 = vmatprep.subr.bf16.mxu0 0
      %1303 = vmatpush1.bf16.msra.mxu0 0
      %1304 = vmatprep.subr.bf16.mxu0 0
      %1305 = vmatpush1.bf16.msra.mxu0 0
      %1306 = vmatprep.subr.bf16.mxu0 0
      %1307 = vmatpush1.bf16.msra.mxu0 0
      %1308 = vmatprep.subr.bf16.mxu0 0
      %1309 = vmatpush1.bf16.msra.mxu0 0
      %1310 = vmatprep.subr.bf16.mxu0 0
      %1311 = vmatpush1.bf16.msra.mxu0 0
      %1312 = vmatprep.subr.bf16.mxu0 0
      %1313 = vmatpush1.bf16.msra.mxu0 0
      %1314 = vmatprep.subr.bf16.mxu0 0
      %1315 = vmatpush1.bf16.msra.mxu0 0
      %1316 = vmatprep.subr.bf16.mxu0 0
      %1317 = vmatpush1.bf16.msra.mxu0 0
      %1318 = vmatprep.subr.bf16.mxu0 0
      %1319 = vmatpush1.bf16.msra.mxu0 0
      %1320 = vmatprep.subr.bf16.mxu0 0
      %1321 = vmatpush1.bf16.msra.mxu0 0
      %1322 = vmatprep.subr.bf16.mxu0 0
      %1323 = vmatpush1.bf16.msra.mxu0 0
      %1324 = vmatprep.subr.bf16.mxu0 0
      %1325 = vmatpush1.bf16.msra.mxu0 0
      %1326 = vmatprep.subr.bf16.mxu0 0
      %1327 = vmatpush1.bf16.msra.mxu0 0
      %1328 = vmatprep.subr.bf16.mxu0 0
      %1329 = vmatpush1.bf16.msra.mxu0 0
      %1330 = vmatprep.mubr.bf16.mxu0 0
      %1331 = vmatmul.mubr.bf16.gmra.mrb[0].mxu0 %v1296
      %v1332 = vpop.f32.mrb[0].mxu0
      %v1333 = vadd.f32 %v1280, %v1332
      %v1334 = vpop.f32.mrb[0].mxu0
      %v1335 = vpop.f32.mrb[0].mxu0
      %v1336 = vpop.f32.mrb[0].mxu0
      %1337 = vdwg.mxu0
      %1339 = vrot.lane.b32.xlu0 %v1333, 24
      %v1340 = vpop.permute.xlu0 %1339
      %v1342 = vadd.f32 %v885, %v1340
      %1344 = vrot.lane.b32.xlu0 %v1342, 104
      %v1345 = vpop.permute.xlu0 %1344
      %1348 = vrot.lane.b32.xlu0 %v1165, 24
      %v1349 = vpop.permute.xlu0 %1348
      %v1351 = vsel %vm892, %v1345, %v1349
      %vm1352 = vcmask 392192
      %1353 = vst.msk [vmem:[#allocation2] sm:$0xff] %vm1352, %v1351
      %s1354 = sld [smem:[#allocation5 + %s43]]
      %p1355 = scmp.eq.s32.totalorder %s1354, 1
      // Predicated region
      $region93: #{_lambda_.4} parent=79 // pred_check
        %p1356 = pneg %p1355
      $region94: #{_lambda_.4} parent=79 // pred_check_branch
        %1358 = sbr.rel (%p1356) target = $region96
      $region95: #{_lambda_.4} parent=79 // pred_region
        %v1359 = vld [vmem:[#allocation2] sm:$0xff]
        %v1360 = vld [vmem:[%s4] sm:$0xff]
        %v1361 = vld [vmem:[%s4 + $0x8] sm:$0xff]
        %v1362 = vld [vmem:[%s4 + $0x10] sm:$0xff]
        %v1363 = vld [vmem:[%s4 + $0x18] sm:$0xff]
        %v1364 = vld [vmem:[%s4 + $0x20] sm:$0xff]
        %v1365 = vld [vmem:[%s4 + $0x28] sm:$0xff]
        %v1367 = vsel %vm1352, %v1359, 0
        %1369 = vmatprep.subr.mxu0 0.0
        %1370 = vmatpush1.msra.mxu0 %v1360
        %1371 = vmatprep.subr.mxu0 0.0
        %1372 = vmatpush1.msra.mxu0 %v1361
        %1373 = vmatprep.subr.mxu0 0.0
        %1374 = vmatpush1.msra.mxu0 %v1362
        %1375 = vmatprep.subr.mxu0 0.0
        %1376 = vmatpush1.msra.mxu0 %v1363
        %1377 = vmatprep.subr.mxu0 0.0
        %1378 = vmatpush1.msra.mxu0 %v1364
        %1379 = vmatprep.subr.mxu0 0.0
        %1380 = vmatpush1.msra.mxu0 %v1365
        %1381 = vmatprep.subr.mxu0 0.0
        %1382 = vmatpush1.msra.mxu0 0.0
        %1383 = vmatprep.subr.mxu0 0.0
        %1384 = vmatpush1.msra.mxu0 0.0
        %1385 = vmatprep.subr.mxu0 0.0
        %1386 = vmatpush1.msra.mxu0 0.0
        %1387 = vmatprep.subr.mxu0 0.0
        %1388 = vmatpush1.msra.mxu0 0.0
        %1389 = vmatprep.subr.mxu0 0.0
        %1390 = vmatpush1.msra.mxu0 0.0
        %1391 = vmatprep.subr.mxu0 0.0
        %1392 = vmatpush1.msra.mxu0 0.0
        %1393 = vmatprep.subr.mxu0 0.0
        %1394 = vmatpush1.msra.mxu0 0.0
        %1395 = vmatprep.subr.mxu0 0.0
        %1396 = vmatpush1.msra.mxu0 0.0
        %1397 = vmatprep.subr.mxu0 0.0
        %1398 = vmatpush1.msra.mxu0 0.0
        %1399 = vmatprep.subr.mxu0 0.0
        %1400 = vmatpush1.msra.mxu0 0.0
        %1401 = vmatprep.subr.mxu0 0.0
        %1402 = vmatpush1.msra.mxu0 0.0
        %1403 = vmatprep.subr.mxu0 0.0
        %1404 = vmatpush1.msra.mxu0 0.0
        %1405 = vmatprep.subr.mxu0 0.0
        %1406 = vmatpush1.msra.mxu0 0.0
        %1407 = vmatprep.subr.mxu0 0.0
        %1408 = vmatpush1.msra.mxu0 0.0
        %1409 = vmatprep.subr.mxu0 0.0
        %1410 = vmatpush1.msra.mxu0 0.0
        %1411 = vmatprep.subr.mxu0 0.0
        %1412 = vmatpush1.msra.mxu0 0.0
        %1413 = vmatprep.subr.mxu0 0.0
        %1414 = vmatpush1.msra.mxu0 0.0
        %1415 = vmatprep.subr.mxu0 0.0
        %1416 = vmatpush1.msra.mxu0 0.0
        %1417 = vmatprep.subr.mxu0 0.0
        %1418 = vmatpush1.msra.mxu0 0.0
        %1419 = vmatprep.subr.mxu0 0.0
        %1420 = vmatpush1.msra.mxu0 0.0
        %1421 = vmatprep.subr.mxu0 0.0
        %1422 = vmatpush1.msra.mxu0 0.0
        %1423 = vmatprep.subr.mxu0 0.0
        %1424 = vmatpush1.msra.mxu0 0.0
        %1425 = vmatprep.subr.mxu0 0.0
        %1426 = vmatpush1.msra.mxu0 0.0
        %1427 = vmatprep.subr.mxu0 0.0
        %1428 = vmatpush1.msra.mxu0 0.0
        %1429 = vmatprep.subr.mxu0 0.0
        %1430 = vmatpush1.msra.mxu0 0.0
        %1431 = vmatprep.subr.mxu0 0.0
        %1432 = vmatpush1.msra.mxu0 0.0
        %1433 = vmatprep.mubr.f32.mxu0 0.0
        %1434 = vmatmul.mubr.f32.gmra.mrb[0].mxu0 %v1367
        %v1435 = vpop.f32.mrb[0].mxu0
        %v1436 = vadd.f32 0.0, %v1435
        %v1437 = vpop.f32.mrb[0].mxu0
        %1438 = vdwg.mxu0
        %1439 = vst.msk [vmem:[#allocation2] sm:$0xff] %vm1352, %v1436
      $region96: #{_lambda_.4} parent=79 // pred_fallthru
        _
      %p1440 = scmp.eq.s32.totalorder %s43, 1
      // Predicated region
      $region97: #{_lambda_.4} parent=79 // pred_check
        %p1441 = pneg %p1440
      $region98: #{_lambda_.4} parent=79 // pred_check_branch
        %1443 = sbr.rel (%p1441) target = $region100
      $region99: #{_lambda_.4} parent=79 // pred_region
        %v1444 = vld [vmem:[#allocation2] sm:$0xff]
        %1445 = vst.msk [vmem:[%s702] sm:$0xff] %vm1352, %v1444
      $region100: #{_lambda_.4} parent=79 // pred_fallthru
        _
      %p1446 = scmp.lt.s32.totalorder %s42, 1
      %s1447 = scalar_select %p1446, %s42, 1
      %s1448 = smul.addr %s1447, 8
      %s1449 = scalar_lea.vmem %s17, %s1448
      // Predicated region
      $region101: #{_lambda_.4} parent=79 // pred_check
        %p1450 = pneg %p448
      $region102: #{_lambda_.4} parent=79 // pred_check_branch
        %1452 = sbr.rel (%p1450) target = $region104
      $region103: #{_lambda_.4} parent=79 // pred_region
        _
      $region104: #{_lambda_.4} parent=79 // pred_fallthru
        _
    $region80: #{_lambda_.4} parent=5 // pred_fallthru
      _
    %p1453 = scmp.le.s32.totalorder 2, %s33
    // Predicated region
    $region105: #{_lambda_.4} parent=5 // pred_check
      %p1454 = pneg %p1453
    $region106: #{_lambda_.4} parent=5 // pred_check_branch
      %1456 = sbr.rel (%p1454) target = $region108
    $region107: #{_lambda_.4} parent=5 // pred_region
      %s1457 = ssub.s32 %s33, 2
      // Predicated region
      $region109: #{_lambda_.4} parent=107 // pred_check
        %p1458 = pneg %p454
      $region110: #{_lambda_.4} parent=107 // pred_check_branch
        %1460 = sbr.rel (%p1458) target = $region112
      $region111: #{_lambda_.4} parent=107 // pred_region
        %p1461 = scmp.lt.s32.totalorder %s44, 1
        %s1462 = scalar_select %p1461, %s44, 1
        %s1463 = smul.addr %s1462, 8
        %s1464 = scalar_lea.vmem %s17, %s1463
      $region112: #{_lambda_.4} parent=107 // pred_fallthru
        _
    $region108: #{_lambda_.4} parent=5 // pred_fallthru
      _
  $region6: #{_lambda_.4} parent=0 // loop_footer
    %s37 = sadd.s32 1, %s33
  $region7: #{_lambda_.4} parent=0 // loop_footer_branch
    %32 = sbr.rel target = $region3
  $region8: #{_lambda_.4} parent=0 // loop_exit
    _

// kernel: _lambda_.3
$region0: #{_lambda_.3}
  #allocation0 [shape = 'u32[]', space=smem, size = 0x4, offset = 0x4, fixed_abs, tag = 'smem constant byte address 0x4 - core index']
  #allocation1 [shape = 'u32[144,128]{1,0:T(1,128)}', space=vmem, size = 0x12000, scoped, tag = 'internal scratch']
  #allocation2 [shape = 'f32[2,8,48]{2,1,0:T(8,128)}', space=vmem, size = 0x2000, scoped, tag = 'scratch operand']
  #allocation3 [shape = 's32[1]{0}', space=sflag, size = 0x4, scoped, tag = 'scoped memory for _lambda_.3']
  #allocation4 [shape = 'u8[512]{0}', space=smem, size = 0x200, scoped, tag = 'prefetched SMEM operand 0']
  #allocation5 [shape = 'u8[512]{0}', space=smem, size = 0x200, scoped, tag = 'prefetched SMEM operand 1']
  %s0 = inlined_call_operand.vmem [shape: s32[4], index: 0, kind: input, shape index: {}]
  %s1 = inlined_call_operand.vmem [shape: s32[4], index: 1, kind: input, shape index: {}]
  %s2 = inlined_call_operand.vmem [shape: f32[4,8,48], index: 2, kind: input, shape index: {}]
  %s3 = inlined_call_operand.vmem [shape: f32[48,48], index: 3, kind: input, shape index: {}]
  %s4 = inlined_call_operand.vmem [shape: f32[48,48], index: 4, kind: input, shape index: {}]
  %s5 = inlined_call_operand.vmem [shape: f32[4,1,24], index: 5, kind: input, shape index: {}, may-alias: {5,7}]
  %s6 = inlined_call_operand.vmem [shape: f32[4,1,24], index: 6, kind: input, shape index: {}, may-alias: {6,8}]
  %s7 = inlined_call_operand.vmem [shape: f32[4,1,24], index: 7, kind: input, shape index: {}, may-alias: {5,7}]
  %s8 = inlined_call_operand.vmem [shape: f32[4,1,24], index: 8, kind: input, shape index: {}, may-alias: {6,8}]
  %s9 = inlined_call_operand.vmem [shape: bf16[4,8,16], index: 9, kind: input, shape index: {}]
  %s10 = inlined_call_operand.vmem [shape: f32[4,1,16], index: 10, kind: input, shape index: {}]
  %s11 = inlined_call_operand.vmem [shape: bf16[4,16,8], index: 11, kind: input, shape index: {}]
  %s12 = inlined_call_operand.vmem [shape: f32[4,1,8], index: 12, kind: input, shape index: {}]
  %s13 = inlined_call_operand.vmem [shape: bf16[4,24,32], index: 13, kind: input, shape index: {}]
  %s14 = inlined_call_operand.vmem [shape: f32[4,1,32], index: 14, kind: input, shape index: {}]
  %s15 = inlined_call_operand.vmem [shape: bf16[4,32,24], index: 15, kind: input, shape index: {}]
  %s16 = inlined_call_operand.vmem [shape: f32[4,1,24], index: 16, kind: input, shape index: {}]
  %s17 = inlined_call_operand.vmem [shape: f32[4,8,48], index: 17, kind: output, shape index: {}]
  %s18 = sld [smem:[#allocation0]]
  $region113: #{_lambda_.3} parent=0
    _
  %s20 = ssub.s32 1, %s18
  %s21 = scalar_select 0, %s20, %s18
  %s22 = sshll.u32 %s0, 4
  %s23 = int_to_ptr.vmem [resolvable:$true] %s22
  %25 = dma.vmem_to_smem %s23, 16, [#allocation4], [#allocation3]
  %s26 = sshll.u32 %s1, 4
  %s27 = int_to_ptr.vmem [resolvable:$true] %s26
  %29 = dma.vmem_to_smem %s27, 16, [#allocation5], [#allocation3]
  %30 = dma.done [#allocation3], 32
  %31 = sfence
  loop: start=0, step=1, limit=10
  $region2: #{_lambda_.3} parent=0 // loop_pre_header
    _
  $region3: #{_lambda_.3} parent=0 // loop_header
    %s33 = sphi 0, %s37
    %p34 = scmp.ge.s32.totalorder %s33, 10
    %s40 = sphi 0, %s52
    %s41 = sphi 0, %s48
    %s42 = sphi 0, %s40
    %s43 = sphi 0, %s41
    %s44 = sphi 0, %s42
    %s45 = sphi 0, %s43
    %s55 = sphi 0, %s57
    %s58 = sphi 0, %s55
    %s59 = sphi 0, %s58
    %s75 = sphi 0, %s59
    %s79 = sphi 0, %s79
    %s81 = sphi 0, %s79
    %s82 = sphi 0, %s81
    %s96 = sphi 0, %s82
    %s100 = sphi 0, %s100
    %s102 = sphi 0, %s100
    %s103 = sphi 0, %s102
    %s117 = sphi 0, %s103
    %s123 = sphi 0, %s125
    %s126 = sphi 0, %s123
    %s127 = sphi 0, %s126
    %s143 = sphi 0, %s127
    %s149 = sphi 0, %s151
    %s152 = sphi 0, %s149
    %s153 = sphi 0, %s152
    %s169 = sphi 0, %s153
    %s175 = sphi 0, %s177
    %s178 = sphi 0, %s175
    %s179 = sphi 0, %s178
    %s195 = sphi 0, %s179
    %s201 = sphi 0, %s203
    %s204 = sphi 0, %s201
    %s205 = sphi 0, %s204
    %s221 = sphi 0, %s205
    %s227 = sphi 0, %s229
    %s230 = sphi 0, %s227
    %s231 = sphi 0, %s230
    %s247 = sphi 0, %s231
    %s253 = sphi 0, %s255
    %s256 = sphi 0, %s253
    %s257 = sphi 0, %s256
    %s273 = sphi 0, %s257
    %s279 = sphi 0, %s281
    %s282 = sphi 0, %s279
    %s283 = sphi 0, %s282
    %s299 = sphi 0, %s283
    %s305 = sphi 0, %s307
    %s308 = sphi 0, %s305
    %s309 = sphi 0, %s308
    %s325 = sphi 0, %s309
    %s331 = sphi 0, %s333
    %s334 = sphi 0, %s331
    %s335 = sphi 0, %s334
    %s351 = sphi 0, %s335
    %s357 = sphi 0, %s359
    %s360 = sphi 0, %s357
    %s361 = sphi 0, %s360
    %s377 = sphi 0, %s361
    %s383 = sphi 0, %s385
    %s386 = sphi 0, %s383
    %s387 = sphi 0, %s386
    %s403 = sphi 0, %s387
    %s409 = sphi 0, %s411
    %s412 = sphi 0, %s409
    %s413 = sphi 0, %s412
    %s429 = sphi 0, %s413
    %s435 = sphi 0, %s437
    %s438 = sphi 0, %s435
    %s439 = sphi 0, %s438
    %s455 = sphi 0, %s439
  $region4: #{_lambda_.3} parent=0 // loop_header_branch
    %36 = sbr.rel (%p34) target = $region8
  $region5: #{_lambda_.3} parent=0 // loop_body
    %s38 = ssub.s32 %s33, 1
    %s39 = ssub.s32 %s33, 2
    %s46 = sadd.s32 1, %s41
    %p47 = scmp.ge.s32.totalorder %s46, 4
    %s48 = scalar_select %p47, 0, %s46
    %s49 = sadd.s32 1, %s40
    %s50 = scalar_select %p47, %s49, %s40
    %p51 = scmp.ge.s32.totalorder %s50, 2
    %s52 = scalar_select %p51, 0, %s50
    %s53 = ssub.s32 %s40, %s52
    %p54 = scmp.eq.s32.totalorder %s53, 0
    %s56 = sadd.s32 %s55, 1
    %s57 = scalar_select %p54, %s55, %s56
    %p60 = pneg %p54
    %p61 = scmp.eq.s32.totalorder %s33, 7
    %p62 = por %p60, %p61
    %p63 = scmp.ne.s32.totalorder %s55, %s58
    %p64 = scmp.eq.s32.totalorder %s33, 0
    %p65 = por %p63, %p64
    %p66 = scmp.ne.s32.totalorder %s55, %s58
    %p67 = scmp.eq.s32.totalorder %s38, 7
    %p68 = por %p66, %p67
    %p69 = scmp.ne.s32.totalorder %s58, %s59
    %p70 = scmp.eq.s32.totalorder %s38, 0
    %p71 = por %p69, %p70
    %p72 = scmp.ne.s32.totalorder %s58, %s59
    %p73 = scmp.eq.s32.totalorder %s39, 7
    %p74 = por %p72, %p73
    %p76 = scmp.ne.s32.totalorder %s59, %s75
    %p77 = scmp.eq.s32.totalorder %s39, 0
    %p78 = por %p76, %p77
    %s80 = sadd.s32 %s79, 1
    %p83 = scmp.eq.s32.totalorder %s33, 7
    %p84 = scmp.ne.s32.totalorder %s79, %s81
    %p85 = scmp.eq.s32.totalorder %s33, 0
    %p86 = por %p84, %p85
    %p87 = scmp.ne.s32.totalorder %s79, %s81
    %p88 = scmp.eq.s32.totalorder %s38, 7
    %p89 = por %p87, %p88
    %p90 = scmp.ne.s32.totalorder %s81, %s82
    %p91 = scmp.eq.s32.totalorder %s38, 0
    %p92 = por %p90, %p91
    %p93 = scmp.ne.s32.totalorder %s81, %s82
    %p94 = scmp.eq.s32.totalorder %s39, 7
    %p95 = por %p93, %p94
    %p97 = scmp.ne.s32.totalorder %s82, %s96
    %p98 = scmp.eq.s32.totalorder %s39, 0
    %p99 = por %p97, %p98
    %s101 = sadd.s32 %s100, 1
    %p104 = scmp.eq.s32.totalorder %s33, 7
    %p105 = scmp.ne.s32.totalorder %s100, %s102
    %p106 = scmp.eq.s32.totalorder %s33, 0
    %p107 = por %p105, %p106
    %p108 = scmp.ne.s32.totalorder %s100, %s102
    %p109 = scmp.eq.s32.totalorder %s38, 7
    %p110 = por %p108, %p109
    %p111 = scmp.ne.s32.totalorder %s102, %s103
    %p112 = scmp.eq.s32.totalorder %s38, 0
    %p113 = por %p111, %p112
    %p114 = scmp.ne.s32.totalorder %s102, %s103
    %p115 = scmp.eq.s32.totalorder %s39, 7
    %p116 = por %p114, %p115
    %p118 = scmp.ne.s32.totalorder %s103, %s117
    %p119 = scmp.eq.s32.totalorder %s39, 0
    %p120 = por %p118, %p119
    %s121 = ssub.s32 %s41, %s48
    %p122 = scmp.eq.s32.totalorder %s121, 0
    %s124 = sadd.s32 %s123, 1
    %s125 = scalar_select %p122, %s123, %s124
    %p128 = pneg %p122
    %p129 = scmp.eq.s32.totalorder %s33, 7
    %p130 = por %p128, %p129
    %p131 = scmp.ne.s32.totalorder %s123, %s126
    %p132 = scmp.eq.s32.totalorder %s33, 0
    %p133 = por %p131, %p132
    %p134 = scmp.ne.s32.totalorder %s123, %s126
    %p135 = scmp.eq.s32.totalorder %s38, 7
    %p136 = por %p134, %p135
    %p137 = scmp.ne.s32.totalorder %s126, %s127
    %p138 = scmp.eq.s32.totalorder %s38, 0
    %p139 = por %p137, %p138
    %p140 = scmp.ne.s32.totalorder %s126, %s127
    %p141 = scmp.eq.s32.totalorder %s39, 7
    %p142 = por %p140, %p141
    %p144 = scmp.ne.s32.totalorder %s127, %s143
    %p145 = scmp.eq.s32.totalorder %s39, 0
    %p146 = por %p144, %p145
    %s147 = ssub.s32 %s41, %s48
    %p148 = scmp.eq.s32.totalorder %s147, 0
    %s150 = sadd.s32 %s149, 1
    %s151 = scalar_select %p148, %s149, %s150
    %p154 = pneg %p148
    %p155 = scmp.eq.s32.totalorder %s33, 7
    %p156 = por %p154, %p155
    %p157 = scmp.ne.s32.totalorder %s149, %s152
    %p158 = scmp.eq.s32.totalorder %s33, 0
    %p159 = por %p157, %p158
    %p160 = scmp.ne.s32.totalorder %s149, %s152
    %p161 = scmp.eq.s32.totalorder %s38, 7
    %p162 = por %p160, %p161
    %p163 = scmp.ne.s32.totalorder %s152, %s153
    %p164 = scmp.eq.s32.totalorder %s38, 0
    %p165 = por %p163, %p164
    %p166 = scmp.ne.s32.totalorder %s152, %s153
    %p167 = scmp.eq.s32.totalorder %s39, 7
    %p168 = por %p166, %p167
    %p170 = scmp.ne.s32.totalorder %s153, %s169
    %p171 = scmp.eq.s32.totalorder %s39, 0
    %p172 = por %p170, %p171
    %s173 = ssub.s32 %s41, %s48
    %p174 = scmp.eq.s32.totalorder %s173, 0
    %s176 = sadd.s32 %s175, 1
    %s177 = scalar_select %p174, %s175, %s176
    %p180 = pneg %p174
    %p181 = scmp.eq.s32.totalorder %s33, 7
    %p182 = por %p180, %p181
    %p183 = scmp.ne.s32.totalorder %s175, %s178
    %p184 = scmp.eq.s32.totalorder %s33, 0
    %p185 = por %p183, %p184
    %p186 = scmp.ne.s32.totalorder %s175, %s178
    %p187 = scmp.eq.s32.totalorder %s38, 7
    %p188 = por %p186, %p187
    %p189 = scmp.ne.s32.totalorder %s178, %s179
    %p190 = scmp.eq.s32.totalorder %s38, 0
    %p191 = por %p189, %p190
    %p192 = scmp.ne.s32.totalorder %s178, %s179
    %p193 = scmp.eq.s32.totalorder %s39, 7
    %p194 = por %p192, %p193
    %p196 = scmp.ne.s32.totalorder %s179, %s195
    %p197 = scmp.eq.s32.totalorder %s39, 0
    %p198 = por %p196, %p197
    %s199 = ssub.s32 %s41, %s48
    %p200 = scmp.eq.s32.totalorder %s199, 0
    %s202 = sadd.s32 %s201, 1
    %s203 = scalar_select %p200, %s201, %s202
    %p206 = pneg %p200
    %p207 = scmp.eq.s32.totalorder %s33, 7
    %p208 = por %p206, %p207
    %p209 = scmp.ne.s32.totalorder %s201, %s204
    %p210 = scmp.eq.s32.totalorder %s33, 0
    %p211 = por %p209, %p210
    %p212 = scmp.ne.s32.totalorder %s201, %s204
    %p213 = scmp.eq.s32.totalorder %s38, 7
    %p214 = por %p212, %p213
    %p215 = scmp.ne.s32.totalorder %s204, %s205
    %p216 = scmp.eq.s32.totalorder %s38, 0
    %p217 = por %p215, %p216
    %p218 = scmp.ne.s32.totalorder %s204, %s205
    %p219 = scmp.eq.s32.totalorder %s39, 7
    %p220 = por %p218, %p219
    %p222 = scmp.ne.s32.totalorder %s205, %s221
    %p223 = scmp.eq.s32.totalorder %s39, 0
    %p224 = por %p222, %p223
    %s225 = ssub.s32 %s41, %s48
    %p226 = scmp.eq.s32.totalorder %s225, 0
    %s228 = sadd.s32 %s227, 1
    %s229 = scalar_select %p226, %s227, %s228
    %p232 = pneg %p226
    %p233 = scmp.eq.s32.totalorder %s33, 7
    %p234 = por %p232, %p233
    %p235 = scmp.ne.s32.totalorder %s227, %s230
    %p236 = scmp.eq.s32.totalorder %s33, 0
    %p237 = por %p235, %p236
    %p238 = scmp.ne.s32.totalorder %s227, %s230
    %p239 = scmp.eq.s32.totalorder %s38, 7
    %p240 = por %p238, %p239
    %p241 = scmp.ne.s32.totalorder %s230, %s231
    %p242 = scmp.eq.s32.totalorder %s38, 0
    %p243 = por %p241, %p242
    %p244 = scmp.ne.s32.totalorder %s230, %s231
    %p245 = scmp.eq.s32.totalorder %s39, 7
    %p246 = por %p244, %p245
    %p248 = scmp.ne.s32.totalorder %s231, %s247
    %p249 = scmp.eq.s32.totalorder %s39, 0
    %p250 = por %p248, %p249
    %s251 = ssub.s32 %s41, %s48
    %p252 = scmp.eq.s32.totalorder %s251, 0
    %s254 = sadd.s32 %s253, 1
    %s255 = scalar_select %p252, %s253, %s254
    %p258 = pneg %p252
    %p259 = scmp.eq.s32.totalorder %s33, 7
    %p260 = por %p258, %p259
    %p261 = scmp.ne.s32.totalorder %s253, %s256
    %p262 = scmp.eq.s32.totalorder %s33, 0
    %p263 = por %p261, %p262
    %p264 = scmp.ne.s32.totalorder %s253, %s256
    %p265 = scmp.eq.s32.totalorder %s38, 7
    %p266 = por %p264, %p265
    %p267 = scmp.ne.s32.totalorder %s256, %s257
    %p268 = scmp.eq.s32.totalorder %s38, 0
    %p269 = por %p267, %p268
    %p270 = scmp.ne.s32.totalorder %s256, %s257
    %p271 = scmp.eq.s32.totalorder %s39, 7
    %p272 = por %p270, %p271
    %p274 = scmp.ne.s32.totalorder %s257, %s273
    %p275 = scmp.eq.s32.totalorder %s39, 0
    %p276 = por %p274, %p275
    %s277 = ssub.s32 %s41, %s48
    %p278 = scmp.eq.s32.totalorder %s277, 0
    %s280 = sadd.s32 %s279, 1
    %s281 = scalar_select %p278, %s279, %s280
    %p284 = pneg %p278
    %p285 = scmp.eq.s32.totalorder %s33, 7
    %p286 = por %p284, %p285
    %p287 = scmp.ne.s32.totalorder %s279, %s282
    %p288 = scmp.eq.s32.totalorder %s33, 0
    %p289 = por %p287, %p288
    %p290 = scmp.ne.s32.totalorder %s279, %s282
    %p291 = scmp.eq.s32.totalorder %s38, 7
    %p292 = por %p290, %p291
    %p293 = scmp.ne.s32.totalorder %s282, %s283
    %p294 = scmp.eq.s32.totalorder %s38, 0
    %p295 = por %p293, %p294
    %p296 = scmp.ne.s32.totalorder %s282, %s283
    %p297 = scmp.eq.s32.totalorder %s39, 7
    %p298 = por %p296, %p297
    %p300 = scmp.ne.s32.totalorder %s283, %s299
    %p301 = scmp.eq.s32.totalorder %s39, 0
    %p302 = por %p300, %p301
    %s303 = ssub.s32 %s41, %s48
    %p304 = scmp.eq.s32.totalorder %s303, 0
    %s306 = sadd.s32 %s305, 1
    %s307 = scalar_select %p304, %s305, %s306
    %p310 = pneg %p304
    %p311 = scmp.eq.s32.totalorder %s33, 7
    %p312 = por %p310, %p311
    %p313 = scmp.ne.s32.totalorder %s305, %s308
    %p314 = scmp.eq.s32.totalorder %s33, 0
    %p315 = por %p313, %p314
    %p316 = scmp.ne.s32.totalorder %s305, %s308
    %p317 = scmp.eq.s32.totalorder %s38, 7
    %p318 = por %p316, %p317
    %p319 = scmp.ne.s32.totalorder %s308, %s309
    %p320 = scmp.eq.s32.totalorder %s38, 0
    %p321 = por %p319, %p320
    %p322 = scmp.ne.s32.totalorder %s308, %s309
    %p323 = scmp.eq.s32.totalorder %s39, 7
    %p324 = por %p322, %p323
    %p326 = scmp.ne.s32.totalorder %s309, %s325
    %p327 = scmp.eq.s32.totalorder %s39, 0
    %p328 = por %p326, %p327
    %s329 = ssub.s32 %s41, %s48
    %p330 = scmp.eq.s32.totalorder %s329, 0
    %s332 = sadd.s32 %s331, 1
    %s333 = scalar_select %p330, %s331, %s332
    %p336 = pneg %p330
    %p337 = scmp.eq.s32.totalorder %s33, 7
    %p338 = por %p336, %p337
    %p339 = scmp.ne.s32.totalorder %s331, %s334
    %p340 = scmp.eq.s32.totalorder %s33, 0
    %p341 = por %p339, %p340
    %p342 = scmp.ne.s32.totalorder %s331, %s334
    %p343 = scmp.eq.s32.totalorder %s38, 7
    %p344 = por %p342, %p343
    %p345 = scmp.ne.s32.totalorder %s334, %s335
    %p346 = scmp.eq.s32.totalorder %s38, 0
    %p347 = por %p345, %p346
    %p348 = scmp.ne.s32.totalorder %s334, %s335
    %p349 = scmp.eq.s32.totalorder %s39, 7
    %p350 = por %p348, %p349
    %p352 = scmp.ne.s32.totalorder %s335, %s351
    %p353 = scmp.eq.s32.totalorder %s39, 0
    %p354 = por %p352, %p353
    %s355 = ssub.s32 %s41, %s48
    %p356 = scmp.eq.s32.totalorder %s355, 0
    %s358 = sadd.s32 %s357, 1
    %s359 = scalar_select %p356, %s357, %s358
    %p362 = pneg %p356
    %p363 = scmp.eq.s32.totalorder %s33, 7
    %p364 = por %p362, %p363
    %p365 = scmp.ne.s32.totalorder %s357, %s360
    %p366 = scmp.eq.s32.totalorder %s33, 0
    %p367 = por %p365, %p366
    %p368 = scmp.ne.s32.totalorder %s357, %s360
    %p369 = scmp.eq.s32.totalorder %s38, 7
    %p370 = por %p368, %p369
    %p371 = scmp.ne.s32.totalorder %s360, %s361
    %p372 = scmp.eq.s32.totalorder %s38, 0
    %p373 = por %p371, %p372
    %p374 = scmp.ne.s32.totalorder %s360, %s361
    %p375 = scmp.eq.s32.totalorder %s39, 7
    %p376 = por %p374, %p375
    %p378 = scmp.ne.s32.totalorder %s361, %s377
    %p379 = scmp.eq.s32.totalorder %s39, 0
    %p380 = por %p378, %p379
    %s381 = ssub.s32 %s41, %s48
    %p382 = scmp.eq.s32.totalorder %s381, 0
    %s384 = sadd.s32 %s383, 1
    %s385 = scalar_select %p382, %s383, %s384
    %p388 = pneg %p382
    %p389 = scmp.eq.s32.totalorder %s33, 7
    %p390 = por %p388, %p389
    %p391 = scmp.ne.s32.totalorder %s383, %s386
    %p392 = scmp.eq.s32.totalorder %s33, 0
    %p393 = por %p391, %p392
    %p394 = scmp.ne.s32.totalorder %s383, %s386
    %p395 = scmp.eq.s32.totalorder %s38, 7
    %p396 = por %p394, %p395
    %p397 = scmp.ne.s32.totalorder %s386, %s387
    %p398 = scmp.eq.s32.totalorder %s38, 0
    %p399 = por %p397, %p398
    %p400 = scmp.ne.s32.totalorder %s386, %s387
    %p401 = scmp.eq.s32.totalorder %s39, 7
    %p402 = por %p400, %p401
    %p404 = scmp.ne.s32.totalorder %s387, %s403
    %p405 = scmp.eq.s32.totalorder %s39, 0
    %p406 = por %p404, %p405
    %s407 = ssub.s32 %s41, %s48
    %p408 = scmp.eq.s32.totalorder %s407, 0
    %s410 = sadd.s32 %s409, 1
    %s411 = scalar_select %p408, %s409, %s410
    %p414 = pneg %p408
    %p415 = scmp.eq.s32.totalorder %s33, 7
    %p416 = por %p414, %p415
    %p417 = scmp.ne.s32.totalorder %s409, %s412
    %p418 = scmp.eq.s32.totalorder %s33, 0
    %p419 = por %p417, %p418
    %p420 = scmp.ne.s32.totalorder %s409, %s412
    %p421 = scmp.eq.s32.totalorder %s38, 7
    %p422 = por %p420, %p421
    %p423 = scmp.ne.s32.totalorder %s412, %s413
    %p424 = scmp.eq.s32.totalorder %s38, 0
    %p425 = por %p423, %p424
    %p426 = scmp.ne.s32.totalorder %s412, %s413
    %p427 = scmp.eq.s32.totalorder %s39, 7
    %p428 = por %p426, %p427
    %p430 = scmp.ne.s32.totalorder %s413, %s429
    %p431 = scmp.eq.s32.totalorder %s39, 0
    %p432 = por %p430, %p431
    %s433 = ssub.s32 %s40, %s52
    %p434 = scmp.eq.s32.totalorder %s433, 0
    %s436 = sadd.s32 %s435, 1
    %s437 = scalar_select %p434, %s435, %s436
    %p440 = pneg %p434
    %p441 = scmp.eq.s32.totalorder %s33, 7
    %p442 = por %p440, %p441
    %p443 = scmp.ne.s32.totalorder %s435, %s438
    %p444 = scmp.eq.s32.totalorder %s33, 0
    %p445 = por %p443, %p444
    %p446 = scmp.ne.s32.totalorder %s435, %s438
    %p447 = scmp.eq.s32.totalorder %s38, 7
    %p448 = por %p446, %p447
    %p449 = scmp.ne.s32.totalorder %s438, %s439
    %p450 = scmp.eq.s32.totalorder %s38, 0
    %p451 = por %p449, %p450
    %p452 = scmp.ne.s32.totalorder %s438, %s439
    %p453 = scmp.eq.s32.totalorder %s39, 7
    %p454 = por %p452, %p453
    %p456 = scmp.ne.s32.totalorder %s439, %s455
    %p457 = scmp.eq.s32.totalorder %s39, 0
    %p458 = por %p456, %p457
    %p459 = scmp.le.s32.totalorder 1, %s33
    %p460 = scmp.lt.s32.totalorder %s33, 9
    %p461 = pnand %p459, %p460
    %p462 = pneg %p461
    // Predicated region
    $region9: #{_lambda_.3} parent=5 // pred_check
      _
    $region10: #{_lambda_.3} parent=5 // pred_check_branch
      %464 = sbr.rel (%p461) target = $region12
    $region11: #{_lambda_.3} parent=5 // pred_region
      %s465 = ssub.s32 %s33, 1
      // Predicated region
      $region13: #{_lambda_.3} parent=11 // pred_check
        %p466 = pneg %p92
      $region14: #{_lambda_.3} parent=11 // pred_check_branch
        %468 = sbr.rel (%p466) target = $region16
      $region15: #{_lambda_.3} parent=11 // pred_region
        _
      $region16: #{_lambda_.3} parent=11 // pred_fallthru
        _
      // Predicated region
      $region17: #{_lambda_.3} parent=11 // pred_check
        %p469 = pneg %p113
      $region18: #{_lambda_.3} parent=11 // pred_check_branch
        %471 = sbr.rel (%p469) target = $region20
      $region19: #{_lambda_.3} parent=11 // pred_region
        _
      $region20: #{_lambda_.3} parent=11 // pred_fallthru
        _
    $region12: #{_lambda_.3} parent=5 // pred_fallthru
      _
    %p472 = scmp.lt.s32.totalorder %s33, 8
    // Predicated region
    $region21: #{_lambda_.3} parent=5 // pred_check
      %p473 = pneg %p472
    $region22: #{_lambda_.3} parent=5 // pred_check_branch
      %475 = sbr.rel (%p473) target = $region24
    $region23: #{_lambda_.3} parent=5 // pred_region
      // Predicated region
      $region25: #{_lambda_.3} parent=23 // pred_check
        %p476 = pneg %p65
      $region26: #{_lambda_.3} parent=23 // pred_check_branch
        %478 = sbr.rel (%p476) target = $region28
      $region27: #{_lambda_.3} parent=23 // pred_region
        %s479 = smul.u32 2, %s40
        %p480 = scmp.lt.s32.totalorder %s479, 3
        %s481 = scalar_select %p480, %s479, 3
        %s482 = smul.addr %s481, 8
        %s483 = scalar_lea.vmem %s2, %s482
        %s484 = smul.u32 2, %s40
      $region28: #{_lambda_.3} parent=23 // pred_fallthru
        _
      // Predicated region
      $region29: #{_lambda_.3} parent=23 // pred_check
        %p485 = pneg %p133
      $region30: #{_lambda_.3} parent=23 // pred_check_branch
        %487 = sbr.rel (%p485) target = $region32
      $region31: #{_lambda_.3} parent=23 // pred_region
        %p488 = scmp.lt.s32.totalorder %s41, 3
        %s489 = scalar_select %p488, %s41, 3
        %s490 = scalar_lea.vmem %s5, %s489
      $region32: #{_lambda_.3} parent=23 // pred_fallthru
        _
      // Predicated region
      $region33: #{_lambda_.3} parent=23 // pred_check
        %p491 = pneg %p159
      $region34: #{_lambda_.3} parent=23 // pred_check_branch
        %493 = sbr.rel (%p491) target = $region36
      $region35: #{_lambda_.3} parent=23 // pred_region
        %p494 = scmp.lt.s32.totalorder %s41, 3
        %s495 = scalar_select %p494, %s41, 3
        %s496 = scalar_lea.vmem %s6, %s495
      $region36: #{_lambda_.3} parent=23 // pred_fallthru
        _
      // Predicated region
      $region37: #{_lambda_.3} parent=23 // pred_check
        %p497 = pneg %p185
      $region38: #{_lambda_.3} parent=23 // pred_check_branch
        %499 = sbr.rel (%p497) target = $region40
      $region39: #{_lambda_.3} parent=23 // pred_region
        %p500 = scmp.lt.s32.totalorder %s41, 3
        %s501 = scalar_select %p500, %s41, 3
        %s502 = scalar_lea.vmem %s7, %s501
      $region40: #{_lambda_.3} parent=23 // pred_fallthru
        _
      // Predicated region
      $region41: #{_lambda_.3} parent=23 // pred_check
        %p503 = pneg %p211
      $region42: #{_lambda_.3} parent=23 // pred_check_branch
        %505 = sbr.rel (%p503) target = $region44
      $region43: #{_lambda_.3} parent=23 // pred_region
        %p506 = scmp.lt.s32.totalorder %s41, 3
        %s507 = scalar_select %p506, %s41, 3
        %s508 = scalar_lea.vmem %s8, %s507
      $region44: #{_lambda_.3} parent=23 // pred_fallthru
        _
      // Predicated region
      $region45: #{_lambda_.3} parent=23 // pred_check
        %p509 = pneg %p237
      $region46: #{_lambda_.3} parent=23 // pred_check_branch
        %511 = sbr.rel (%p509) target = $region48
      $region47: #{_lambda_.3} parent=23 // pred_region
        %p512 = scmp.lt.s32.totalorder %s41, 3
        %s513 = scalar_select %p512, %s41, 3
        %s514 = smul.addr %s513, 4
        %s515 = scalar_lea.vmem %s9, %s514
      $region48: #{_lambda_.3} parent=23 // pred_fallthru
        _
      // Predicated region
      $region49: #{_lambda_.3} parent=23 // pred_check
        %p516 = pneg %p263
      $region50: #{_lambda_.3} parent=23 // pred_check_branch
        %518 = sbr.rel (%p516) target = $region52
      $region51: #{_lambda_.3} parent=23 // pred_region
        %p519 = scmp.lt.s32.totalorder %s41, 3
        %s520 = scalar_select %p519, %s41, 3
        %s521 = scalar_lea.vmem %s10, %s520
      $region52: #{_lambda_.3} parent=23 // pred_fallthru
        _
      // Predicated region
      $region53: #{_lambda_.3} parent=23 // pred_check
        %p522 = pneg %p289
      $region54: #{_lambda_.3} parent=23 // pred_check_branch
        %524 = sbr.rel (%p522) target = $region56
      $region55: #{_lambda_.3} parent=23 // pred_region
        %p525 = scmp.lt.s32.totalorder %s41, 3
        %s526 = scalar_select %p525, %s41, 3
        %s527 = smul.addr %s526, 2
        %s528 = smul.addr %s527, 4
        %s529 = scalar_lea.vmem %s11, %s528
      $region56: #{_lambda_.3} parent=23 // pred_fallthru
        _
      // Predicated region
      $region57: #{_lambda_.3} parent=23 // pred_check
        %p530 = pneg %p315
      $region58: #{_lambda_.3} parent=23 // pred_check_branch
        %532 = sbr.rel (%p530) target = $region60
      $region59: #{_lambda_.3} parent=23 // pred_region
        %p533 = scmp.lt.s32.totalorder %s41, 3
        %s534 = scalar_select %p533, %s41, 3
        %s535 = scalar_lea.vmem %s12, %s534
      $region60: #{_lambda_.3} parent=23 // pred_fallthru
        _
      // Predicated region
      $region61: #{_lambda_.3} parent=23 // pred_check
        %p536 = pneg %p341
      $region62: #{_lambda_.3} parent=23 // pred_check_branch
        %538 = sbr.rel (%p536) target = $region64
      $region63: #{_lambda_.3} parent=23 // pred_region
        %p539 = scmp.lt.s32.totalorder %s41, 3
        %s540 = scalar_select %p539, %s41, 3
        %s541 = smul.addr %s540, 3
        %s542 = smul.addr %s541, 4
        %s543 = scalar_lea.vmem %s13, %s542
      $region64: #{_lambda_.3} parent=23 // pred_fallthru
        _
      // Predicated region
      $region65: #{_lambda_.3} parent=23 // pred_check
        %p544 = pneg %p367
      $region66: #{_lambda_.3} parent=23 // pred_check_branch
        %546 = sbr.rel (%p544) target = $region68
      $region67: #{_lambda_.3} parent=23 // pred_region
        %p547 = scmp.lt.s32.totalorder %s41, 3
        %s548 = scalar_select %p547, %s41, 3
        %s549 = scalar_lea.vmem %s14, %s548
      $region68: #{_lambda_.3} parent=23 // pred_fallthru
        _
      // Predicated region
      $region69: #{_lambda_.3} parent=23 // pred_check
        %p550 = pneg %p393
      $region70: #{_lambda_.3} parent=23 // pred_check_branch
        %552 = sbr.rel (%p550) target = $region72
      $region71: #{_lambda_.3} parent=23 // pred_region
        %p553 = scmp.lt.s32.totalorder %s41, 3
        %s554 = scalar_select %p553, %s41, 3
        %s555 = smul.addr %s554, 4
        %s556 = smul.addr %s555, 4
        %s557 = scalar_lea.vmem %s15, %s556
      $region72: #{_lambda_.3} parent=23 // pred_fallthru
        _
      // Predicated region
      $region73: #{_lambda_.3} parent=23 // pred_check
        %p558 = pneg %p419
      $region74: #{_lambda_.3} parent=23 // pred_check_branch
        %560 = sbr.rel (%p558) target = $region76
      $region75: #{_lambda_.3} parent=23 // pred_region
        %p561 = scmp.lt.s32.totalorder %s41, 3
        %s562 = scalar_select %p561, %s41, 3
        %s563 = scalar_lea.vmem %s16, %s562
      $region76: #{_lambda_.3} parent=23 // pred_fallthru
        _
    $region24: #{_lambda_.3} parent=5 // pred_fallthru
      _
    %p564 = scmp.le.s32.totalorder 1, %s33
    %p565 = scmp.lt.s32.totalorder %s33, 9
    %p566 = pnand %p564, %p565
    %p567 = pneg %p566
    // Predicated region
    $region77: #{_lambda_.3} parent=5 // pred_check
      _
    $region78: #{_lambda_.3} parent=5 // pred_check_branch
      %569 = sbr.rel (%p566) target = $region80
    $region79: #{_lambda_.3} parent=5 // pred_region
      %s570 = ssub.s32 %s33, 1
      %s571 = smul.u32 2, %s42
      %p572 = scmp.lt.s32.totalorder %s571, 3
      %s573 = scalar_select %p572, %s571, 3
      %s574 = smul.addr %s573, 8
      %s575 = scalar_lea.vmem %s2, %s574
      %p576 = pneg %p71
      %p577 = pneg %p68
      %p578 = pneg %p92
      %p579 = pneg %p89
      %p580 = pneg %p113
      %p581 = pneg %p110
      %p582 = scmp.lt.s32.totalorder %s43, 3
      %s583 = scalar_select %p582, %s43, 3
      %s584 = scalar_lea.vmem %s5, %s583
      %p585 = pneg %p139
      %p586 = pneg %p136
      %p587 = scmp.lt.s32.totalorder %s43, 3
      %s588 = scalar_select %p587, %s43, 3
      %s589 = scalar_lea.vmem %s6, %s588
      %p590 = pneg %p165
      %p591 = pneg %p162
      %p592 = scmp.lt.s32.totalorder %s43, 3
      %s593 = scalar_select %p592, %s43, 3
      %s594 = scalar_lea.vmem %s7, %s593
      %p595 = pneg %p191
      %p596 = pneg %p188
      %p597 = scmp.lt.s32.totalorder %s43, 3
      %s598 = scalar_select %p597, %s43, 3
      %s599 = scalar_lea.vmem %s8, %s598
      %p600 = pneg %p217
      %p601 = pneg %p214
      %p602 = scmp.lt.s32.totalorder %s43, 3
      %s603 = scalar_select %p602, %s43, 3
      %s604 = smul.addr %s603, 4
      %s605 = scalar_lea.vmem %s9, %s604
      %p606 = pneg %p243
      %p607 = pneg %p240
      %p608 = scmp.lt.s32.totalorder %s43, 3
      %s609 = scalar_select %p608, %s43, 3
      %s610 = scalar_lea.vmem %s10, %s609
      %p611 = pneg %p269
      %p612 = pneg %p266
      %p613 = scmp.lt.s32.totalorder %s43, 3
      %s614 = scalar_select %p613, %s43, 3
      %s615 = smul.addr %s614, 2
      %s616 = smul.addr %s615, 4
      %s617 = scalar_lea.vmem %s11, %s616
      %p618 = pneg %p295
      %p619 = pneg %p292
      %p620 = scmp.lt.s32.totalorder %s43, 3
      %s621 = scalar_select %p620, %s43, 3
      %s622 = scalar_lea.vmem %s12, %s621
      %p623 = pneg %p321
      %p624 = pneg %p318
      %p625 = scmp.lt.s32.totalorder %s43, 3
      %s626 = scalar_select %p625, %s43, 3
      %s627 = smul.addr %s626, 3
      %s628 = smul.addr %s627, 4
      %s629 = scalar_lea.vmem %s13, %s628
      %p630 = pneg %p347
      %p631 = pneg %p344
      %p632 = scmp.lt.s32.totalorder %s43, 3
      %s633 = scalar_select %p632, %s43, 3
      %s634 = scalar_lea.vmem %s14, %s633
      %p635 = pneg %p373
      %p636 = pneg %p370
      %p637 = scmp.lt.s32.totalorder %s43, 3
      %s638 = scalar_select %p637, %s43, 3
      %s639 = smul.addr %s638, 4
      %s640 = smul.addr %s639, 4
      %s641 = scalar_lea.vmem %s15, %s640
      %p642 = pneg %p399
      %p643 = pneg %p396
      %p644 = scmp.lt.s32.totalorder %s43, 3
      %s645 = scalar_select %p644, %s43, 3
      %s646 = scalar_lea.vmem %s16, %s645
      %p647 = pneg %p425
      %p648 = pneg %p422
      %p649 = pneg %p451
      %p650 = pneg %p448
      %s651 = smul.u32 2, %s42
      %p652 = scmp.lt.s32.totalorder %s651, 3
      %s653 = scalar_select %p652, %s651, 3
      %s654 = smul.addr %s653, 8
      %s655 = scalar_lea.vmem %s17, %s654
      %s656 = smul.u32 2, %s42
      %p657 = scmp.lt.s32.totalorder %s656, 3
      %s658 = scalar_select %p657, %s656, 3
      %s659 = smul.addr %s658, 8
      %s660 = scalar_lea.vmem %s2, %s659
      %s661 = smul.u32 2, %s42
      %p662 = scmp.lt.s32.totalorder %s43, 3
      %s663 = scalar_select %p662, %s43, 3
      %s664 = scalar_lea.vmem %s5, %s663
      %p665 = scmp.lt.s32.totalorder %s43, 3
      %s666 = scalar_select %p665, %s43, 3
      %s667 = scalar_lea.vmem %s6, %s666
      %p668 = scmp.lt.s32.totalorder %s43, 3
      %s669 = scalar_select %p668, %s43, 3
      %s670 = scalar_lea.vmem %s7, %s669
      %p671 = scmp.lt.s32.totalorder %s43, 3
      %s672 = scalar_select %p671, %s43, 3
      %s673 = scalar_lea.vmem %s8, %s672
      %p674 = scmp.lt.s32.totalorder %s43, 3
      %s675 = scalar_select %p674, %s43, 3
      %s676 = smul.addr %s675, 4
      %s677 = scalar_lea.vmem %s9, %s676
      %p678 = scmp.lt.s32.totalorder %s43, 3
      %s679 = scalar_select %p678, %s43, 3
      %s680 = scalar_lea.vmem %s10, %s679
      %p681 = scmp.lt.s32.totalorder %s43, 3
      %s682 = scalar_select %p681, %s43, 3
      %s683 = smul.addr %s682, 2
      %s684 = smul.addr %s683, 4
      %s685 = scalar_lea.vmem %s11, %s684
      %p686 = scmp.lt.s32.totalorder %s43, 3
      %s687 = scalar_select %p686, %s43, 3
      %s688 = scalar_lea.vmem %s12, %s687
      %p689 = scmp.lt.s32.totalorder %s43, 3
      %s690 = scalar_select %p689, %s43, 3
      %s691 = smul.addr %s690, 3
      %s692 = smul.addr %s691, 4
      %s693 = scalar_lea.vmem %s13, %s692
      %p694 = scmp.lt.s32.totalorder %s43, 3
      %s695 = scalar_select %p694, %s43, 3
      %s696 = scalar_lea.vmem %s14, %s695
      %p697 = scmp.lt.s32.totalorder %s43, 3
      %s698 = scalar_select %p697, %s43, 3
      %s699 = smul.addr %s698, 4
      %s700 = smul.addr %s699, 4
      %s701 = scalar_lea.vmem %s15, %s700
      %p702 = scmp.lt.s32.totalorder %s43, 3
      %s703 = scalar_select %p702, %s43, 3
      %s704 = scalar_lea.vmem %s16, %s703
      %s705 = smul.u32 2, %s42
      %p706 = scmp.lt.s32.totalorder %s705, 3
      %s707 = scalar_select %p706, %s705, 3
      %s708 = smul.addr %s707, 8
      %s709 = scalar_lea.vmem %s17, %s708
      %s710 = smul.u32 2, %s42
      %p712 = scmp.eq.s32.totalorder %s43, 0
      // Predicated region
      $region81: #{_lambda_.3} parent=79 // pred_check
        %p713 = pneg %p712
      $region82: #{_lambda_.3} parent=79 // pred_check_branch
        %715 = sbr.rel (%p713) target = $region84
      $region83: #{_lambda_.3} parent=79 // pred_region
        %v716 = vld [vmem:[%s660] sm:$0xff]
        %v717 = vld [vmem:[%s660 + $0x8] sm:$0xff]
        %vm718 = vcmask 392192
        %719 = vst.msk [vmem:[#allocation2] sm:$0xff] %vm718, %v716
        %720 = vst.msk [vmem:[#allocation2 + $0x8] sm:$0xff] %vm718, %v717
      $region84: #{_lambda_.3} parent=79 // pred_fallthru
        _
      %s721 = sld [smem:[#allocation4 + %s43]]
      %p722 = scmp.eq.s32.totalorder %s721, 1
      // Predicated region
      $region85: #{_lambda_.3} parent=79 // pred_check
        %p723 = pneg %p722
      $region86: #{_lambda_.3} parent=79 // pred_check_branch
        %725 = sbr.rel (%p723) target = $region88
      $region87: #{_lambda_.3} parent=79 // pred_region
        %v726 = vld [vmem:[#allocation2] sm:$0xff]
        %v727 = vld [vmem:[#allocation2 + $0x8] sm:$0xff]
        %v728 = vld [vmem:[%s3] sm:$0xff]
        %v729 = vld [vmem:[%s3 + $0x8] sm:$0xff]
        %v730 = vld [vmem:[%s3 + $0x10] sm:$0xff]
        %v731 = vld [vmem:[%s3 + $0x18] sm:$0xff]
        %v732 = vld [vmem:[%s3 + $0x20] sm:$0xff]
        %v733 = vld [vmem:[%s3 + $0x28] sm:$0xff]
        %vm734 = vcmask 392192
        %v736 = vsel %vm734, %v726, 0
        %v739 = vsel %vm734, %v727, 0
        %741 = vmatprep.subr.mxu0 0.0
        %742 = vmatpush1.msra.mxu0 %v728
        %743 = vmatprep.subr.mxu0 0.0
        %744 = vmatpush1.msra.mxu0 %v729
        %745 = vmatprep.subr.mxu0 0.0
        %746 = vmatpush1.msra.mxu0 %v730
        %747 = vmatprep.subr.mxu0 0.0
        %748 = vmatpush1.msra.mxu0 %v731
        %749 = vmatprep.subr.mxu0 0.0
        %750 = vmatpush1.msra.mxu0 %v732
        %751 = vmatprep.subr.mxu0 0.0
        %752 = vmatpush1.msra.mxu0 %v733
        %753 = vmatprep.subr.mxu0 0.0
        %754 = vmatpush1.msra.mxu0 0.0
        %755 = vmatprep.subr.mxu0 0.0
        %756 = vmatpush1.msra.mxu0 0.0
        %757 = vmatprep.subr.mxu0 0.0
        %758 = vmatpush1.msra.mxu0 0.0
        %759 = vmatprep.subr.mxu0 0.0
        %760 = vmatpush1.msra.mxu0 0.0
        %761 = vmatprep.subr.mxu0 0.0
        %762 = vmatpush1.msra.mxu0 0.0
        %763 = vmatprep.subr.mxu0 0.0
        %764 = vmatpush1.msra.mxu0 0.0
        %765 = vmatprep.subr.mxu0 0.0
        %766 = vmatpush1.msra.mxu0 0.0
        %767 = vmatprep.subr.mxu0 0.0
        %768 = vmatpush1.msra.mxu0 0.0
        %769 = vmatprep.subr.mxu0 0.0
        %770 = vmatpush1.msra.mxu0 0.0
        %771 = vmatprep.subr.mxu0 0.0
        %772 = vmatpush1.msra.mxu0 0.0
        %773 = vmatprep.subr.mxu0 0.0
        %774 = vmatpush1.msra.mxu0 0.0
        %775 = vmatprep.subr.mxu0 0.0
        %776 = vmatpush1.msra.mxu0 0.0
        %777 = vmatprep.subr.mxu0 0.0
        %778 = vmatpush1.msra.mxu0 0.0
        %779 = vmatprep.subr.mxu0 0.0
        %780 = vmatpush1.msra.mxu0 0.0
        %781 = vmatprep.subr.mxu0 0.0
        %782 = vmatpush1.msra.mxu0 0.0
        %783 = vmatprep.subr.mxu0 0.0
        %784 = vmatpush1.msra.mxu0 0.0
        %785 = vmatprep.subr.mxu0 0.0
        %786 = vmatpush1.msra.mxu0 0.0
        %787 = vmatprep.subr.mxu0 0.0
        %788 = vmatpush1.msra.mxu0 0.0
        %789 = vmatprep.subr.mxu0 0.0
        %790 = vmatpush1.msra.mxu0 0.0
        %791 = vmatprep.subr.mxu0 0.0
        %792 = vmatpush1.msra.mxu0 0.0
        %793 = vmatprep.subr.mxu0 0.0
        %794 = vmatpush1.msra.mxu0 0.0
        %795 = vmatprep.subr.mxu0 0.0
        %796 = vmatpush1.msra.mxu0 0.0
        %797 = vmatprep.subr.mxu0 0.0
        %798 = vmatpush1.msra.mxu0 0.0
        %799 = vmatprep.subr.mxu0 0.0
        %800 = vmatpush1.msra.mxu0 0.0
        %801 = vmatprep.subr.mxu0 0.0
        %802 = vmatpush1.msra.mxu0 0.0
        %803 = vmatprep.subr.mxu0 0.0
        %804 = vmatpush1.msra.mxu0 0.0
        %805 = vmatprep.mubr.f32.mxu0 0.0
        %806 = vmatmul.mubr.f32.gmra.mrb[0].mxu0 %v736
        %v807 = vpop.f32.mrb[0].mxu0
        %v808 = vadd.f32 0.0, %v807
        %v809 = vpop.f32.mrb[0].mxu0
        %810 = vmatprep.mubr.f32.mxu0 0.0
        %811 = vmatmul.mubr.f32.gmra.mrb[0].mxu0 %v739
        %v812 = vpop.f32.mrb[0].mxu0
        %v813 = vadd.f32 0.0, %v812
        %v814 = vpop.f32.mrb[0].mxu0
        %815 = vdwg.mxu0
        %816 = vst.msk [vmem:[#allocation2] sm:$0xff] %vm734, %v808
        %817 = vst.msk [vmem:[#allocation2 + $0x8] sm:$0xff] %vm734, %v813
      $region88: #{_lambda_.3} parent=79 // pred_fallthru
        _
      %s818 = sld [smem:[#allocation4 + %s43]]
      %p819 = scmp.eq.s32.totalorder %s818, 2
      // Predicated region
      $region89: #{_lambda_.3} parent=79 // pred_check
        %p820 = pneg %p819
      $region90: #{_lambda_.3} parent=79 // pred_check_branch
        %822 = sbr.rel (%p820) target = $region92
      $region91: #{_lambda_.3} parent=79 // pred_region
        %v823 = vld [vmem:[#allocation2] sm:$0xff]
        %v824 = vld [vmem:[#allocation2 + $0x8] sm:$0xff]
        %v825 = vld [vmem:[%s4] sm:$0xff]
        %v826 = vld [vmem:[%s4 + $0x8] sm:$0xff]
        %v827 = vld [vmem:[%s4 + $0x10] sm:$0xff]
        %v828 = vld [vmem:[%s4 + $0x18] sm:$0xff]
        %v829 = vld [vmem:[%s4 + $0x20] sm:$0xff]
        %v830 = vld [vmem:[%s4 + $0x28] sm:$0xff]
        %vm831 = vcmask 392192
        %v833 = vsel %vm831, %v823, 0
        %v836 = vsel %vm831, %v824, 0
        %838 = vmatprep.subr.mxu0 0.0
        %839 = vmatpush1.msra.mxu0 %v825
        %840 = vmatprep.subr.mxu0 0.0
        %841 = vmatpush1.msra.mxu0 %v826
        %842 = vmatprep.subr.mxu0 0.0
        %843 = vmatpush1.msra.mxu0 %v827
        %844 = vmatprep.subr.mxu0 0.0
        %845 = vmatpush1.msra.mxu0 %v828
        %846 = vmatprep.subr.mxu0 0.0
        %847 = vmatpush1.msra.mxu0 %v829
        %848 = vmatprep.subr.mxu0 0.0
        %849 = vmatpush1.msra.mxu0 %v830
        %850 = vmatprep.subr.mxu0 0.0
        %851 = vmatpush1.msra.mxu0 0.0
        %852 = vmatprep.subr.mxu0 0.0
        %853 = vmatpush1.msra.mxu0 0.0
        %854 = vmatprep.subr.mxu0 0.0
        %855 = vmatpush1.msra.mxu0 0.0
        %856 = vmatprep.subr.mxu0 0.0
        %857 = vmatpush1.msra.mxu0 0.0
        %858 = vmatprep.subr.mxu0 0.0
        %859 = vmatpush1.msra.mxu0 0.0
        %860 = vmatprep.subr.mxu0 0.0
        %861 = vmatpush1.msra.mxu0 0.0
        %862 = vmatprep.subr.mxu0 0.0
        %863 = vmatpush1.msra.mxu0 0.0
        %864 = vmatprep.subr.mxu0 0.0
        %865 = vmatpush1.msra.mxu0 0.0
        %866 = vmatprep.subr.mxu0 0.0
        %867 = vmatpush1.msra.mxu0 0.0
        %868 = vmatprep.subr.mxu0 0.0
        %869 = vmatpush1.msra.mxu0 0.0
        %870 = vmatprep.subr.mxu0 0.0
        %871 = vmatpush1.msra.mxu0 0.0
        %872 = vmatprep.subr.mxu0 0.0
        %873 = vmatpush1.msra.mxu0 0.0
        %874 = vmatprep.subr.mxu0 0.0
        %875 = vmatpush1.msra.mxu0 0.0
        %876 = vmatprep.subr.mxu0 0.0
        %877 = vmatpush1.msra.mxu0 0.0
        %878 = vmatprep.subr.mxu0 0.0
        %879 = vmatpush1.msra.mxu0 0.0
        %880 = vmatprep.subr.mxu0 0.0
        %881 = vmatpush1.msra.mxu0 0.0
        %882 = vmatprep.subr.mxu0 0.0
        %883 = vmatpush1.msra.mxu0 0.0
        %884 = vmatprep.subr.mxu0 0.0
        %885 = vmatpush1.msra.mxu0 0.0
        %886 = vmatprep.subr.mxu0 0.0
        %887 = vmatpush1.msra.mxu0 0.0
        %888 = vmatprep.subr.mxu0 0.0
        %889 = vmatpush1.msra.mxu0 0.0
        %890 = vmatprep.subr.mxu0 0.0
        %891 = vmatpush1.msra.mxu0 0.0
        %892 = vmatprep.subr.mxu0 0.0
        %893 = vmatpush1.msra.mxu0 0.0
        %894 = vmatprep.subr.mxu0 0.0
        %895 = vmatpush1.msra.mxu0 0.0
        %896 = vmatprep.subr.mxu0 0.0
        %897 = vmatpush1.msra.mxu0 0.0
        %898 = vmatprep.subr.mxu0 0.0
        %899 = vmatpush1.msra.mxu0 0.0
        %900 = vmatprep.subr.mxu0 0.0
        %901 = vmatpush1.msra.mxu0 0.0
        %902 = vmatprep.mubr.f32.mxu0 0.0
        %903 = vmatmul.mubr.f32.gmra.mrb[0].mxu0 %v833
        %v904 = vpop.f32.mrb[0].mxu0
        %v905 = vadd.f32 0.0, %v904
        %v906 = vpop.f32.mrb[0].mxu0
        %907 = vmatprep.mubr.f32.mxu0 0.0
        %908 = vmatmul.mubr.f32.gmra.mrb[0].mxu0 %v836
        %v909 = vpop.f32.mrb[0].mxu0
        %v910 = vadd.f32 0.0, %v909
        %v911 = vpop.f32.mrb[0].mxu0
        %912 = vdwg.mxu0
        %913 = vst.msk [vmem:[#allocation2] sm:$0xff] %vm831, %v905
        %914 = vst.msk [vmem:[#allocation2 + $0x8] sm:$0xff] %vm831, %v910
      $region92: #{_lambda_.3} parent=79 // pred_fallthru
        _
      %v915 = vld [vmem:[#allocation2] sm:$0xff]
      %v916 = vld [vmem:[#allocation2 + $0x8] sm:$0xff]
      %v917 = vld [vmem:[%s664] sm:$0x1]
      %v918 = vld [vmem:[%s667] sm:$0x1]
      %921 = vrot.lane.b32.xlu0 %v915, 104
      %v922 = vpop.permute.xlu0 %921
      %923 = vrot.lane.b32.xlu0 %v916, 104
      %v924 = vpop.permute.xlu0 %923
      %vm927 = vcmask 195584
      %v928 = vsel %vm927, %v922, 0.0
      %929 = vadd.xlane.f32.xlu0 %v928
      %v930 = vpop.xlane.xlu0 %929
      %v931 = vsel %vm927, %v924, 0.0
      %932 = vadd.xlane.f32.xlu0 %v931
      %v933 = vpop.xlane.xlu0 %932
      %v934 = vrcp.pop 24.0
      %v935 = vmul.f32 %v930, %v934
      %v936 = vmul.f32 %v933, %v934
      %v937 = vsub.f32 %v915, %v935
      %v938 = vsub.f32 %v916, %v936
      %v939 = vmul.f32 %v937, %v937
      %v940 = vmul.f32 %v938, %v938
      %943 = vrot.lane.b32.xlu0 %v939, 104
      %v944 = vpop.permute.xlu0 %943
      %945 = vrot.lane.b32.xlu0 %v940, 104
      %v946 = vpop.permute.xlu0 %945
      %v949 = vsel %vm927, %v944, 0.0
      %950 = vadd.xlane.f32.xlu0 %v949
      %v951 = vpop.xlane.xlu0 %950
      %v952 = vsel %vm927, %v946, 0.0
      %953 = vadd.xlane.f32.xlu0 %v952
      %v954 = vpop.xlane.xlu0 %953
      %v955 = vmul.f32 %v951, %v934
      %v956 = vmul.f32 %v954, %v934
      %v957 = vadd.f32 %v955, 1e-05
      %v958 = vadd.f32 %v956, 1e-05
      %v959 = vrsqrt.pop %v957
      %v960 = vrsqrt.pop %v958
      %v961 = vmul.f32 %v937, %v959
      %v962 = vmul.f32 %v938, %v960
      %v964 = vlaneseq
      %v965 = vshrl.u32 %v964, 7
      %v966 = vsub.s32 0, %v965
      %v967 = vrot.slane %v917, %v966
      %968 = vrot.lane.b32.xlu0 %v967, 24
      %v969 = vpop.permute.xlu0 %968
      %v971 = vmul.f32 %v961, %v969
      %v972 = vmul.f32 %v962, %v969
      %v974 = vlaneseq
      %v975 = vshrl.u32 %v974, 7
      %v976 = vsub.s32 0, %v975
      %v977 = vrot.slane %v918, %v976
      %978 = vrot.lane.b32.xlu0 %v977, 24
      %v979 = vpop.permute.xlu0 %978
      %v981 = vadd.f32 %v971, %v979
      %v982 = vadd.f32 %v972, %v979
      %985 = vrot.lane.b32.xlu0 %v981, 104
      %v986 = vpop.permute.xlu0 %985
      %987 = vrot.lane.b32.xlu0 %v982, 104
      %v988 = vpop.permute.xlu0 %987
      %991 = vxpose.xlu0.b32.start [1/16] %v986, 128
      %992 = vxpose.xlu0.b32.cont [2/16] 0.0, 128
      %993 = vxpose.xlu0.b32.cont [3/16] 0.0, 128
      %994 = vxpose.xlu0.b32.cont [4/16] 0.0, 128
      %995 = vxpose.xlu0.b32.cont [5/16] 0.0, 128
      %996 = vxpose.xlu0.b32.cont [6/16] 0.0, 128
      %997 = vxpose.xlu0.b32.cont [7/16] 0.0, 128
      %998 = vxpose.xlu0.b32.cont [8/16] 0.0, 128
      %999 = vxpose.xlu0.b32.cont [9/16] 0.0, 128
      %1000 = vxpose.xlu0.b32.cont [10/16] 0.0, 128
      %1001 = vxpose.xlu0.b32.cont [11/16] 0.0, 128
      %1002 = vxpose.xlu0.b32.cont [12/16] 0.0, 128
      %1003 = vxpose.xlu0.b32.cont [13/16] 0.0, 128
      %1004 = vxpose.xlu0.b32.cont [14/16] 0.0, 128
      %1005 = vxpose.xlu0.b32.cont [15/16] 0.0, 128
      %1006 = vxpose.xlu0.b32.end [16/16] 0.0, 128
      %v1007 = vpop.trf.xlu0
      %v1008 = vpop.trf.xlu0
      %v1009 = vpop.trf.xlu0
      %v1010 = vpop.trf.xlu0
      %v1011 = vpop.trf.xlu0
      %v1012 = vpop.trf.xlu0
      %v1013 = vpop.trf.xlu0
      %v1014 = vpop.trf.xlu0
      %v1015 = vpop.trf.xlu0
      %v1016 = vpop.trf.xlu0
      %v1017 = vpop.trf.xlu0
      %v1018 = vpop.trf.xlu0
      %v1019 = vpop.trf.xlu0
      %v1020 = vpop.trf.xlu0
      %v1021 = vpop.trf.xlu0
      %v1022 = vpop.trf.xlu0
      %1023 = vxpose.xlu0.b32.start [1/16] %v988, 128
      %1024 = vxpose.xlu0.b32.cont [2/16] 0.0, 128
      %1025 = vxpose.xlu0.b32.cont [3/16] 0.0, 128
      %1026 = vxpose.xlu0.b32.cont [4/16] 0.0, 128
      %1027 = vxpose.xlu0.b32.cont [5/16] 0.0, 128
      %1028 = vxpose.xlu0.b32.cont [6/16] 0.0, 128
      %1029 = vxpose.xlu0.b32.cont [7/16] 0.0, 128
      %1030 = vxpose.xlu0.b32.cont [8/16] 0.0, 128
      %1031 = vxpose.xlu0.b32.cont [9/16] 0.0, 128
      %1032 = vxpose.xlu0.b32.cont [10/16] 0.0, 128
      %1033 = vxpose.xlu0.b32.cont [11/16] 0.0, 128
      %1034 = vxpose.xlu0.b32.cont [12/16] 0.0, 128
      %1035 = vxpose.xlu0.b32.cont [13/16] 0.0, 128
      %1036 = vxpose.xlu0.b32.cont [14/16] 0.0, 128
      %1037 = vxpose.xlu0.b32.cont [15/16] 0.0, 128
      %1038 = vxpose.xlu0.b32.end [16/16] 0.0, 128
      %v1039 = vpop.trf.xlu0
      %v1040 = vpop.trf.xlu0
      %v1041 = vpop.trf.xlu0
      %v1042 = vpop.trf.xlu0
      %v1043 = vpop.trf.xlu0
      %v1044 = vpop.trf.xlu0
      %v1045 = vpop.trf.xlu0
      %v1046 = vpop.trf.xlu0
      %v1047 = vpop.trf.xlu0
      %v1048 = vpop.trf.xlu0
      %v1049 = vpop.trf.xlu0
      %v1050 = vpop.trf.xlu0
      %v1051 = vpop.trf.xlu0
      %v1052 = vpop.trf.xlu0
      %v1053 = vpop.trf.xlu0
      %v1054 = vpop.trf.xlu0
      %v1055 = vpack.c.bf16 %v1008, %v1007
      %v1056 = vpack.c.bf16 %v1039, %v1009
      %v1057 = vpack.c.bf16 %v1041, %v1040
      %v1058 = vld [vmem:[%s677] sm:$0xf]
      %v1059 = vld [vmem:[%s680] sm:$0x1]
      %v1061 = vlaneseq
      %v1062 = vshrl.u32 %v1061, 7
      %v1063 = vsub.s32 0, %v1062
      %v1064 = vrot.slane %v1059, %v1063
      %vm1066 = vcmask 64512
      %v1068 = vsel %vm1066, %v1055, 0
      %v1071 = vsel %vm1066, %v1056, 0
      %v1074 = vsel %vm1066, %v1057, 0
      %vm1076 = vcmask 1043456
      %v1078 = vsel %vm1076, %v1058, 0
      %1080 = vmatprep.subr.bf16.mxu0 0
      %1081 = vmatpush1.bf16.msra.mxu0 %v1078
      %1082 = vmatprep.subr.bf16.mxu0 0
      %1083 = vmatpush1.bf16.msra.mxu0 0
      %1084 = vmatprep.subr.bf16.mxu0 0
      %1085 = vmatpush1.bf16.msra.mxu0 0
      %1086 = vmatprep.subr.bf16.mxu0 0
      %1087 = vmatpush1.bf16.msra.mxu0 0
      %1088 = vmatprep.subr.bf16.mxu0 0
      %1089 = vmatpush1.bf16.msra.mxu0 0
      %1090 = vmatprep.subr.bf16.mxu0 0
      %1091 = vmatpush1.bf16.msra.mxu0 0
      %1092 = vmatprep.subr.bf16.mxu0 0
      %1093 = vmatpush1.bf16.msra.mxu0 0
      %1094 = vmatprep.subr.bf16.mxu0 0
      %1095 = vmatpush1.bf16.msra.mxu0 0
      %1096 = vmatprep.subr.bf16.mxu0 0
      %1097 = vmatpush1.bf16.msra.mxu0 0
      %1098 = vmatprep.subr.bf16.mxu0 0
      %1099 = vmatpush1.bf16.msra.mxu0 0
      %1100 = vmatprep.subr.bf16.mxu0 0
      %1101 = vmatpush1.bf16.msra.mxu0 0
      %1102 = vmatprep.subr.bf16.mxu0 0
      %1103 = vmatpush1.bf16.msra.mxu0 0
      %1104 = vmatprep.subr.bf16.mxu0 0
      %1105 = vmatpush1.bf16.msra.mxu0 0
      %1106 = vmatprep.subr.bf16.mxu0 0
      %1107 = vmatpush1.bf16.msra.mxu0 0
      %1108 = vmatprep.subr.bf16.mxu0 0
      %1109 = vmatpush1.bf16.msra.mxu0 0
      %1110 = vmatprep.subr.bf16.mxu0 0
      %1111 = vmatpush1.bf16.msra.mxu0 0
      %1112 = vmatprep.mubr.bf16.mxu0 0
      %1113 = vmatmul.mubr.bf16.gmra.mrb[0].mxu0 %v1068
      %v1114 = vpop.f32.mrb[0].mxu0
      %v1115 = vadd.f32 %v1064, %v1114
      %v1116 = vpop.f32.mrb[0].mxu0
      %v1117 = vpop.f32.mrb[0].mxu0
      %v1118 = vadd.f32 %v1064, %v1117
      %v1119 = vpop.f32.mrb[0].mxu0
      %1120 = vmatprep.mubr.bf16.mxu0 0
      %1121 = vmatmul.mubr.bf16.gmra.mrb[0].mxu0 %v1071
      %v1122 = vpop.f32.mrb[0].mxu0
      %v1123 = vadd.f32 %v1064, %v1122
      %v1124 = vpop.f32.mrb[0].mxu0
      %v1125 = vpop.f32.mrb[0].mxu0
      %v1126 = vadd.f32 %v1064, %v1125
      %v1127 = vpop.f32.mrb[0].mxu0
      %1128 = vmatprep.mubr.bf16.mxu0 0
      %1129 = vmatmul.mubr.bf16.gmra.mrb[0].mxu0 %v1074
      %v1130 = vpop.f32.mrb[0].mxu0
      %v1131 = vadd.f32 %v1064, %v1130
      %v1132 = vpop.f32.mrb[0].mxu0
      %v1133 = vpop.f32.mrb[0].mxu0
      %v1134 = vadd.f32 %v1064, %v1133
      %v1135 = vpop.f32.mrb[0].mxu0
      %1136 = vdwg.mxu0
      %v1137 = vmul.f32 %v1115, 0.5
      %v1138 = vmul.f32 %v1118, 0.5
      %v1139 = vmul.f32 %v1123, 0.5
      %v1140 = vmul.f32 %v1126, 0.5
      %v1141 = vmul.f32 %v1131, 0.5
      %v1142 = vmul.f32 %v1134, 0.5
      %v1143 = vmul.f32 %v1115, 0.044715
      %v1144 = vmul.f32 %v1118, 0.044715
      %v1145 = vmul.f32 %v1123, 0.044715
      %v1146 = vmul.f32 %v1126, 0.044715
      %v1147 = vmul.f32 %v1131, 0.044715
      %v1148 = vmul.f32 %v1134, 0.044715
      %v1149 = vmul.f32 %v1143, %v1115
      %v1150 = vmul.f32 %v1144, %v1118
      %v1151 = vmul.f32 %v1145, %v1123
      %v1152 = vmul.f32 %v1146, %v1126
      %v1153 = vmul.f32 %v1147, %v1131
      %v1154 = vmul.f32 %v1148, %v1134
      %v1155 = vmul.f32 %v1149, %v1115
      %v1156 = vmul.f32 %v1150, %v1118
      %v1157 = vmul.f32 %v1151, %v1123
      %v1158 = vmul.f32 %v1152, %v1126
      %v1159 = vmul.f32 %v1153, %v1131
      %v1160 = vmul.f32 %v1154, %v1134
      %v1161 = vadd.f32 %v1115, %v1155
      %v1162 = vadd.f32 %v1118, %v1156
      %v1163 = vadd.f32 %v1123, %v1157
      %v1164 = vadd.f32 %v1126, %v1158
      %v1165 = vadd.f32 %v1131, %v1159
      %v1166 = vadd.f32 %v1134, %v1160
      %v1167 = vmul.f32 %v1161, 0.7978846
      %v1168 = vmul.f32 %v1162, 0.7978846
      %v1169 = vmul.f32 %v1163, 0.7978846
      %v1170 = vmul.f32 %v1164, 0.7978846
      %v1171 = vmul.f32 %v1165, 0.7978846
      %v1172 = vmul.f32 %v1166, 0.7978846
      %v1173 = vtanh.pop %v1167
      %v1174 = vtanh.pop %v1168
      %v1175 = vtanh.pop %v1169
      %v1176 = vtanh.pop %v1170
      %v1177 = vtanh.pop %v1171
      %v1178 = vtanh.pop %v1172
      %v1179 = vadd.f32 %v1173, 1.0
      %v1180 = vadd.f32 %v1174, 1.0
      %v1181 = vadd.f32 %v1175, 1.0
      %v1182 = vadd.f32 %v1176, 1.0
      %v1183 = vadd.f32 %v1177, 1.0
      %v1184 = vadd.f32 %v1178, 1.0
      %v1185 = vmul.f32 %v1137, %v1179
      %v1186 = vmul.f32 %v1138, %v1180
      %v1187 = vmul.f32 %v1139, %v1181
      %v1188 = vmul.f32 %v1140, %v1182
      %v1189 = vmul.f32 %v1141, %v1183
      %v1190 = vmul.f32 %v1142, %v1184
      %v1191 = vpack.c.bf16 %v1186, %v1185
      %v1192 = vpack.c.bf16 %v1188, %v1187
      %v1193 = vpack.c.bf16 %v1190, %v1189
      %v1194 = vld [vmem:[%s685] sm:$0xf]
      %v1195 = vld [vmem:[%s685 + $0x4] sm:$0xf]
      %v1196 = vld [vmem:[%s688] sm:$0x1]
      %v1198 = vlaneseq
      %v1199 = vshrl.u32 %v1198, 7
      %v1200 = vsub.s32 0, %v1199
      %v1201 = vrot.slane %v1196, %v1200
      %v1205 = vunpack.c.l.b16 %v1194
      %v1206 = vunpack.c.l.b16 %v1195
      %v1207 = vpack.c.b16 %v1206, %v1205
      %vm1209 = vcmask 130048
      %v1211 = vsel %vm1209, %v1191, 0
      %v1214 = vsel %vm1209, %v1192, 0
      %v1217 = vsel %vm1209, %v1193, 0
      %1219 = vmatprep.subr.bf16.mxu0 0
      %1220 = vmatpush1.bf16.msra.mxu0 %v1207
      %1221 = vmatprep.subr.bf16.mxu0 0
      %1222 = vmatpush1.bf16.msra.mxu0 0
      %1223 = vmatprep.subr.bf16.mxu0 0
      %1224 = vmatpush1.bf16.msra.mxu0 0
      %1225 = vmatprep.subr.bf16.mxu0 0
      %1226 = vmatpush1.bf16.msra.mxu0 0
      %1227 = vmatprep.subr.bf16.mxu0 0
      %1228 = vmatpush1.bf16.msra.mxu0 0
      %1229 = vmatprep.subr.bf16.mxu0 0
      %1230 = vmatpush1.bf16.msra.mxu0 0
      %1231 = vmatprep.subr.bf16.mxu0 0
      %1232 = vmatpush1.bf16.msra.mxu0 0
      %1233 = vmatprep.subr.bf16.mxu0 0
      %1234 = vmatpush1.bf16.msra.mxu0 0
      %1235 = vmatprep.subr.bf16.mxu0 0
      %1236 = vmatpush1.bf16.msra.mxu0 0
      %1237 = vmatprep.subr.bf16.mxu0 0
      %1238 = vmatpush1.bf16.msra.mxu0 0
      %1239 = vmatprep.subr.bf16.mxu0 0
      %1240 = vmatpush1.bf16.msra.mxu0 0
      %1241 = vmatprep.subr.bf16.mxu0 0
      %1242 = vmatpush1.bf16.msra.mxu0 0
      %1243 = vmatprep.subr.bf16.mxu0 0
      %1244 = vmatpush1.bf16.msra.mxu0 0
      %1245 = vmatprep.subr.bf16.mxu0 0
      %1246 = vmatpush1.bf16.msra.mxu0 0
      %1247 = vmatprep.subr.bf16.mxu0 0
      %1248 = vmatpush1.bf16.msra.mxu0 0
      %1249 = vmatprep.subr.bf16.mxu0 0
      %1250 = vmatpush1.bf16.msra.mxu0 0
      %1251 = vmatprep.mubr.bf16.mxu0 0
      %1252 = vmatmul.mubr.bf16.gmra.mrb[0].mxu0 %v1211
      %v1253 = vpop.f32.mrb[0].mxu0
      %v1254 = vadd.f32 %v1201, %v1253
      %v1255 = vpop.f32.mrb[0].mxu0
      %v1256 = vpop.f32.mrb[0].mxu0
      %v1257 = vadd.f32 %v1201, %v1256
      %v1258 = vpop.f32.mrb[0].mxu0
      %1259 = vmatprep.mubr.bf16.mxu0 0
      %1260 = vmatmul.mubr.bf16.gmra.mrb[0].mxu0 %v1214
      %v1261 = vpop.f32.mrb[0].mxu0
      %v1262 = vadd.f32 %v1201, %v1261
      %v1263 = vpop.f32.mrb[0].mxu0
      %v1264 = vpop.f32.mrb[0].mxu0
      %v1265 = vadd.f32 %v1201, %v1264
      %v1266 = vpop.f32.mrb[0].mxu0
      %1267 = vmatprep.mubr.bf16.mxu0 0
      %1268 = vmatmul.mubr.bf16.gmra.mrb[0].mxu0 %v1217
      %v1269 = vpop.f32.mrb[0].mxu0
      %v1270 = vadd.f32 %v1201, %v1269
      %v1271 = vpop.f32.mrb[0].mxu0
      %v1272 = vpop.f32.mrb[0].mxu0
      %v1273 = vadd.f32 %v1201, %v1272
      %v1274 = vpop.f32.mrb[0].mxu0
      %1275 = vdwg.mxu0
      %1276 = vxpose.xlu0.b32.start [1/16] %v1254, 128
      %1277 = vxpose.xlu0.b32.cont [2/16] %v1257, 128
      %1278 = vxpose.xlu0.b32.cont [3/16] %v1262, 128
      %1279 = vxpose.xlu0.b32.cont [4/16] 0.0, 128
      %1280 = vxpose.xlu0.b32.cont [5/16] 0.0, 128
      %1281 = vxpose.xlu0.b32.cont [6/16] 0.0, 128
      %1282 = vxpose.xlu0.b32.cont [7/16] 0.0, 128
      %1283 = vxpose.xlu0.b32.cont [8/16] 0.0, 128
      %1284 = vxpose.xlu0.b32.cont [9/16] 0.0, 128
      %1285 = vxpose.xlu0.b32.cont [10/16] 0.0, 128
      %1286 = vxpose.xlu0.b32.cont [11/16] 0.0, 128
      %1287 = vxpose.xlu0.b32.cont [12/16] 0.0, 128
      %1288 = vxpose.xlu0.b32.cont [13/16] 0.0, 128
      %1289 = vxpose.xlu0.b32.cont [14/16] 0.0, 128
      %1290 = vxpose.xlu0.b32.cont [15/16] 0.0, 128
      %1291 = vxpose.xlu0.b32.end [16/16] 0.0, 128
      %v1292 = vpop.trf.xlu0
      %v1293 = vpop.trf.xlu0
      %v1294 = vpop.trf.xlu0
      %v1295 = vpop.trf.xlu0
      %v1296 = vpop.trf.xlu0
      %v1297 = vpop.trf.xlu0
      %v1298 = vpop.trf.xlu0
      %v1299 = vpop.trf.xlu0
      %v1300 = vpop.trf.xlu0
      %v1301 = vpop.trf.xlu0
      %v1302 = vpop.trf.xlu0
      %v1303 = vpop.trf.xlu0
      %v1304 = vpop.trf.xlu0
      %v1305 = vpop.trf.xlu0
      %v1306 = vpop.trf.xlu0
      %v1307 = vpop.trf.xlu0
      %1308 = vxpose.xlu0.b32.start [1/16] %v1265, 128
      %1309 = vxpose.xlu0.b32.cont [2/16] %v1270, 128
      %1310 = vxpose.xlu0.b32.cont [3/16] %v1273, 128
      %1311 = vxpose.xlu0.b32.cont [4/16] 0.0, 128
      %1312 = vxpose.xlu0.b32.cont [5/16] 0.0, 128
      %1313 = vxpose.xlu0.b32.cont [6/16] 0.0, 128
      %1314 = vxpose.xlu0.b32.cont [7/16] 0.0, 128
      %1315 = vxpose.xlu0.b32.cont [8/16] 0.0, 128
      %1316 = vxpose.xlu0.b32.cont [9/16] 0.0, 128
      %1317 = vxpose.xlu0.b32.cont [10/16] 0.0, 128
      %1318 = vxpose.xlu0.b32.cont [11/16] 0.0, 128
      %1319 = vxpose.xlu0.b32.cont [12/16] 0.0, 128
      %1320 = vxpose.xlu0.b32.cont [13/16] 0.0, 128
      %1321 = vxpose.xlu0.b32.cont [14/16] 0.0, 128
      %1322 = vxpose.xlu0.b32.cont [15/16] 0.0, 128
      %1323 = vxpose.xlu0.b32.end [16/16] 0.0, 128
      %v1324 = vpop.trf.xlu0
      %v1325 = vpop.trf.xlu0
      %v1326 = vpop.trf.xlu0
      %v1327 = vpop.trf.xlu0
      %v1328 = vpop.trf.xlu0
      %v1329 = vpop.trf.xlu0
      %v1330 = vpop.trf.xlu0
      %v1331 = vpop.trf.xlu0
      %v1332 = vpop.trf.xlu0
      %v1333 = vpop.trf.xlu0
      %v1334 = vpop.trf.xlu0
      %v1335 = vpop.trf.xlu0
      %v1336 = vpop.trf.xlu0
      %v1337 = vpop.trf.xlu0
      %v1338 = vpop.trf.xlu0
      %v1339 = vpop.trf.xlu0
      %v1340 = vadd.f32 %v915, %v1292
      %v1341 = vadd.f32 %v916, %v1324
      %v1342 = vld [vmem:[%s670] sm:$0x1]
      %v1343 = vld [vmem:[%s673] sm:$0x1]
      %v1344 = vsel %vm927, %v1340, 0.0
      %1345 = vadd.xlane.f32.xlu0 %v1344
      %v1346 = vpop.xlane.xlu0 %1345
      %v1347 = vsel %vm927, %v1341, 0.0
      %1348 = vadd.xlane.f32.xlu0 %v1347
      %v1349 = vpop.xlane.xlu0 %1348
      %v1350 = vmul.f32 %v1346, %v934
      %v1351 = vmul.f32 %v1349, %v934
      %v1352 = vsub.f32 %v1340, %v1350
      %v1353 = vsub.f32 %v1341, %v1351
      %v1354 = vmul.f32 %v1352, %v1352
      %v1355 = vmul.f32 %v1353, %v1353
      %v1356 = vsel %vm927, %v1354, 0.0
      %1357 = vadd.xlane.f32.xlu0 %v1356
      %v1358 = vpop.xlane.xlu0 %1357
      %v1359 = vsel %vm927, %v1355, 0.0
      %1360 = vadd.xlane.f32.xlu0 %v1359
      %v1361 = vpop.xlane.xlu0 %1360
      %v1362 = vmul.f32 %v1358, %v934
      %v1363 = vmul.f32 %v1361, %v934
      %v1364 = vadd.f32 %v1362, 1e-05
      %v1365 = vadd.f32 %v1363, 1e-05
      %v1366 = vrsqrt.pop %v1364
      %v1367 = vrsqrt.pop %v1365
      %v1368 = vmul.f32 %v1352, %v1366
      %v1369 = vmul.f32 %v1353, %v1367
      %v1371 = vlaneseq
      %v1372 = vshrl.u32 %v1371, 7
      %v1373 = vsub.s32 0, %v1372
      %v1374 = vrot.slane %v1342, %v1373
      %v1376 = vmul.f32 %v1368, %v1374
      %v1377 = vmul.f32 %v1369, %v1374
      %v1379 = vlaneseq
      %v1380 = vshrl.u32 %v1379, 7
      %v1381 = vsub.s32 0, %v1380
      %v1382 = vrot.slane %v1343, %v1381
      %v1384 = vadd.f32 %v1376, %v1382
      %v1385 = vadd.f32 %v1377, %v1382
      %v1386 = vpack.c.bf16 %v1385, %v1384
      %v1387 = vld [vmem:[%s693] sm:$0xf]
      %v1388 = vld [vmem:[%s693 + $0x4] sm:$0xf]
      %v1389 = vld [vmem:[%s693 + $0x8] sm:$0xf]
      %v1390 = vld [vmem:[%s696] sm:$0x1]
      %v1392 = vlaneseq
      %v1393 = vshrl.u32 %v1392, 7
      %v1394 = vsub.s32 0, %v1393
      %v1395 = vrot.slane %v1390, %v1394
      %v1400 = vunpack.c.l.b16 %v1387
      %v1401 = vunpack.c.l.b16 %v1388
      %v1402 = vunpack.c.l.b16 %v1389
      %v1403 = vpack.c.b16 %v1401, %v1400
      %v1404 = vpack.c.b16 %v1402, %v1402
      %v1407 = vsel %vm927, %v1386, 0
      %v1410 = vsel %vm1076, %v1404, 0
      %1412 = vmatprep.subr.bf16.mxu0 0
      %1413 = vmatpush1.bf16.msra.mxu0 %v1403
      %1414 = vmatprep.subr.bf16.mxu0 0
      %1415 = vmatpush1.bf16.msra.mxu0 %v1410
      %1416 = vmatprep.subr.bf16.mxu0 0
      %1417 = vmatpush1.bf16.msra.mxu0 0
      %1418 = vmatprep.subr.bf16.mxu0 0
      %1419 = vmatpush1.bf16.msra.mxu0 0
      %1420 = vmatprep.subr.bf16.mxu0 0
      %1421 = vmatpush1.bf16.msra.mxu0 0
      %1422 = vmatprep.subr.bf16.mxu0 0
      %1423 = vmatpush1.bf16.msra.mxu0 0
      %1424 = vmatprep.subr.bf16.mxu0 0
      %1425 = vmatpush1.bf16.msra.mxu0 0
      %1426 = vmatprep.subr.bf16.mxu0 0
      %1427 = vmatpush1.bf16.msra.mxu0 0
      %1428 = vmatprep.subr.bf16.mxu0 0
      %1429 = vmatpush1.bf16.msra.mxu0 0
      %1430 = vmatprep.subr.bf16.mxu0 0
      %1431 = vmatpush1.bf16.msra.mxu0 0
      %1432 = vmatprep.subr.bf16.mxu0 0
      %1433 = vmatpush1.bf16.msra.mxu0 0
      %1434 = vmatprep.subr.bf16.mxu0 0
      %1435 = vmatpush1.bf16.msra.mxu0 0
      %1436 = vmatprep.subr.bf16.mxu0 0
      %1437 = vmatpush1.bf16.msra.mxu0 0
      %1438 = vmatprep.subr.bf16.mxu0 0
      %1439 = vmatpush1.bf16.msra.mxu0 0
      %1440 = vmatprep.subr.bf16.mxu0 0
      %1441 = vmatpush1.bf16.msra.mxu0 0
      %1442 = vmatprep.subr.bf16.mxu0 0
      %1443 = vmatpush1.bf16.msra.mxu0 0
      %1444 = vmatprep.mubr.bf16.mxu0 0
      %1445 = vmatmul.mubr.bf16.gmra.mrb[0].mxu0 %v1407
      %v1446 = vpop.f32.mrb[0].mxu0
      %v1447 = vadd.f32 %v1395, %v1446
      %v1448 = vpop.f32.mrb[0].mxu0
      %v1449 = vpop.f32.mrb[0].mxu0
      %v1450 = vadd.f32 %v1395, %v1449
      %v1451 = vpop.f32.mrb[0].mxu0
      %1452 = vdwg.mxu0
      %v1453 = vmul.f32 %v1447, 0.5
      %v1454 = vmul.f32 %v1450, 0.5
      %v1455 = vmul.f32 %v1447, 0.044715
      %v1456 = vmul.f32 %v1450, 0.044715
      %v1457 = vmul.f32 %v1455, %v1447
      %v1458 = vmul.f32 %v1456, %v1450
      %v1459 = vmul.f32 %v1457, %v1447
      %v1460 = vmul.f32 %v1458, %v1450
      %v1461 = vadd.f32 %v1447, %v1459
      %v1462 = vadd.f32 %v1450, %v1460
      %v1463 = vmul.f32 %v1461, 0.7978846
      %v1464 = vmul.f32 %v1462, 0.7978846
      %v1465 = vtanh.pop %v1463
      %v1466 = vtanh.pop %v1464
      %v1467 = vadd.f32 %v1465, 1.0
      %v1468 = vadd.f32 %v1466, 1.0
      %v1469 = vmul.f32 %v1453, %v1467
      %v1470 = vmul.f32 %v1454, %v1468
      %v1471 = vpack.c.bf16 %v1470, %v1469
      %v1472 = vld [vmem:[%s701] sm:$0xf]
      %v1473 = vld [vmem:[%s701 + $0x4] sm:$0xf]
      %v1474 = vld [vmem:[%s701 + $0x8] sm:$0xf]
      %v1475 = vld [vmem:[%s701 + $0xc] sm:$0xf]
      %v1476 = vld [vmem:[%s704] sm:$0x1]
      %v1478 = vlaneseq
      %v1479 = vshrl.u32 %v1478, 7
      %v1480 = vsub.s32 0, %v1479
      %v1481 = vrot.slane %v1476, %v1480
      %v1487 = vunpack.c.l.b16 %v1472
      %v1488 = vunpack.c.l.b16 %v1473
      %v1489 = vunpack.c.l.b16 %v1474
      %v1490 = vunpack.c.l.b16 %v1475
      %v1491 = vpack.c.b16 %v1488, %v1487
      %v1492 = vpack.c.b16 %v1490, %v1489
      %vm1495 = vcmask 261120
      %v1497 = vsel %vm1495, %v1471, 0
      %1499 = vmatprep.subr.bf16.mxu0 0
      %1500 = vmatpush1.bf16.msra.mxu0 %v1491
      %1501 = vmatprep.subr.bf16.mxu0 0
      %1502 = vmatpush1.bf16.msra.mxu0 %v1492
      %1503 = vmatprep.subr.bf16.mxu0 0
      %1504 = vmatpush1.bf16.msra.mxu0 0
      %1505 = vmatprep.subr.bf16.mxu0 0
      %1506 = vmatpush1.bf16.msra.mxu0 0
      %1507 = vmatprep.subr.bf16.mxu0 0
      %1508 = vmatpush1.bf16.msra.mxu0 0
      %1509 = vmatprep.subr.bf16.mxu0 0
      %1510 = vmatpush1.bf16.msra.mxu0 0
      %1511 = vmatprep.subr.bf16.mxu0 0
      %1512 = vmatpush1.bf16.msra.mxu0 0
      %1513 = vmatprep.subr.bf16.mxu0 0
      %1514 = vmatpush1.bf16.msra.mxu0 0
      %1515 = vmatprep.subr.bf16.mxu0 0
      %1516 = vmatpush1.bf16.msra.mxu0 0
      %1517 = vmatprep.subr.bf16.mxu0 0
      %1518 = vmatpush1.bf16.msra.mxu0 0
      %1519 = vmatprep.subr.bf16.mxu0 0
      %1520 = vmatpush1.bf16.msra.mxu0 0
      %1521 = vmatprep.subr.bf16.mxu0 0
      %1522 = vmatpush1.bf16.msra.mxu0 0
      %1523 = vmatprep.subr.bf16.mxu0 0
      %1524 = vmatpush1.bf16.msra.mxu0 0
      %1525 = vmatprep.subr.bf16.mxu0 0
      %1526 = vmatpush1.bf16.msra.mxu0 0
      %1527 = vmatprep.subr.bf16.mxu0 0
      %1528 = vmatpush1.bf16.msra.mxu0 0
      %1529 = vmatprep.subr.bf16.mxu0 0
      %1530 = vmatpush1.bf16.msra.mxu0 0
      %1531 = vmatprep.mubr.bf16.mxu0 0
      %1532 = vmatmul.mubr.bf16.gmra.mrb[0].mxu0 %v1497
      %v1533 = vpop.f32.mrb[0].mxu0
      %v1534 = vadd.f32 %v1481, %v1533
      %v1535 = vpop.f32.mrb[0].mxu0
      %v1536 = vpop.f32.mrb[0].mxu0
      %v1537 = vadd.f32 %v1481, %v1536
      %v1538 = vpop.f32.mrb[0].mxu0
      %1539 = vdwg.mxu0
      %1542 = vrot.lane.b32.xlu0 %v1534, 24
      %v1543 = vpop.permute.xlu0 %1542
      %1544 = vrot.lane.b32.xlu0 %v1537, 24
      %v1545 = vpop.permute.xlu0 %1544
      %v1548 = vadd.f32 %v915, %v1543
      %v1549 = vadd.f32 %v916, %v1545
      %1552 = vrot.lane.b32.xlu0 %v1548, 104
      %v1553 = vpop.permute.xlu0 %1552
      %1554 = vrot.lane.b32.xlu0 %v1549, 104
      %v1555 = vpop.permute.xlu0 %1554
      %1560 = vrot.lane.b32.xlu0 %v1340, 24
      %v1561 = vpop.permute.xlu0 %1560
      %1562 = vrot.lane.b32.xlu0 %v1341, 24
      %v1563 = vpop.permute.xlu0 %1562
      %v1566 = vsel %vm927, %v1553, %v1561
      %v1567 = vsel %vm927, %v1555, %v1563
      %vm1568 = vcmask 392192
      %1569 = vst.msk [vmem:[#allocation2] sm:$0xff] %vm1568, %v1566
      %1570 = vst.msk [vmem:[#allocation2 + $0x8] sm:$0xff] %vm1568, %v1567
      %s1571 = sld [smem:[#allocation5 + %s43]]
      %p1572 = scmp.eq.s32.totalorder %s1571, 1
      // Predicated region
      $region93: #{_lambda_.3} parent=79 // pred_check
        %p1573 = pneg %p1572
      $region94: #{_lambda_.3} parent=79 // pred_check_branch
        %1575 = sbr.rel (%p1573) target = $region96
      $region95: #{_lambda_.3} parent=79 // pred_region
        %v1576 = vld [vmem:[#allocation2] sm:$0xff]
        %v1577 = vld [vmem:[#allocation2 + $0x8] sm:$0xff]
        %v1578 = vld [vmem:[%s4] sm:$0xff]
        %v1579 = vld [vmem:[%s4 + $0x8] sm:$0xff]
        %v1580 = vld [vmem:[%s4 + $0x10] sm:$0xff]
        %v1581 = vld [vmem:[%s4 + $0x18] sm:$0xff]
        %v1582 = vld [vmem:[%s4 + $0x20] sm:$0xff]
        %v1583 = vld [vmem:[%s4 + $0x28] sm:$0xff]
        %v1585 = vsel %vm1568, %v1576, 0
        %v1588 = vsel %vm1568, %v1577, 0
        %1590 = vmatprep.subr.mxu0 0.0
        %1591 = vmatpush1.msra.mxu0 %v1578
        %1592 = vmatprep.subr.mxu0 0.0
        %1593 = vmatpush1.msra.mxu0 %v1579
        %1594 = vmatprep.subr.mxu0 0.0
        %1595 = vmatpush1.msra.mxu0 %v1580
        %1596 = vmatprep.subr.mxu0 0.0
        %1597 = vmatpush1.msra.mxu0 %v1581
        %1598 = vmatprep.subr.mxu0 0.0
        %1599 = vmatpush1.msra.mxu0 %v1582
        %1600 = vmatprep.subr.mxu0 0.0
        %1601 = vmatpush1.msra.mxu0 %v1583
        %1602 = vmatprep.subr.mxu0 0.0
        %1603 = vmatpush1.msra.mxu0 0.0
        %1604 = vmatprep.subr.mxu0 0.0
        %1605 = vmatpush1.msra.mxu0 0.0
        %1606 = vmatprep.subr.mxu0 0.0
        %1607 = vmatpush1.msra.mxu0 0.0
        %1608 = vmatprep.subr.mxu0 0.0
        %1609 = vmatpush1.msra.mxu0 0.0
        %1610 = vmatprep.subr.mxu0 0.0
        %1611 = vmatpush1.msra.mxu0 0.0
        %1612 = vmatprep.subr.mxu0 0.0
        %1613 = vmatpush1.msra.mxu0 0.0
        %1614 = vmatprep.subr.mxu0 0.0
        %1615 = vmatpush1.msra.mxu0 0.0
        %1616 = vmatprep.subr.mxu0 0.0
        %1617 = vmatpush1.msra.mxu0 0.0
        %1618 = vmatprep.subr.mxu0 0.0
        %1619 = vmatpush1.msra.mxu0 0.0
        %1620 = vmatprep.subr.mxu0 0.0
        %1621 = vmatpush1.msra.mxu0 0.0
        %1622 = vmatprep.subr.mxu0 0.0
        %1623 = vmatpush1.msra.mxu0 0.0
        %1624 = vmatprep.subr.mxu0 0.0
        %1625 = vmatpush1.msra.mxu0 0.0
        %1626 = vmatprep.subr.mxu0 0.0
        %1627 = vmatpush1.msra.mxu0 0.0
        %1628 = vmatprep.subr.mxu0 0.0
        %1629 = vmatpush1.msra.mxu0 0.0
        %1630 = vmatprep.subr.mxu0 0.0
        %1631 = vmatpush1.msra.mxu0 0.0
        %1632 = vmatprep.subr.mxu0 0.0
        %1633 = vmatpush1.msra.mxu0 0.0
        %1634 = vmatprep.subr.mxu0 0.0
        %1635 = vmatpush1.msra.mxu0 0.0
        %1636 = vmatprep.subr.mxu0 0.0
        %1637 = vmatpush1.msra.mxu0 0.0
        %1638 = vmatprep.subr.mxu0 0.0
        %1639 = vmatpush1.msra.mxu0 0.0
        %1640 = vmatprep.subr.mxu0 0.0
        %1641 = vmatpush1.msra.mxu0 0.0
        %1642 = vmatprep.subr.mxu0 0.0
        %1643 = vmatpush1.msra.mxu0 0.0
        %1644 = vmatprep.subr.mxu0 0.0
        %1645 = vmatpush1.msra.mxu0 0.0
        %1646 = vmatprep.subr.mxu0 0.0
        %1647 = vmatpush1.msra.mxu0 0.0
        %1648 = vmatprep.subr.mxu0 0.0
        %1649 = vmatpush1.msra.mxu0 0.0
        %1650 = vmatprep.subr.mxu0 0.0
        %1651 = vmatpush1.msra.mxu0 0.0
        %1652 = vmatprep.subr.mxu0 0.0
        %1653 = vmatpush1.msra.mxu0 0.0
        %1654 = vmatprep.mubr.f32.mxu0 0.0
        %1655 = vmatmul.mubr.f32.gmra.mrb[0].mxu0 %v1585
        %v1656 = vpop.f32.mrb[0].mxu0
        %v1657 = vadd.f32 0.0, %v1656
        %v1658 = vpop.f32.mrb[0].mxu0
        %1659 = vmatprep.mubr.f32.mxu0 0.0
        %1660 = vmatmul.mubr.f32.gmra.mrb[0].mxu0 %v1588
        %v1661 = vpop.f32.mrb[0].mxu0
        %v1662 = vadd.f32 0.0, %v1661
        %v1663 = vpop.f32.mrb[0].mxu0
        %1664 = vdwg.mxu0
        %1665 = vst.msk [vmem:[#allocation2] sm:$0xff] %vm1568, %v1657
        %1666 = vst.msk [vmem:[#allocation2 + $0x8] sm:$0xff] %vm1568, %v1662
      $region96: #{_lambda_.3} parent=79 // pred_fallthru
        _
      %p1667 = scmp.eq.s32.totalorder %s43, 3
      // Predicated region
      $region97: #{_lambda_.3} parent=79 // pred_check
        %p1668 = pneg %p1667
      $region98: #{_lambda_.3} parent=79 // pred_check_branch
        %1670 = sbr.rel (%p1668) target = $region100
      $region99: #{_lambda_.3} parent=79 // pred_region
        %v1671 = vld [vmem:[#allocation2] sm:$0xff]
        %v1672 = vld [vmem:[#allocation2 + $0x8] sm:$0xff]
        %1673 = vst.msk [vmem:[%s709] sm:$0xff] %vm1568, %v1671
        %1674 = vst.msk [vmem:[%s709 + $0x8] sm:$0xff] %vm1568, %v1672
      $region100: #{_lambda_.3} parent=79 // pred_fallthru
        _
      %s1675 = smul.u32 2, %s42
      %p1676 = scmp.lt.s32.totalorder %s1675, 3
      %s1677 = scalar_select %p1676, %s1675, 3
      %s1678 = smul.addr %s1677, 8
      %s1679 = scalar_lea.vmem %s17, %s1678
      // Predicated region
      $region101: #{_lambda_.3} parent=79 // pred_check
        %p1680 = pneg %p448
      $region102: #{_lambda_.3} parent=79 // pred_check_branch
        %1682 = sbr.rel (%p1680) target = $region104
      $region103: #{_lambda_.3} parent=79 // pred_region
        %s1683 = smul.u32 2, %s42
      $region104: #{_lambda_.3} parent=79 // pred_fallthru
        _
    $region80: #{_lambda_.3} parent=5 // pred_fallthru
      _
    %p1684 = scmp.le.s32.totalorder 2, %s33
    // Predicated region
    $region105: #{_lambda_.3} parent=5 // pred_check
      %p1685 = pneg %p1684
    $region106: #{_lambda_.3} parent=5 // pred_check_branch
      %1687 = sbr.rel (%p1685) target = $region108
    $region107: #{_lambda_.3} parent=5 // pred_region
      %s1688 = ssub.s32 %s33, 2
      // Predicated region
      $region109: #{_lambda_.3} parent=107 // pred_check
        %p1689 = pneg %p454
      $region110: #{_lambda_.3} parent=107 // pred_check_branch
        %1691 = sbr.rel (%p1689) target = $region112
      $region111: #{_lambda_.3} parent=107 // pred_region
        %s1692 = smul.u32 2, %s44
        %p1693 = scmp.lt.s32.totalorder %s1692, 3
        %s1694 = scalar_select %p1693, %s1692, 3
        %s1695 = smul.addr %s1694, 8
        %s1696 = scalar_lea.vmem %s17, %s1695
      $region112: #{_lambda_.3} parent=107 // pred_fallthru
        _
    $region108: #{_lambda_.3} parent=5 // pred_fallthru
      _
  $region6: #{_lambda_.3} parent=0 // loop_footer
    %s37 = sadd.s32 1, %s33
  $region7: #{_lambda_.3} parent=0 // loop_footer_branch
    %32 = sbr.rel target = $region3
  $region8: #{_lambda_.3} parent=0 // loop_exit
    _

</llo_original>
